<compile_context>
chip_gen: v7x
topology: tpu7x:2x2x1
jax: 0.10.0
libtpu: 0.0.40
codegen_flags: <defaults>
</compile_context>

<pallas_src>
import math
import jax
import jax.numpy as jnp
from jax import lax
from jax.experimental import pallas as pl
from jax.experimental.pallas import tpu as pltpu


def _round_up(x, m):
    return ((x + m - 1) // m) * m


def _vmem_limit_bytes():
    """Per-generation VMEM budget: ~100 MiB on v5e/v6e (128 MiB physical),
    ~51 MiB on v7x (64 MiB physical). Conservative fallback if the query fails."""
    cap = 64 * 1024 * 1024
    try:
        cap = int(pltpu.get_tpu_info().vmem_capacity_bytes)
    except Exception:
        pass
    return max(32 * 1024 * 1024, min(int(cap * 0.8), 100 * 1024 * 1024))


def _pick_time_tile(t_eff, Bp):
    """Recurrence time-slab TT and padded length Tc (a multiple of TT with no wasted
    serial steps). Targets >= 256 rows per hoisted input-projection matmul (fills the
    256-wide v6e/v7x MXU; >= 128 already suffices on v5e)."""
    tc8 = _round_up(max(t_eff, 1), 8)
    target = min(32, _round_up(max(256 // Bp, 8), 8))
    for g in (32, 16, 8):
        if g <= target and tc8 % g == 0:
            return g, tc8
    return 8, tc8


def _pick_proj_tiles(Bp, G, Hp, Vp, vmem_limit):
    """Phase-2 (batch, time) tiles under a full VMEM budget: resident W_out/b_out
    (double-buffered), double-buffered bf16 input / f32 output blocks, plus the
    in-kernel f32 logits temporaries."""
    BT2, TT2 = Bp, G
    resident = 2 * Hp * Vp * 2 + 2 * Vp * 4

    def cost(bt, tt):
        rows = bt * tt
        return (resident
                + 2 * rows * Hp * 2      # h input blocks (bf16, double-buffered)
                + 2 * rows * Vp * 4      # logp output blocks (f32, double-buffered)
                + 2 * rows * Vp * 4)     # in-kernel f32 logits temporaries

    budget = int(vmem_limit * 0.9)
    while cost(BT2, TT2) > budget and TT2 > 8:
        TT2 //= 2
    while cost(BT2, TT2) > budget and BT2 > 8 and (BT2 // 2) % 8 == 0:
        BT2 //= 2
    return BT2, TT2


# --------------------------------------------------------------------------------------
# Phase 1: LSTM recurrence (grid = (batch tiles, time slabs); h/c carried in VMEM)
# --------------------------------------------------------------------------------------
def lstm_recurrence_kernel(len_ref, emb_ref, w_ih_ref, w_hh_ref, b_ref,
                           hout_ref, gin_sc, h_sc, c_sc):
    """One (batch-tile, time-slab) grid step of the LSTM.

    len_ref  : [BT, 1]    int32  effective lengths (length + 1; 0 for padded rows)
    emb_ref  : [TT,BT,E]  bf16   embedded inputs for this slab (time-major)
    w_ih_ref : [E, 4H]    bf16   input->gate weights (gate order i, f, g, o; resident)
    w_hh_ref : [H, 4H]    bf16   hidden->gate weights (resident)
    b_ref    : [1, 4H]    f32    combined bias (b_ih + b_hh), zero in padded gate slots
    hout_ref : [TT,BT,H]  bf16   masked hidden states (pad_packed semantics)
    gin_sc   : [TT,BT,4H] bf16   scratch: hoisted input projection (bias folded in)
    h_sc     : [BT,H]     bf16   scratch: h carry across time slabs
    c_sc     : [BT,H]     f32    scratch: c carry across time slabs
    """
    tj = pl.program_id(1)

    @pl.when(tj == 0)
    def _():
        h_sc[...] = jnp.zeros_like(h_sc)
        c_sc[...] = jnp.zeros_like(c_sc)

    TT, BT, Ep = emb_ref.shape
    Hp = w_hh_ref.shape[0]

    # Hoisted input projection: one MXU-filling matmul over all TT*BT slab rows,
    # bias folded in, stored bf16 (halves the largest phase-1 scratch -> v7x headroom).
    x = emb_ref[...].reshape(TT * BT, Ep)
    gin = jnp.dot(x, w_ih_ref[...], preferred_element_type=jnp.float32) + b_ref[...]
    gin_sc[...] = gin.reshape(TT, BT, 4 * Hp).astype(gin_sc.dtype)

    def step(t, carry):
        # Serial critical path: only h @ W_hh + gate nonlinearities + state update.
        h, c = carry                                        # h bf16, c f32: [BT, H]
        gates = (jnp.dot(h, w_hh_ref[...], preferred_element_type=jnp.float32)
                 + gin_sc[t])                               # [BT, 4H] f32
        i_g = jax.nn.sigmoid(gates[:, 0 * Hp:1 * Hp])
        f_g = jax.nn.sigmoid(gates[:, 1 * Hp:2 * Hp])
        g_g = jnp.tanh(gates[:, 2 * Hp:3 * Hp])
        o_g = jax.nn.sigmoid(gates[:, 3 * Hp:4 * Hp])
        c_new = f_g * c + i_g * g_g
        h_new = (o_g * jnp.tanh(c_new)).astype(jnp.bfloat16)
        hout_ref[t] = h_new                                 # unmasked; masked below
        return h_new, c_new

    # Partial unroll keeps LLO pipelining without exploding live ranges / spills.
    h_fin, c_fin = lax.fori_loop(0, TT, step, (h_sc[...], c_sc[...]),
                                 unroll=min(int(TT), 8))
    h_sc[...] = h_fin
    c_sc[...] = c_fin

    # Epilogue (off the serial chain): pad_packed_sequence semantics -- zero the
    # outputs at t >= length + 1, in one dense masked rewrite of the slab.
    lens = len_ref[...]                                     # [BT, 1] int32
    t_ids = tj * TT + lax.broadcasted_iota(jnp.int32, (TT, BT, 1), 0)
    h_all = hout_ref[...]
    hout_ref[...] = jnp.where(t_ids < lens[None, :, :], h_all, jnp.zeros_like(h_all))


def lstm_recurrence(emb_tbe, eff_len_b1, w_ih, w_hh, b, *, batch_tile, time_tile,
                    vmem_limit):
    Tc, Bp, Ep = emb_tbe.shape
    Hp = w_hh.shape[0]
    TT, BT = time_tile, batch_tile
    assert Tc % TT == 0 and Bp % BT == 0
    return pl.pallas_call(
        lstm_recurrence_kernel,
        out_shape=jax.ShapeDtypeStruct((Tc, Bp, Hp), jnp.bfloat16),
        grid_spec=pltpu.PrefetchScalarGridSpec(
            num_scalar_prefetch=0,
            grid=(Bp // BT, Tc // TT),
            in_specs=[
                pl.BlockSpec((BT, 1), lambda bi, tj: (bi, 0)),           # lengths
                pl.BlockSpec((TT, BT, Ep), lambda bi, tj: (tj, bi, 0)),  # emb slab
                # Resident weights (constant index_map -> fetched once per batch tile).
                # TODO(synk): mark these single-buffered (pl.Buffered(1)) once verified
                #             across toolchains to halve their VMEM footprint on v7x.
                pl.BlockSpec((Ep, 4 * Hp), lambda bi, tj: (0, 0)),       # W_ih
                pl.BlockSpec((Hp, 4 * Hp), lambda bi, tj: (0, 0)),       # W_hh
                pl.BlockSpec((1, 4 * Hp), lambda bi, tj: (0, 0)),        # bias
            ],
            out_specs=pl.BlockSpec((TT, BT, Hp), lambda bi, tj: (tj, bi, 0)),
            scratch_shapes=[
                pltpu.VMEM((TT, BT, 4 * Hp), jnp.bfloat16),   # slab input projection
                pltpu.VMEM((BT, Hp), jnp.bfloat16),           # h carry
                pltpu.VMEM((BT, Hp), jnp.float32),            # c carry
            ],
        ),
        compiler_params=pltpu.CompilerParams(
            # Batch tiles are independent (sharded across TCs on v7x);
            # state is carried across the (inner) time axis.
            dimension_semantics=("parallel", "arbitrary"),
            vmem_limit_bytes=vmem_limit,
        ),
    )(eff_len_b1, emb_tbe, w_ih, w_hh, b)


# --------------------------------------------------------------------------------------
# Phase 2: output projection + log_softmax (writes [B, T, V]-ordered logp directly)
# --------------------------------------------------------------------------------------
def projection_logsoftmax_kernel(h_ref, w_out_ref, b_out_ref, logp_ref):
    """logp = log_softmax(h @ W_out + b_out) for one (batch-tile, time-tile) block.

    h_ref    : [BT, TT, H]  bf16  masked hidden states (batch-major)
    w_out_ref: [H, V]       bf16  (resident)
    b_out_ref: [1, V]       f32   (-1e30 in padded vocab columns)
    logp_ref : [BT, TT, V]  f32
    """
    BT, TT, Hp = h_ref.shape
    Vp = w_out_ref.shape[1]
    h = h_ref[...].reshape(BT * TT, Hp)                    # rows already batch-major
    logits = (jnp.dot(h, w_out_ref[...], preferred_element_type=jnp.float32)
              + b_out_ref[...])
    lmax = jnp.max(logits, axis=-1, keepdims=True)
    shifted = logits - lmax
    logz = jnp.log(jnp.sum(jnp.exp(shifted), axis=-1, keepdims=True))
    logp_ref[...] = (shifted - logz).reshape(BT, TT, Vp)


def project_logsoftmax(h_btH, w_out, b_out, *, batch_tile, time_tile, vmem_limit):
    # TODO(synk): for very large vocabularies (bf16 W_out alone >~ 32 MiB) tile the
    #             vocab axis with a two-pass log_softmax instead of keeping W_out resident.
    Bp, Tc, Hp = h_btH.shape
    Vp = w_out.shape[1]
    BT, TT = batch_tile, time_tile
    assert Bp % BT == 0 and Tc % TT == 0
    return pl.pallas_call(
        projection_logsoftmax_kernel,
        out_shape=jax.ShapeDtypeStruct((Bp, Tc, Vp), jnp.float32),
        grid_spec=pltpu.PrefetchScalarGridSpec(
            num_scalar_prefetch=0,
            grid=(Bp // BT, Tc // TT),
            in_specs=[
                pl.BlockSpec((BT, TT, Hp), lambda bi, tj: (bi, tj, 0)),
                pl.BlockSpec((Hp, Vp), lambda bi, tj: (0, 0)),          # W_out (resident)
                pl.BlockSpec((1, Vp), lambda bi, tj: (0, 0)),           # b_out
            ],
            out_specs=pl.BlockSpec((BT, TT, Vp), lambda bi, tj: (bi, tj, 0)),
        ),
        compiler_params=pltpu.CompilerParams(
            dimension_semantics=("parallel", "parallel"),   # shards across TCs (v7x)
            vmem_limit_bytes=vmem_limit,
        ),
    )(h_btH, w_out, b_out)


# --------------------------------------------------------------------------------------
# Module wrapper
# --------------------------------------------------------------------------------------
class RNNPallas:
    """JAX/Pallas port of the PyTorch RNN module (forward only, eval mode)."""

    def __init__(self, vocab_size, embed_size, time_step, hidden_size,
                 dropout_rate, bos_idx, eos_idx, pad_idx, key):
        self.vocab_size = vocab_size
        self.embed_size = embed_size
        self.time_step = time_step
        self.hidden_size = hidden_size
        self.dropout_rate = dropout_rate   # identity at inference
        self.pad_idx = pad_idx

        # Hardware-aligned padded sizes (lane dim multiples of 128).
        self.Ep = _round_up(embed_size, 128)
        self.Hp = _round_up(hidden_size, 128)
        self.Vp = _round_up(vocab_size, 128)
        self._vmem_limit = _vmem_limit_bytes()

        H, E, V = hidden_size, embed_size, vocab_size
        Hp, Ep, Vp = self.Hp, self.Ep, self.Vp
        keys = jax.random.split(key, 8)
        scale = 1.0 / math.sqrt(H)

        # Embedding ~ N(0,1), padding_idx row zeroed; E zero-padded to Ep (exact).
        emb = jax.random.normal(keys[0], (V, E), jnp.float32).at[pad_idx].set(0.0)
        self.emb_table = jnp.pad(emb, ((0, 0), (0, Ep - E))).astype(jnp.bfloat16)

        # LSTM weights, gate order (i, f, g, o); stored transposed so x @ W.
        # Zero padding of the extra hidden slots + zero bias there keeps padded units
        # at h = c = 0 for all time (sigmoid(0)*tanh(0) = 0), so padding is exact.
        def pad_gate_w(w, rows, rows_p):      # w: [rows, 4, H] -> [rows_p, 4*Hp]
            wp = jnp.zeros((rows_p, 4, Hp), jnp.float32)
            wp = wp.at[:rows, :, :H].set(w)
            return wp.reshape(rows_p, 4 * Hp)

        w_ih = jax.random.uniform(keys[1], (E, 4, H), jnp.float32, -scale, scale)
        w_hh = jax.random.uniform(keys[2], (H, 4, H), jnp.float32, -scale, scale)
        b_ih = jax.random.uniform(keys[3], (4, H), jnp.float32, -scale, scale)
        b_hh = jax.random.uniform(keys[4], (4, H), jnp.float32, -scale, scale)
        self.w_ih = pad_gate_w(w_ih, E, Ep).astype(jnp.bfloat16)
        self.w_hh = pad_gate_w(w_hh, H, Hp).astype(jnp.bfloat16)
        b = jnp.zeros((4, Hp), jnp.float32).at[:, :H].set(b_ih + b_hh)
        self.b = b.reshape(1, 4 * Hp)

        # Output Linear(H -> V). Extra W rows are zero; padded vocab columns get bias
        # -1e30 so log_softmax over Vp equals log_softmax over V on the real columns.
        # (logp is kept f32: exact log-prob output; bf16 writeback / fused NLL is a
        #  possible further optimization.)
        w_out = jax.random.uniform(keys[5], (H, V), jnp.float32, -scale, scale)
        self.w_out = jnp.zeros((Hp, Vp), jnp.float32).at[:H, :V].set(w_out).astype(jnp.bfloat16)
        b_out = jax.random.uniform(keys[6], (V,), jnp.float32, -scale, scale)
        self.b_out = jnp.full((1, Vp), -1e30, jnp.float32).at[0, :V].set(b_out)

    def __call__(self, input_seq, length):
        # input_seq: int32 [B, T]; length: int32 [B]; effective seq len = length + 1
        B, T = input_seq.shape
        Bp = _round_up(max(B, 8), 8)               # sublane-aligned batch

        # pad_packed_sequence output length = max(length) + 1 (data-dependent, as in
        # the PyTorch module). The host sync is done UP FRONT so both kernels only
        # cover the first t_eff time steps (no work on padded steps).
        t_eff = int(jax.device_get(jnp.max(length))) + 1
        TT1, Tc = _pick_time_tile(t_eff, Bp)

        # Pad batch with pad tokens / zero effective length; pad/crop time to Tc.
        m = min(T, Tc)
        seq = jnp.full((Bp, Tc), self.pad_idx, jnp.int32).at[:B, :m].set(input_seq[:, :m])
        eff_len = jnp.zeros((Bp, 1), jnp.int32).at[:B, 0].set(length + 1)

        # Embedding gather fused with the batch-first -> time-major transpose (XLA).
        # TODO(synk): fuse this gather into phase 1 (scalar-prefetch token ids and
        #             gather from the HBM table in-kernel) to drop the emb_tbe round trip.
        # TODO(synk): dropout on embeddings / LSTM outputs is identity (inference mode).
        emb_tbe = self.emb_table[seq.T]            # [Tc, Bp, Ep] bf16

        # Phase 1: LSTM recurrence. Batch-tiled only when it still leaves >= 8 rows
        # per tile (gives v7x a parallel axis; no-op on single-TC v5e/v6e).
        BT1 = Bp // 2 if (Bp >= 16 and (Bp // 2) % 8 == 0) else Bp
        hout = lstm_recurrence(emb_tbe, eff_len, self.w_ih, self.w_hh, self.b,
                               batch_tile=BT1, time_tile=TT1,
                               vmem_limit=self._vmem_limit)   # [Tc, Bp, Hp] bf16

        # Permute the SMALL bf16 hidden tensor to batch-major (per review: transpose
        # hout, not the much larger f32 logp), so phase 2 emits [B, T, V]-ordered
        # log-probs directly and no XLA transpose of logp is needed afterwards.
        hout_bt = jnp.transpose(hout, (1, 0, 2))              # [Bp, Tc, Hp] bf16

        # Phase 2: projection + log_softmax over only the first Tc time steps.
        BT2, TT2 = _pick_proj_tiles(Bp, TT1, self.Hp, self.Vp, self._vmem_limit)
        logp = project_logsoftmax(hout_bt, self.w_out, self.b_out,
                                  batch_tile=BT2, time_tile=TT2,
                                  vmem_limit=self._vmem_limit)  # [Bp, Tc, Vp] f32

        return logp[:B, :t_eff, :self.vocab_size]


if __name__ == "__main__":
    vocab_size = 100        # non-multiple of 128 to exercise vocab padding
    embed_size = 32
    time_step = 8
    hidden_size = 32
    batch = 4
    pad_idx, bos_idx, eos_idx = 0, 1, 2

    root = jax.random.PRNGKey(0)
    k_model, k_seq, k_len = jax.random.split(root, 3)

    model = RNNPallas(vocab_size, embed_size, time_step, hidden_size,
                      dropout_rate=0.5, bos_idx=bos_idx, eos_idx=eos_idx,
                      pad_idx=pad_idx, key=k_model)

    input_seq = jax.random.randint(k_seq, (batch, time_step), 0, vocab_size, dtype=jnp.int32)
    # lengths such that length + 1 <= time_step (pack_padded requirement)
    length = jax.random.randint(k_len, (batch,), 1, time_step, dtype=jnp.int32)

    logp = model(input_seq, length)
    jax.block_until_ready(logp)

    t_eff = int(jax.device_get(jnp.max(length))) + 1
    assert logp.shape == (batch, t_eff, vocab_size)
    # sanity: every row is a valid log-probability distribution
    row_sums = jnp.exp(logp).sum(-1)
    assert bool(jnp.all(jnp.abs(row_sums - 1.0) < 1e-3))

    print("KERNEL_OK")
</pallas_src>

<mosaic_0001>
module attributes {stable_mosaic.version = 11 : i64} {
  func.func @lstm_recurrence_kernel(%arg0: i32, %arg1: i32, %arg2: memref<8x1xi32, #tpu.memory_space<vmem>>, %arg3: memref<8x8x128xbf16, #tpu.memory_space<vmem>>, %arg4: memref<128x512xbf16, #tpu.memory_space<vmem>>, %arg5: memref<128x512xbf16, #tpu.memory_space<vmem>>, %arg6: memref<1x512xf32, #tpu.memory_space<vmem>>, %arg7: memref<8x8x128xbf16, #tpu.memory_space<vmem>>, %arg8: memref<8x8x512xbf16, #tpu.memory_space<vmem>>, %arg9: memref<8x128xbf16, #tpu.memory_space<vmem>>, %arg10: memref<8x128xf32, #tpu.memory_space<vmem>>) attributes {dimension_semantics = [#tpu.dimension_semantics<parallel>, #tpu.dimension_semantics<arbitrary>], iteration_bounds = array<i64: 1, 1>, scalar_prefetch = 0 : i64, scratch_operands = 3 : i64, tpu.core_type = #tpu.core_type<tc>, window_params = [{transform_indices = @transform_0, window_bounds = array<i64: 8, 1>}, {transform_indices = @transform_1, window_bounds = array<i64: 8, 8, 128>}, {pipeline_mode = #tpu.pipeline_mode<synchronous>, transform_indices = @transform_2, window_bounds = array<i64: 128, 512>}, {pipeline_mode = #tpu.pipeline_mode<synchronous>, transform_indices = @transform_3, window_bounds = array<i64: 128, 512>}, {pipeline_mode = #tpu.pipeline_mode<synchronous>, transform_indices = @transform_4, window_bounds = array<i64: 1, 512>}, {transform_indices = @transform_5, window_bounds = array<i64: 8, 8, 128>}]} {
    %c0_i32 = arith.constant 0 : i32
    %0 = arith.cmpi eq, %arg1, %c0_i32 : i32
    %1 = arith.extui %0 : i1 to i32
    %c0_i32_0 = arith.constant 0 : i32
    %2 = arith.cmpi ne, %1, %c0_i32_0 : i32
    scf.if %2 {
      %cst_109 = arith.constant 0.000000e+00 : bf16
      %327 = vector.broadcast %cst_109 : bf16 to vector<8x128xbf16>
      %c0_110 = arith.constant 0 : index
      %c0_111 = arith.constant 0 : index
      %328 = vector.load %arg9[%c0_110, %c0_111] : memref<8x128xbf16, #tpu.memory_space<vmem>>, vector<8x128xbf16>
      tpu.vector_store %arg9[%c0_110, %c0_111], %327 {strides = array<i32>} : memref<8x128xbf16, #tpu.memory_space<vmem>>, vector<8x128xbf16>,
      %cst_112 = arith.constant 0.000000e+00 : f32
      %329 = vector.broadcast %cst_112 : f32 to vector<8x128xf32>
      %c0_113 = arith.constant 0 : index
      %c0_114 = arith.constant 0 : index
      %330 = vector.load %arg10[%c0_113, %c0_114] : memref<8x128xf32, #tpu.memory_space<vmem>>, vector<8x128xf32>
      tpu.vector_store %arg10[%c0_113, %c0_114], %329 {strides = array<i32>} : memref<8x128xf32, #tpu.memory_space<vmem>>, vector<8x128xf32>,
    } else {
    }
    %c0 = arith.constant 0 : index
    %c0_1 = arith.constant 0 : index
    %c0_2 = arith.constant 0 : index
    %3 = vector.load %arg3[%c0, %c0_1, %c0_2] : memref<8x8x128xbf16, #tpu.memory_space<vmem>>, vector<8x8x128xbf16>
    %4 = vector.shape_cast %3 : vector<8x8x128xbf16> to vector<64x128xbf16>
    %c0_3 = arith.constant 0 : index
    %c0_4 = arith.constant 0 : index
    %5 = vector.load %arg4[%c0_3, %c0_4] : memref<128x512xbf16, #tpu.memory_space<vmem>>, vector<128x512xbf16>
    %cst = arith.constant dense<0.000000e+00> : vector<64x512xf32>
    %6 = tpu.matmul %4, %5, %cst {dimension_numbers = #tpu.dot_dimension_numbers<[1], [0], [0], [1], [0, 0, 1, 1], [], []>} : vector<64x128xbf16>, vector<128x512xbf16>, vector<64x512xf32> -> vector<64x512xf32>
    %c0_5 = arith.constant 0 : index
    %c0_6 = arith.constant 0 : index
    %7 = vector.load %arg6[%c0_5, %c0_6] : memref<1x512xf32, #tpu.memory_space<vmem>>, vector<1x512xf32>
    %8 = vector.broadcast %7 : vector<1x512xf32> to vector<64x512xf32>
    %9 = arith.addf %6, %8 : vector<64x512xf32>
    %10 = vector.shape_cast %9 : vector<64x512xf32> to vector<8x8x512xf32>
    %11 = arith.truncf %10 : vector<8x8x512xf32> to vector<8x8x512xbf16>
    %c0_7 = arith.constant 0 : index
    %c0_8 = arith.constant 0 : index
    %c0_9 = arith.constant 0 : index
    %12 = vector.load %arg8[%c0_7, %c0_8, %c0_9] : memref<8x8x512xbf16, #tpu.memory_space<vmem>>, vector<8x8x512xbf16>
    tpu.vector_store %arg8[%c0_7, %c0_8, %c0_9], %11 {strides = array<i32>} : memref<8x8x512xbf16, #tpu.memory_space<vmem>>, vector<8x8x512xbf16>,
    %c0_10 = arith.constant 0 : index
    %c0_11 = arith.constant 0 : index
    %13 = vector.load %arg9[%c0_10, %c0_11] : memref<8x128xbf16, #tpu.memory_space<vmem>>, vector<8x128xbf16>
    %c0_12 = arith.constant 0 : index
    %c0_13 = arith.constant 0 : index
    %14 = vector.load %arg10[%c0_12, %c0_13] : memref<8x128xf32, #tpu.memory_space<vmem>>, vector<8x128xf32>
    %c0_i32_14 = arith.constant 0 : i32
    %c0_15 = arith.constant 0 : index
    %c0_16 = arith.constant 0 : index
    %15 = vector.load %arg5[%c0_15, %c0_16] : memref<128x512xbf16, #tpu.memory_space<vmem>>, vector<128x512xbf16>
    %cst_17 = arith.constant dense<0.000000e+00> : vector<8x512xf32>
    %16 = tpu.matmul %13, %15, %cst_17 {dimension_numbers = #tpu.dot_dimension_numbers<[1], [0], [0], [1], [0, 0, 1, 1], [], []>} : vector<8x128xbf16>, vector<128x512xbf16>, vector<8x512xf32> -> vector<8x512xf32>
    %17 = arith.index_cast %c0_i32_14 : i32 to index
    %c0_18 = arith.constant 0 : index
    %c0_19 = arith.constant 0 : index
    %18 = vector.load %arg8[%17, %c0_18, %c0_19] : memref<8x8x512xbf16, #tpu.memory_space<vmem>>, vector<1x8x512xbf16>
    %19 = vector.shape_cast %18 : vector<1x8x512xbf16> to vector<8x512xbf16>
    %20 = arith.extf %19 : vector<8x512xbf16> to vector<8x512xf32>
    %21 = arith.addf %16, %20 : vector<8x512xf32>
    %22 = vector.extract_strided_slice %21 {offsets = [0, 0], sizes = [8, 128], strides = [1, 1]} : vector<8x512xf32> to vector<8x128xf32>
    %23 = arith.negf %22 : vector<8x128xf32>
    %24 = math.exp %23 : vector<8x128xf32>
    %cst_20 = arith.constant 1.000000e+00 : f32
    %25 = vector.broadcast %cst_20 : f32 to vector<8x128xf32>
    %26 = arith.addf %25, %24 : vector<8x128xf32>
    %27 = arith.divf %25, %26 : vector<8x128xf32>
    %28 = vector.extract_strided_slice %21 {offsets = [0, 128], sizes = [8, 128], strides = [1, 1]} : vector<8x512xf32> to vector<8x128xf32>
    %29 = arith.negf %28 : vector<8x128xf32>
    %30 = math.exp %29 : vector<8x128xf32>
    %cst_21 = arith.constant 1.000000e+00 : f32
    %31 = vector.broadcast %cst_21 : f32 to vector<8x128xf32>
    %32 = arith.addf %31, %30 : vector<8x128xf32>
    %33 = arith.divf %31, %32 : vector<8x128xf32>
    %34 = vector.extract_strided_slice %21 {offsets = [0, 256], sizes = [8, 128], strides = [1, 1]} : vector<8x512xf32> to vector<8x128xf32>
    %35 = math.tanh %34 : vector<8x128xf32>
    %36 = vector.extract_strided_slice %21 {offsets = [0, 384], sizes = [8, 128], strides = [1, 1]} : vector<8x512xf32> to vector<8x128xf32>
    %37 = arith.negf %36 : vector<8x128xf32>
    %38 = math.exp %37 : vector<8x128xf32>
    %cst_22 = arith.constant 1.000000e+00 : f32
    %39 = vector.broadcast %cst_22 : f32 to vector<8x128xf32>
    %40 = arith.addf %39, %38 : vector<8x128xf32>
    %41 = arith.divf %39, %40 : vector<8x128xf32>
    %42 = arith.mulf %33, %14 : vector<8x128xf32>
    %43 = arith.mulf %27, %35 : vector<8x128xf32>
    %44 = arith.addf %42, %43 : vector<8x128xf32>
    %45 = math.tanh %44 : vector<8x128xf32>
    %46 = arith.mulf %41, %45 : vector<8x128xf32>
    %47 = arith.truncf %46 : vector<8x128xf32> to vector<8x128xbf16>
    %48 = arith.index_cast %c0_i32_14 : i32 to index
    %c0_23 = arith.constant 0 : index
    %c0_24 = arith.constant 0 : index
    %49 = vector.load %arg7[%48, %c0_23, %c0_24] : memref<8x8x128xbf16, #tpu.memory_space<vmem>>, vector<1x8x128xbf16>
    %50 = vector.shape_cast %49 : vector<1x8x128xbf16> to vector<8x128xbf16>
    %51 = vector.shape_cast %47 : vector<8x128xbf16> to vector<1x8x128xbf16>
    tpu.vector_store %arg7[%48, %c0_23, %c0_24], %51 {strides = array<i32>} : memref<8x8x128xbf16, #tpu.memory_space<vmem>>, vector<1x8x128xbf16>,
    %c1_i32 = arith.constant 1 : i32
    %c0_25 = arith.constant 0 : index
    %c0_26 = arith.constant 0 : index
    %52 = vector.load %arg5[%c0_25, %c0_26] : memref<128x512xbf16, #tpu.memory_space<vmem>>, vector<128x512xbf16>
    %cst_27 = arith.constant dense<0.000000e+00> : vector<8x512xf32>
    %53 = tpu.matmul %47, %52, %cst_27 {dimension_numbers = #tpu.dot_dimension_numbers<[1], [0], [0], [1], [0, 0, 1, 1], [], []>} : vector<8x128xbf16>, vector<128x512xbf16>, vector<8x512xf32> -> vector<8x512xf32>
    %54 = arith.index_cast %c1_i32 : i32 to index
    %c0_28 = arith.constant 0 : index
    %c0_29 = arith.constant 0 : index
    %55 = vector.load %arg8[%54, %c0_28, %c0_29] : memref<8x8x512xbf16, #tpu.memory_space<vmem>>, vector<1x8x512xbf16>
    %56 = vector.shape_cast %55 : vector<1x8x512xbf16> to vector<8x512xbf16>
    %57 = arith.extf %56 : vector<8x512xbf16> to vector<8x512xf32>
    %58 = arith.addf %53, %57 : vector<8x512xf32>
    %59 = vector.extract_strided_slice %58 {offsets = [0, 0], sizes = [8, 128], strides = [1, 1]} : vector<8x512xf32> to vector<8x128xf32>
    %60 = arith.negf %59 : vector<8x128xf32>
    %61 = math.exp %60 : vector<8x128xf32>
    %cst_30 = arith.constant 1.000000e+00 : f32
    %62 = vector.broadcast %cst_30 : f32 to vector<8x128xf32>
    %63 = arith.addf %62, %61 : vector<8x128xf32>
    %64 = arith.divf %62, %63 : vector<8x128xf32>
    %65 = vector.extract_strided_slice %58 {offsets = [0, 128], sizes = [8, 128], strides = [1, 1]} : vector<8x512xf32> to vector<8x128xf32>
    %66 = arith.negf %65 : vector<8x128xf32>
    %67 = math.exp %66 : vector<8x128xf32>
    %cst_31 = arith.constant 1.000000e+00 : f32
    %68 = vector.broadcast %cst_31 : f32 to vector<8x128xf32>
    %69 = arith.addf %68, %67 : vector<8x128xf32>
    %70 = arith.divf %68, %69 : vector<8x128xf32>
    %71 = vector.extract_strided_slice %58 {offsets = [0, 256], sizes = [8, 128], strides = [1, 1]} : vector<8x512xf32> to vector<8x128xf32>
    %72 = math.tanh %71 : vector<8x128xf32>
    %73 = vector.extract_strided_slice %58 {offsets = [0, 384], sizes = [8, 128], strides = [1, 1]} : vector<8x512xf32> to vector<8x128xf32>
    %74 = arith.negf %73 : vector<8x128xf32>
    %75 = math.exp %74 : vector<8x128xf32>
    %cst_32 = arith.constant 1.000000e+00 : f32
    %76 = vector.broadcast %cst_32 : f32 to vector<8x128xf32>
    %77 = arith.addf %76, %75 : vector<8x128xf32>
    %78 = arith.divf %76, %77 : vector<8x128xf32>
    %79 = arith.mulf %70, %44 : vector<8x128xf32>
    %80 = arith.mulf %64, %72 : vector<8x128xf32>
    %81 = arith.addf %79, %80 : vector<8x128xf32>
    %82 = math.tanh %81 : vector<8x128xf32>
    %83 = arith.mulf %78, %82 : vector<8x128xf32>
    %84 = arith.truncf %83 : vector<8x128xf32> to vector<8x128xbf16>
    %85 = arith.index_cast %c1_i32 : i32 to index
    %c0_33 = arith.constant 0 : index
    %c0_34 = arith.constant 0 : index
    %86 = vector.load %arg7[%85, %c0_33, %c0_34] : memref<8x8x128xbf16, #tpu.memory_space<vmem>>, vector<1x8x128xbf16>
    %87 = vector.shape_cast %86 : vector<1x8x128xbf16> to vector<8x128xbf16>
    %88 = vector.shape_cast %84 : vector<8x128xbf16> to vector<1x8x128xbf16>
    tpu.vector_store %arg7[%85, %c0_33, %c0_34], %88 {strides = array<i32>} : memref<8x8x128xbf16, #tpu.memory_space<vmem>>, vector<1x8x128xbf16>,
    %c2_i32 = arith.constant 2 : i32
    %c0_35 = arith.constant 0 : index
    %c0_36 = arith.constant 0 : index
    %89 = vector.load %arg5[%c0_35, %c0_36] : memref<128x512xbf16, #tpu.memory_space<vmem>>, vector<128x512xbf16>
    %cst_37 = arith.constant dense<0.000000e+00> : vector<8x512xf32>
    %90 = tpu.matmul %84, %89, %cst_37 {dimension_numbers = #tpu.dot_dimension_numbers<[1], [0], [0], [1], [0, 0, 1, 1], [], []>} : vector<8x128xbf16>, vector<128x512xbf16>, vector<8x512xf32> -> vector<8x512xf32>
    %91 = arith.index_cast %c2_i32 : i32 to index
    %c0_38 = arith.constant 0 : index
    %c0_39 = arith.constant 0 : index
    %92 = vector.load %arg8[%91, %c0_38, %c0_39] : memref<8x8x512xbf16, #tpu.memory_space<vmem>>, vector<1x8x512xbf16>
    %93 = vector.shape_cast %92 : vector<1x8x512xbf16> to vector<8x512xbf16>
    %94 = arith.extf %93 : vector<8x512xbf16> to vector<8x512xf32>
    %95 = arith.addf %90, %94 : vector<8x512xf32>
    %96 = vector.extract_strided_slice %95 {offsets = [0, 0], sizes = [8, 128], strides = [1, 1]} : vector<8x512xf32> to vector<8x128xf32>
    %97 = arith.negf %96 : vector<8x128xf32>
    %98 = math.exp %97 : vector<8x128xf32>
    %cst_40 = arith.constant 1.000000e+00 : f32
    %99 = vector.broadcast %cst_40 : f32 to vector<8x128xf32>
    %100 = arith.addf %99, %98 : vector<8x128xf32>
    %101 = arith.divf %99, %100 : vector<8x128xf32>
    %102 = vector.extract_strided_slice %95 {offsets = [0, 128], sizes = [8, 128], strides = [1, 1]} : vector<8x512xf32> to vector<8x128xf32>
    %103 = arith.negf %102 : vector<8x128xf32>
    %104 = math.exp %103 : vector<8x128xf32>
    %cst_41 = arith.constant 1.000000e+00 : f32
    %105 = vector.broadcast %cst_41 : f32 to vector<8x128xf32>
    %106 = arith.addf %105, %104 : vector<8x128xf32>
    %107 = arith.divf %105, %106 : vector<8x128xf32>
    %108 = vector.extract_strided_slice %95 {offsets = [0, 256], sizes = [8, 128], strides = [1, 1]} : vector<8x512xf32> to vector<8x128xf32>
    %109 = math.tanh %108 : vector<8x128xf32>
    %110 = vector.extract_strided_slice %95 {offsets = [0, 384], sizes = [8, 128], strides = [1, 1]} : vector<8x512xf32> to vector<8x128xf32>
    %111 = arith.negf %110 : vector<8x128xf32>
    %112 = math.exp %111 : vector<8x128xf32>
    %cst_42 = arith.constant 1.000000e+00 : f32
    %113 = vector.broadcast %cst_42 : f32 to vector<8x128xf32>
    %114 = arith.addf %113, %112 : vector<8x128xf32>
    %115 = arith.divf %113, %114 : vector<8x128xf32>
    %116 = arith.mulf %107, %81 : vector<8x128xf32>
    %117 = arith.mulf %101, %109 : vector<8x128xf32>
    %118 = arith.addf %116, %117 : vector<8x128xf32>
    %119 = math.tanh %118 : vector<8x128xf32>
    %120 = arith.mulf %115, %119 : vector<8x128xf32>
    %121 = arith.truncf %120 : vector<8x128xf32> to vector<8x128xbf16>
    %122 = arith.index_cast %c2_i32 : i32 to index
    %c0_43 = arith.constant 0 : index
    %c0_44 = arith.constant 0 : index
    %123 = vector.load %arg7[%122, %c0_43, %c0_44] : memref<8x8x128xbf16, #tpu.memory_space<vmem>>, vector<1x8x128xbf16>
    %124 = vector.shape_cast %123 : vector<1x8x128xbf16> to vector<8x128xbf16>
    %125 = vector.shape_cast %121 : vector<8x128xbf16> to vector<1x8x128xbf16>
    tpu.vector_store %arg7[%122, %c0_43, %c0_44], %125 {strides = array<i32>} : memref<8x8x128xbf16, #tpu.memory_space<vmem>>, vector<1x8x128xbf16>,
    %c3_i32 = arith.constant 3 : i32
    %c0_45 = arith.constant 0 : index
    %c0_46 = arith.constant 0 : index
    %126 = vector.load %arg5[%c0_45, %c0_46] : memref<128x512xbf16, #tpu.memory_space<vmem>>, vector<128x512xbf16>
    %cst_47 = arith.constant dense<0.000000e+00> : vector<8x512xf32>
    %127 = tpu.matmul %121, %126, %cst_47 {dimension_numbers = #tpu.dot_dimension_numbers<[1], [0], [0], [1], [0, 0, 1, 1], [], []>} : vector<8x128xbf16>, vector<128x512xbf16>, vector<8x512xf32> -> vector<8x512xf32>
    %128 = arith.index_cast %c3_i32 : i32 to index
    %c0_48 = arith.constant 0 : index
    %c0_49 = arith.constant 0 : index
    %129 = vector.load %arg8[%128, %c0_48, %c0_49] : memref<8x8x512xbf16, #tpu.memory_space<vmem>>, vector<1x8x512xbf16>
    %130 = vector.shape_cast %129 : vector<1x8x512xbf16> to vector<8x512xbf16>
    %131 = arith.extf %130 : vector<8x512xbf16> to vector<8x512xf32>
    %132 = arith.addf %127, %131 : vector<8x512xf32>
    %133 = vector.extract_strided_slice %132 {offsets = [0, 0], sizes = [8, 128], strides = [1, 1]} : vector<8x512xf32> to vector<8x128xf32>
    %134 = arith.negf %133 : vector<8x128xf32>
    %135 = math.exp %134 : vector<8x128xf32>
    %cst_50 = arith.constant 1.000000e+00 : f32
    %136 = vector.broadcast %cst_50 : f32 to vector<8x128xf32>
    %137 = arith.addf %136, %135 : vector<8x128xf32>
    %138 = arith.divf %136, %137 : vector<8x128xf32>
    %139 = vector.extract_strided_slice %132 {offsets = [0, 128], sizes = [8, 128], strides = [1, 1]} : vector<8x512xf32> to vector<8x128xf32>
    %140 = arith.negf %139 : vector<8x128xf32>
    %141 = math.exp %140 : vector<8x128xf32>
    %cst_51 = arith.constant 1.000000e+00 : f32
    %142 = vector.broadcast %cst_51 : f32 to vector<8x128xf32>
    %143 = arith.addf %142, %141 : vector<8x128xf32>
    %144 = arith.divf %142, %143 : vector<8x128xf32>
    %145 = vector.extract_strided_slice %132 {offsets = [0, 256], sizes = [8, 128], strides = [1, 1]} : vector<8x512xf32> to vector<8x128xf32>
    %146 = math.tanh %145 : vector<8x128xf32>
    %147 = vector.extract_strided_slice %132 {offsets = [0, 384], sizes = [8, 128], strides = [1, 1]} : vector<8x512xf32> to vector<8x128xf32>
    %148 = arith.negf %147 : vector<8x128xf32>
    %149 = math.exp %148 : vector<8x128xf32>
    %cst_52 = arith.constant 1.000000e+00 : f32
    %150 = vector.broadcast %cst_52 : f32 to vector<8x128xf32>
    %151 = arith.addf %150, %149 : vector<8x128xf32>
    %152 = arith.divf %150, %151 : vector<8x128xf32>
    %153 = arith.mulf %144, %118 : vector<8x128xf32>
    %154 = arith.mulf %138, %146 : vector<8x128xf32>
    %155 = arith.addf %153, %154 : vector<8x128xf32>
    %156 = math.tanh %155 : vector<8x128xf32>
    %157 = arith.mulf %152, %156 : vector<8x128xf32>
    %158 = arith.truncf %157 : vector<8x128xf32> to vector<8x128xbf16>
    %159 = arith.index_cast %c3_i32 : i32 to index
    %c0_53 = arith.constant 0 : index
    %c0_54 = arith.constant 0 : index
    %160 = vector.load %arg7[%159, %c0_53, %c0_54] : memref<8x8x128xbf16, #tpu.memory_space<vmem>>, vector<1x8x128xbf16>
    %161 = vector.shape_cast %160 : vector<1x8x128xbf16> to vector<8x128xbf16>
    %162 = vector.shape_cast %158 : vector<8x128xbf16> to vector<1x8x128xbf16>
    tpu.vector_store %arg7[%159, %c0_53, %c0_54], %162 {strides = array<i32>} : memref<8x8x128xbf16, #tpu.memory_space<vmem>>, vector<1x8x128xbf16>,
    %c4_i32 = arith.constant 4 : i32
    %c0_55 = arith.constant 0 : index
    %c0_56 = arith.constant 0 : index
    %163 = vector.load %arg5[%c0_55, %c0_56] : memref<128x512xbf16, #tpu.memory_space<vmem>>, vector<128x512xbf16>
    %cst_57 = arith.constant dense<0.000000e+00> : vector<8x512xf32>
    %164 = tpu.matmul %158, %163, %cst_57 {dimension_numbers = #tpu.dot_dimension_numbers<[1], [0], [0], [1], [0, 0, 1, 1], [], []>} : vector<8x128xbf16>, vector<128x512xbf16>, vector<8x512xf32> -> vector<8x512xf32>
    %165 = arith.index_cast %c4_i32 : i32 to index
    %c0_58 = arith.constant 0 : index
    %c0_59 = arith.constant 0 : index
    %166 = vector.load %arg8[%165, %c0_58, %c0_59] : memref<8x8x512xbf16, #tpu.memory_space<vmem>>, vector<1x8x512xbf16>
    %167 = vector.shape_cast %166 : vector<1x8x512xbf16> to vector<8x512xbf16>
    %168 = arith.extf %167 : vector<8x512xbf16> to vector<8x512xf32>
    %169 = arith.addf %164, %168 : vector<8x512xf32>
    %170 = vector.extract_strided_slice %169 {offsets = [0, 0], sizes = [8, 128], strides = [1, 1]} : vector<8x512xf32> to vector<8x128xf32>
    %171 = arith.negf %170 : vector<8x128xf32>
    %172 = math.exp %171 : vector<8x128xf32>
    %cst_60 = arith.constant 1.000000e+00 : f32
    %173 = vector.broadcast %cst_60 : f32 to vector<8x128xf32>
    %174 = arith.addf %173, %172 : vector<8x128xf32>
    %175 = arith.divf %173, %174 : vector<8x128xf32>
    %176 = vector.extract_strided_slice %169 {offsets = [0, 128], sizes = [8, 128], strides = [1, 1]} : vector<8x512xf32> to vector<8x128xf32>
    %177 = arith.negf %176 : vector<8x128xf32>
    %178 = math.exp %177 : vector<8x128xf32>
    %cst_61 = arith.constant 1.000000e+00 : f32
    %179 = vector.broadcast %cst_61 : f32 to vector<8x128xf32>
    %180 = arith.addf %179, %178 : vector<8x128xf32>
    %181 = arith.divf %179, %180 : vector<8x128xf32>
    %182 = vector.extract_strided_slice %169 {offsets = [0, 256], sizes = [8, 128], strides = [1, 1]} : vector<8x512xf32> to vector<8x128xf32>
    %183 = math.tanh %182 : vector<8x128xf32>
    %184 = vector.extract_strided_slice %169 {offsets = [0, 384], sizes = [8, 128], strides = [1, 1]} : vector<8x512xf32> to vector<8x128xf32>
    %185 = arith.negf %184 : vector<8x128xf32>
    %186 = math.exp %185 : vector<8x128xf32>
    %cst_62 = arith.constant 1.000000e+00 : f32
    %187 = vector.broadcast %cst_62 : f32 to vector<8x128xf32>
    %188 = arith.addf %187, %186 : vector<8x128xf32>
    %189 = arith.divf %187, %188 : vector<8x128xf32>
    %190 = arith.mulf %181, %155 : vector<8x128xf32>
    %191 = arith.mulf %175, %183 : vector<8x128xf32>
    %192 = arith.addf %190, %191 : vector<8x128xf32>
    %193 = math.tanh %192 : vector<8x128xf32>
    %194 = arith.mulf %189, %193 : vector<8x128xf32>
    %195 = arith.truncf %194 : vector<8x128xf32> to vector<8x128xbf16>
    %196 = arith.index_cast %c4_i32 : i32 to index
    %c0_63 = arith.constant 0 : index
    %c0_64 = arith.constant 0 : index
    %197 = vector.load %arg7[%196, %c0_63, %c0_64] : memref<8x8x128xbf16, #tpu.memory_space<vmem>>, vector<1x8x128xbf16>
    %198 = vector.shape_cast %197 : vector<1x8x128xbf16> to vector<8x128xbf16>
    %199 = vector.shape_cast %195 : vector<8x128xbf16> to vector<1x8x128xbf16>
    tpu.vector_store %arg7[%196, %c0_63, %c0_64], %199 {strides = array<i32>} : memref<8x8x128xbf16, #tpu.memory_space<vmem>>, vector<1x8x128xbf16>,
    %c5_i32 = arith.constant 5 : i32
    %c0_65 = arith.constant 0 : index
    %c0_66 = arith.constant 0 : index
    %200 = vector.load %arg5[%c0_65, %c0_66] : memref<128x512xbf16, #tpu.memory_space<vmem>>, vector<128x512xbf16>
    %cst_67 = arith.constant dense<0.000000e+00> : vector<8x512xf32>
    %201 = tpu.matmul %195, %200, %cst_67 {dimension_numbers = #tpu.dot_dimension_numbers<[1], [0], [0], [1], [0, 0, 1, 1], [], []>} : vector<8x128xbf16>, vector<128x512xbf16>, vector<8x512xf32> -> vector<8x512xf32>
    %202 = arith.index_cast %c5_i32 : i32 to index
    %c0_68 = arith.constant 0 : index
    %c0_69 = arith.constant 0 : index
    %203 = vector.load %arg8[%202, %c0_68, %c0_69] : memref<8x8x512xbf16, #tpu.memory_space<vmem>>, vector<1x8x512xbf16>
    %204 = vector.shape_cast %203 : vector<1x8x512xbf16> to vector<8x512xbf16>
    %205 = arith.extf %204 : vector<8x512xbf16> to vector<8x512xf32>
    %206 = arith.addf %201, %205 : vector<8x512xf32>
    %207 = vector.extract_strided_slice %206 {offsets = [0, 0], sizes = [8, 128], strides = [1, 1]} : vector<8x512xf32> to vector<8x128xf32>
    %208 = arith.negf %207 : vector<8x128xf32>
    %209 = math.exp %208 : vector<8x128xf32>
    %cst_70 = arith.constant 1.000000e+00 : f32
    %210 = vector.broadcast %cst_70 : f32 to vector<8x128xf32>
    %211 = arith.addf %210, %209 : vector<8x128xf32>
    %212 = arith.divf %210, %211 : vector<8x128xf32>
    %213 = vector.extract_strided_slice %206 {offsets = [0, 128], sizes = [8, 128], strides = [1, 1]} : vector<8x512xf32> to vector<8x128xf32>
    %214 = arith.negf %213 : vector<8x128xf32>
    %215 = math.exp %214 : vector<8x128xf32>
    %cst_71 = arith.constant 1.000000e+00 : f32
    %216 = vector.broadcast %cst_71 : f32 to vector<8x128xf32>
    %217 = arith.addf %216, %215 : vector<8x128xf32>
    %218 = arith.divf %216, %217 : vector<8x128xf32>
    %219 = vector.extract_strided_slice %206 {offsets = [0, 256], sizes = [8, 128], strides = [1, 1]} : vector<8x512xf32> to vector<8x128xf32>
    %220 = math.tanh %219 : vector<8x128xf32>
    %221 = vector.extract_strided_slice %206 {offsets = [0, 384], sizes = [8, 128], strides = [1, 1]} : vector<8x512xf32> to vector<8x128xf32>
    %222 = arith.negf %221 : vector<8x128xf32>
    %223 = math.exp %222 : vector<8x128xf32>
    %cst_72 = arith.constant 1.000000e+00 : f32
    %224 = vector.broadcast %cst_72 : f32 to vector<8x128xf32>
    %225 = arith.addf %224, %223 : vector<8x128xf32>
    %226 = arith.divf %224, %225 : vector<8x128xf32>
    %227 = arith.mulf %218, %192 : vector<8x128xf32>
    %228 = arith.mulf %212, %220 : vector<8x128xf32>
    %229 = arith.addf %227, %228 : vector<8x128xf32>
    %230 = math.tanh %229 : vector<8x128xf32>
    %231 = arith.mulf %226, %230 : vector<8x128xf32>
    %232 = arith.truncf %231 : vector<8x128xf32> to vector<8x128xbf16>
    %233 = arith.index_cast %c5_i32 : i32 to index
    %c0_73 = arith.constant 0 : index
    %c0_74 = arith.constant 0 : index
    %234 = vector.load %arg7[%233, %c0_73, %c0_74] : memref<8x8x128xbf16, #tpu.memory_space<vmem>>, vector<1x8x128xbf16>
    %235 = vector.shape_cast %234 : vector<1x8x128xbf16> to vector<8x128xbf16>
    %236 = vector.shape_cast %232 : vector<8x128xbf16> to vector<1x8x128xbf16>
    tpu.vector_store %arg7[%233, %c0_73, %c0_74], %236 {strides = array<i32>} : memref<8x8x128xbf16, #tpu.memory_space<vmem>>, vector<1x8x128xbf16>,
    %c6_i32 = arith.constant 6 : i32
    %c0_75 = arith.constant 0 : index
    %c0_76 = arith.constant 0 : index
    %237 = vector.load %arg5[%c0_75, %c0_76] : memref<128x512xbf16, #tpu.memory_space<vmem>>, vector<128x512xbf16>
    %cst_77 = arith.constant dense<0.000000e+00> : vector<8x512xf32>
    %238 = tpu.matmul %232, %237, %cst_77 {dimension_numbers = #tpu.dot_dimension_numbers<[1], [0], [0], [1], [0, 0, 1, 1], [], []>} : vector<8x128xbf16>, vector<128x512xbf16>, vector<8x512xf32> -> vector<8x512xf32>
    %239 = arith.index_cast %c6_i32 : i32 to index
    %c0_78 = arith.constant 0 : index
    %c0_79 = arith.constant 0 : index
    %240 = vector.load %arg8[%239, %c0_78, %c0_79] : memref<8x8x512xbf16, #tpu.memory_space<vmem>>, vector<1x8x512xbf16>
    %241 = vector.shape_cast %240 : vector<1x8x512xbf16> to vector<8x512xbf16>
    %242 = arith.extf %241 : vector<8x512xbf16> to vector<8x512xf32>
    %243 = arith.addf %238, %242 : vector<8x512xf32>
    %244 = vector.extract_strided_slice %243 {offsets = [0, 0], sizes = [8, 128], strides = [1, 1]} : vector<8x512xf32> to vector<8x128xf32>
    %245 = arith.negf %244 : vector<8x128xf32>
    %246 = math.exp %245 : vector<8x128xf32>
    %cst_80 = arith.constant 1.000000e+00 : f32
    %247 = vector.broadcast %cst_80 : f32 to vector<8x128xf32>
    %248 = arith.addf %247, %246 : vector<8x128xf32>
    %249 = arith.divf %247, %248 : vector<8x128xf32>
    %250 = vector.extract_strided_slice %243 {offsets = [0, 128], sizes = [8, 128], strides = [1, 1]} : vector<8x512xf32> to vector<8x128xf32>
    %251 = arith.negf %250 : vector<8x128xf32>
    %252 = math.exp %251 : vector<8x128xf32>
    %cst_81 = arith.constant 1.000000e+00 : f32
    %253 = vector.broadcast %cst_81 : f32 to vector<8x128xf32>
    %254 = arith.addf %253, %252 : vector<8x128xf32>
    %255 = arith.divf %253, %254 : vector<8x128xf32>
    %256 = vector.extract_strided_slice %243 {offsets = [0, 256], sizes = [8, 128], strides = [1, 1]} : vector<8x512xf32> to vector<8x128xf32>
    %257 = math.tanh %256 : vector<8x128xf32>
    %258 = vector.extract_strided_slice %243 {offsets = [0, 384], sizes = [8, 128], strides = [1, 1]} : vector<8x512xf32> to vector<8x128xf32>
    %259 = arith.negf %258 : vector<8x128xf32>
    %260 = math.exp %259 : vector<8x128xf32>
    %cst_82 = arith.constant 1.000000e+00 : f32
    %261 = vector.broadcast %cst_82 : f32 to vector<8x128xf32>
    %262 = arith.addf %261, %260 : vector<8x128xf32>
    %263 = arith.divf %261, %262 : vector<8x128xf32>
    %264 = arith.mulf %255, %229 : vector<8x128xf32>
    %265 = arith.mulf %249, %257 : vector<8x128xf32>
    %266 = arith.addf %264, %265 : vector<8x128xf32>
    %267 = math.tanh %266 : vector<8x128xf32>
    %268 = arith.mulf %263, %267 : vector<8x128xf32>
    %269 = arith.truncf %268 : vector<8x128xf32> to vector<8x128xbf16>
    %270 = arith.index_cast %c6_i32 : i32 to index
    %c0_83 = arith.constant 0 : index
    %c0_84 = arith.constant 0 : index
    %271 = vector.load %arg7[%270, %c0_83, %c0_84] : memref<8x8x128xbf16, #tpu.memory_space<vmem>>, vector<1x8x128xbf16>
    %272 = vector.shape_cast %271 : vector<1x8x128xbf16> to vector<8x128xbf16>
    %273 = vector.shape_cast %269 : vector<8x128xbf16> to vector<1x8x128xbf16>
    tpu.vector_store %arg7[%270, %c0_83, %c0_84], %273 {strides = array<i32>} : memref<8x8x128xbf16, #tpu.memory_space<vmem>>, vector<1x8x128xbf16>,
    %c7_i32 = arith.constant 7 : i32
    %c0_85 = arith.constant 0 : index
    %c0_86 = arith.constant 0 : index
    %274 = vector.load %arg5[%c0_85, %c0_86] : memref<128x512xbf16, #tpu.memory_space<vmem>>, vector<128x512xbf16>
    %cst_87 = arith.constant dense<0.000000e+00> : vector<8x512xf32>
    %275 = tpu.matmul %269, %274, %cst_87 {dimension_numbers = #tpu.dot_dimension_numbers<[1], [0], [0], [1], [0, 0, 1, 1], [], []>} : vector<8x128xbf16>, vector<128x512xbf16>, vector<8x512xf32> -> vector<8x512xf32>
    %276 = arith.index_cast %c7_i32 : i32 to index
    %c0_88 = arith.constant 0 : index
    %c0_89 = arith.constant 0 : index
    %277 = vector.load %arg8[%276, %c0_88, %c0_89] : memref<8x8x512xbf16, #tpu.memory_space<vmem>>, vector<1x8x512xbf16>
    %278 = vector.shape_cast %277 : vector<1x8x512xbf16> to vector<8x512xbf16>
    %279 = arith.extf %278 : vector<8x512xbf16> to vector<8x512xf32>
    %280 = arith.addf %275, %279 : vector<8x512xf32>
    %281 = vector.extract_strided_slice %280 {offsets = [0, 0], sizes = [8, 128], strides = [1, 1]} : vector<8x512xf32> to vector<8x128xf32>
    %282 = arith.negf %281 : vector<8x128xf32>
    %283 = math.exp %282 : vector<8x128xf32>
    %cst_90 = arith.constant 1.000000e+00 : f32
    %284 = vector.broadcast %cst_90 : f32 to vector<8x128xf32>
    %285 = arith.addf %284, %283 : vector<8x128xf32>
    %286 = arith.divf %284, %285 : vector<8x128xf32>
    %287 = vector.extract_strided_slice %280 {offsets = [0, 128], sizes = [8, 128], strides = [1, 1]} : vector<8x512xf32> to vector<8x128xf32>
    %288 = arith.negf %287 : vector<8x128xf32>
    %289 = math.exp %288 : vector<8x128xf32>
    %cst_91 = arith.constant 1.000000e+00 : f32
    %290 = vector.broadcast %cst_91 : f32 to vector<8x128xf32>
    %291 = arith.addf %290, %289 : vector<8x128xf32>
    %292 = arith.divf %290, %291 : vector<8x128xf32>
    %293 = vector.extract_strided_slice %280 {offsets = [0, 256], sizes = [8, 128], strides = [1, 1]} : vector<8x512xf32> to vector<8x128xf32>
    %294 = math.tanh %293 : vector<8x128xf32>
    %295 = vector.extract_strided_slice %280 {offsets = [0, 384], sizes = [8, 128], strides = [1, 1]} : vector<8x512xf32> to vector<8x128xf32>
    %296 = arith.negf %295 : vector<8x128xf32>
    %297 = math.exp %296 : vector<8x128xf32>
    %cst_92 = arith.constant 1.000000e+00 : f32
    %298 = vector.broadcast %cst_92 : f32 to vector<8x128xf32>
    %299 = arith.addf %298, %297 : vector<8x128xf32>
    %300 = arith.divf %298, %299 : vector<8x128xf32>
    %301 = arith.mulf %292, %266 : vector<8x128xf32>
    %302 = arith.mulf %286, %294 : vector<8x128xf32>
    %303 = arith.addf %301, %302 : vector<8x128xf32>
    %304 = math.tanh %303 : vector<8x128xf32>
    %305 = arith.mulf %300, %304 : vector<8x128xf32>
    %306 = arith.truncf %305 : vector<8x128xf32> to vector<8x128xbf16>
    %307 = arith.index_cast %c7_i32 : i32 to index
    %c0_93 = arith.constant 0 : index
    %c0_94 = arith.constant 0 : index
    %308 = vector.load %arg7[%307, %c0_93, %c0_94] : memref<8x8x128xbf16, #tpu.memory_space<vmem>>, vector<1x8x128xbf16>
    %309 = vector.shape_cast %308 : vector<1x8x128xbf16> to vector<8x128xbf16>
    %310 = vector.shape_cast %306 : vector<8x128xbf16> to vector<1x8x128xbf16>
    tpu.vector_store %arg7[%307, %c0_93, %c0_94], %310 {strides = array<i32>} : memref<8x8x128xbf16, #tpu.memory_space<vmem>>, vector<1x8x128xbf16>,
    %c8_i32 = arith.constant 8 : i32
    %c0_95 = arith.constant 0 : index
    %c0_96 = arith.constant 0 : index
    %311 = vector.load %arg9[%c0_95, %c0_96] : memref<8x128xbf16, #tpu.memory_space<vmem>>, vector<8x128xbf16>
    tpu.vector_store %arg9[%c0_95, %c0_96], %306 {strides = array<i32>} : memref<8x128xbf16, #tpu.memory_space<vmem>>, vector<8x128xbf16>,
    %c0_97 = arith.constant 0 : index
    %c0_98 = arith.constant 0 : index
    %312 = vector.load %arg10[%c0_97, %c0_98] : memref<8x128xf32, #tpu.memory_space<vmem>>, vector<8x128xf32>
    tpu.vector_store %arg10[%c0_97, %c0_98], %303 {strides = array<i32>} : memref<8x128xf32, #tpu.memory_space<vmem>>, vector<8x128xf32>,
    %c0_99 = arith.constant 0 : index
    %c0_100 = arith.constant 0 : index
    %313 = vector.load %arg2[%c0_99, %c0_100] : memref<8x1xi32, #tpu.memory_space<vmem>>, vector<8x1xi32>
    %c8_i32_101 = arith.constant 8 : i32
    %314 = arith.muli %arg1, %c8_i32_101 : i32
    %315 = tpu.iota {dimensions = array<i32: 0>} : vector<8x8x1xi32>
    %316 = vector.broadcast %314 : i32 to vector<8x8x1xi32>
    %317 = arith.addi %316, %315 : vector<8x8x1xi32>
    %c0_102 = arith.constant 0 : index
    %c0_103 = arith.constant 0 : index
    %c0_104 = arith.constant 0 : index
    %318 = vector.load %arg7[%c0_102, %c0_103, %c0_104] : memref<8x8x128xbf16, #tpu.memory_space<vmem>>, vector<8x8x128xbf16>
    %319 = vector.shape_cast %313 : vector<8x1xi32> to vector<1x8x1xi32>
    %320 = vector.broadcast %319 : vector<1x8x1xi32> to vector<8x8x1xi32>
    %321 = arith.cmpi slt, %317, %320 : vector<8x8x1xi32>
    %cst_105 = arith.constant 0.000000e+00 : bf16
    %322 = vector.broadcast %cst_105 : bf16 to vector<8x8x128xbf16>
    %323 = vector.shape_cast %321 : vector<8x8x1xi1> to vector<8x8x1xi1>
    %324 = vector.broadcast %323 : vector<8x8x1xi1> to vector<8x8x128xi1>
    %325 = arith.select %324, %318, %322 : vector<8x8x128xi1>, vector<8x8x128xbf16>
    %c0_106 = arith.constant 0 : index
    %c0_107 = arith.constant 0 : index
    %c0_108 = arith.constant 0 : index
    %326 = vector.load %arg7[%c0_106, %c0_107, %c0_108] : memref<8x8x128xbf16, #tpu.memory_space<vmem>>, vector<8x8x128xbf16>
    tpu.vector_store %arg7[%c0_106, %c0_107, %c0_108], %325 {strides = array<i32>} : memref<8x8x128xbf16, #tpu.memory_space<vmem>>, vector<8x8x128xbf16>,
    return
  }
  func.func @transform_0(%arg0: i32, %arg1: i32) -> (i32, i32) {
    %c0_i32 = arith.constant 0 : i32
    %c0_i32_0 = arith.constant 0 : i32
    return %arg0, %c0_i32 : i32, i32
  }
  func.func @transform_1(%arg0: i32, %arg1: i32) -> (i32, i32, i32) {
    %c0_i32 = arith.constant 0 : i32
    %c0_i32_0 = arith.constant 0 : i32
    return %arg1, %arg0, %c0_i32 : i32, i32, i32
  }
  func.func @transform_2(%arg0: i32, %arg1: i32) -> (i32, i32) {
    %c0_i32 = arith.constant 0 : i32
    %c0_i32_0 = arith.constant 0 : i32
    %c0_i32_1 = arith.constant 0 : i32
    return %c0_i32, %c0_i32_0 : i32, i32
  }
  func.func @transform_3(%arg0: i32, %arg1: i32) -> (i32, i32) {
    %c0_i32 = arith.constant 0 : i32
    %c0_i32_0 = arith.constant 0 : i32
    %c0_i32_1 = arith.constant 0 : i32
    return %c0_i32, %c0_i32_0 : i32, i32
  }
  func.func @transform_4(%arg0: i32, %arg1: i32) -> (i32, i32) {
    %c0_i32 = arith.constant 0 : i32
    %c0_i32_0 = arith.constant 0 : i32
    %c0_i32_1 = arith.constant 0 : i32
    return %c0_i32, %c0_i32_0 : i32, i32
  }
  func.func @transform_5(%arg0: i32, %arg1: i32) -> (i32, i32, i32) {
    %c0_i32 = arith.constant 0 : i32
    %c0_i32_0 = arith.constant 0 : i32
    return %arg1, %arg0, %c0_i32 : i32, i32, i32
  }
}

</mosaic_0001>

<llo_original>
// kernel: tpu_custom_call.1
$region0: #{tpu_custom_call.1}
  #allocation0 [shape = 'u32[]', space=smem, size = 0x4, offset = 0x4, fixed_abs, tag = 'smem constant byte address 0x4 - core index']
  #allocation1 [shape = 'u32[144,128]{1,0:T(1,128)}', space=vmem, size = 0x12000, scoped, tag = 'internal scratch']
  #allocation2 [shape = 'bf16[8,8,512]{2,1,0:T(8,128)(2,1)}', space=vmem, size = 0x10000, scoped, tag = 'scratch operand']
  #allocation3 [shape = 'bf16[8,128]{1,0:T(8,128)(2,1)}', space=vmem, size = 0x800, scoped, tag = 'scratch operand']
  #allocation4 [shape = 'f32[8,128]{1,0:T(8,128)}', space=vmem, size = 0x1000, scoped, tag = 'scratch operand']
  %s0 = inlined_call_operand.vmem [shape: s32[8,1], index: 0, kind: input, shape index: {}]
  %s1 = inlined_call_operand.hbm [shape: bf16[8,8,128], index: 1, kind: input, shape index: {}]
  %s2 = inlined_call_operand.hbm [shape: bf16[128,512], index: 2, kind: input, shape index: {}]
  %s3 = inlined_call_operand.hbm [shape: bf16[128,512], index: 3, kind: input, shape index: {}]
  %s4 = inlined_call_operand.vmem [shape: f32[1,512], index: 4, kind: input, shape index: {}]
  %s5 = inlined_call_operand.hbm [shape: bf16[8,8,128], index: 5, kind: output, shape index: {}]
  %s6 = sld [smem:[#allocation0]]
  $region46: #{tpu_custom_call.1} parent=0
    _
  %s8 = ssub.s32 1, %s6
  %s9 = scalar_select 0, %s8, %s6
  $region1: #{tpu_custom_call.1} parent=0
    #allocation5 [shape = 'u8[16384]{0}', space=vmem, size = 0x4000, scoped, tag = 'input window, operand 1, single buffered']
    #allocation6 [shape = 's32[1]{0}', space=sflag, size = 0x4, scoped, tag = 'scoped memory for tpu_custom_call.1']
    #allocation7 [shape = 's32[1]{0}', space=sflag, size = 0x4, scoped, tag = 'scoped memory for tpu_custom_call.1']
    #allocation8 [shape = 'u8[131072]{0}', space=vmem, size = 0x20000, scoped, tag = 'input window, operand 2, single buffered']
    #allocation9 [shape = 's32[1]{0}', space=sflag, size = 0x4, scoped, tag = 'scoped memory for tpu_custom_call.1']
    #allocation10 [shape = 'u8[131072]{0}', space=vmem, size = 0x20000, scoped, tag = 'input window, operand 3, single buffered']
    #allocation11 [shape = 'u8[16384]{0}', space=vmem, size = 0x4000, scoped, tag = 'output window, operand 0, single buffered']
    %10 = vsyncpa [#allocation6], 0
    %11 = vsyncpa [#allocation9], 0
    %12 = vsyncpa [#allocation7], 0
    // Predicated region
    $region2: #{tpu_custom_call.1} parent=1 // pred_check
      _
    $region3: #{tpu_custom_call.1} parent=1 // pred_check_branch
      %14 = sbr.rel (0) target = $region5
    $region4: #{tpu_custom_call.1} parent=1 // pred_region
      _
    $region5: #{tpu_custom_call.1} parent=1 // pred_fallthru
      _
    // Predicated region
    $region6: #{tpu_custom_call.1} parent=1 // pred_check
      _
    $region7: #{tpu_custom_call.1} parent=1 // pred_check_branch
      %16 = sbr.rel (0) target = $region9
    $region8: #{tpu_custom_call.1} parent=1 // pred_region
      %s18 = ssub.s32 512, 512
      %19 = vsyncadd [#allocation6], %s18
      %s20 = sshll.u32 [#allocation5], 4
      %s21 = int_to_ptr.vmem [resolvable:$true] %s20
      %26 = dma.hbm_to_vmem [thread:$0]  %s1, 512, %s21, [#allocation6], 64, 64, 4
    $region9: #{tpu_custom_call.1} parent=1 // pred_fallthru
      _
    // Predicated region
    $region10: #{tpu_custom_call.1} parent=1 // pred_check
      _
    $region11: #{tpu_custom_call.1} parent=1 // pred_check_branch
      %28 = sbr.rel (0) target = $region13
    $region12: #{tpu_custom_call.1} parent=1 // pred_region
      %s30 = ssub.s32 4096, 4096
      %31 = vsyncadd [#allocation9], %s30
      %s32 = sshll.u32 [#allocation8], 4
      %s33 = int_to_ptr.vmem [resolvable:$true] %s32
      %38 = dma.hbm_to_vmem [thread:$0]  %s2, 4096, %s33, [#allocation9], 256, 256, 16
    $region13: #{tpu_custom_call.1} parent=1 // pred_fallthru
      _
    // Predicated region
    $region14: #{tpu_custom_call.1} parent=1 // pred_check
      _
    $region15: #{tpu_custom_call.1} parent=1 // pred_check_branch
      %40 = sbr.rel (0) target = $region17
    $region16: #{tpu_custom_call.1} parent=1 // pred_region
      %s42 = ssub.s32 4096, 4096
      %43 = vsyncadd [#allocation9], %s42
      %s44 = sshll.u32 [#allocation10], 4
      %s45 = int_to_ptr.vmem [resolvable:$true] %s44
      %50 = dma.hbm_to_vmem [thread:$0]  %s3, 4096, %s45, [#allocation9], 256, 256, 16
    $region17: #{tpu_custom_call.1} parent=1 // pred_fallthru
      _
    // Predicated region
    $region18: #{tpu_custom_call.1} parent=1 // pred_check
      _
    $region19: #{tpu_custom_call.1} parent=1 // pred_check_branch
      %52 = sbr.rel (0) target = $region21
    $region20: #{tpu_custom_call.1} parent=1 // pred_region
      _
    $region21: #{tpu_custom_call.1} parent=1 // pred_fallthru
      _
    // Predicated region
    $region22: #{tpu_custom_call.1} parent=1 // pred_check
      _
    $region23: #{tpu_custom_call.1} parent=1 // pred_check_branch
      %54 = sbr.rel (0) target = $region25
    $region24: #{tpu_custom_call.1} parent=1 // pred_region
      %55 = dma.done [#allocation6], 512
    $region25: #{tpu_custom_call.1} parent=1 // pred_fallthru
      _
    // Predicated region
    $region26: #{tpu_custom_call.1} parent=1 // pred_check
      _
    $region27: #{tpu_custom_call.1} parent=1 // pred_check_branch
      %57 = sbr.rel (0) target = $region29
    $region28: #{tpu_custom_call.1} parent=1 // pred_region
      %58 = dma.done [#allocation9], 4096
    $region29: #{tpu_custom_call.1} parent=1 // pred_fallthru
      _
    // Predicated region
    $region30: #{tpu_custom_call.1} parent=1 // pred_check
      _
    $region31: #{tpu_custom_call.1} parent=1 // pred_check_branch
      %60 = sbr.rel (0) target = $region33
    $region32: #{tpu_custom_call.1} parent=1 // pred_region
      %61 = dma.done [#allocation9], 4096
    $region33: #{tpu_custom_call.1} parent=1 // pred_fallthru
      _
    %p63 = scmp.eq.s32.totalorder 0, 0
    // Predicated region
    $region34: #{tpu_custom_call.1} parent=1 // pred_check
      %p64 = pneg %p63
    $region35: #{tpu_custom_call.1} parent=1 // pred_check_branch
      %66 = sbr.rel (%p64) target = $region37
    $region36: #{tpu_custom_call.1} parent=1 // pred_region
      %67 = vst [vmem:[#allocation3] sm:$0xf] 0
      %68 = vst [vmem:[#allocation4] sm:$0xff] 0.0
    $region37: #{tpu_custom_call.1} parent=1 // pred_fallthru
      _
    %v69 = vld [vmem:[#allocation5] sm:$0xf]
    %v70 = vld [vmem:[#allocation5 + $0x4] sm:$0xf]
    %v71 = vld [vmem:[#allocation5 + $0x8] sm:$0xf]
    %v72 = vld [vmem:[#allocation5 + $0xc] sm:$0xf]
    %v73 = vld [vmem:[#allocation5 + $0x10] sm:$0xf]
    %v74 = vld [vmem:[#allocation5 + $0x14] sm:$0xf]
    %v75 = vld [vmem:[#allocation5 + $0x18] sm:$0xf]
    %v76 = vld [vmem:[#allocation5 + $0x1c] sm:$0xf]
    %v77 = vld [vmem:[#allocation8] sm:$0xff]
    %v78 = vld [vmem:[#allocation8 + $0x8] sm:$0xff]
    %v79 = vld [vmem:[#allocation8 + $0x10] sm:$0xff]
    %v80 = vld [vmem:[#allocation8 + $0x18] sm:$0xff]
    %v81 = vld [vmem:[#allocation8 + $0x20] sm:$0xff]
    %v82 = vld [vmem:[#allocation8 + $0x28] sm:$0xff]
    %v83 = vld [vmem:[#allocation8 + $0x30] sm:$0xff]
    %v84 = vld [vmem:[#allocation8 + $0x38] sm:$0xff]
    %v85 = vld [vmem:[#allocation8 + $0x40] sm:$0xff]
    %v86 = vld [vmem:[#allocation8 + $0x48] sm:$0xff]
    %v87 = vld [vmem:[#allocation8 + $0x50] sm:$0xff]
    %v88 = vld [vmem:[#allocation8 + $0x58] sm:$0xff]
    %v89 = vld [vmem:[#allocation8 + $0x60] sm:$0xff]
    %v90 = vld [vmem:[#allocation8 + $0x68] sm:$0xff]
    %v91 = vld [vmem:[#allocation8 + $0x70] sm:$0xff]
    %v92 = vld [vmem:[#allocation8 + $0x78] sm:$0xff]
    %v93 = vld [vmem:[#allocation8 + $0x80] sm:$0xff]
    %v94 = vld [vmem:[#allocation8 + $0x88] sm:$0xff]
    %v95 = vld [vmem:[#allocation8 + $0x90] sm:$0xff]
    %v96 = vld [vmem:[#allocation8 + $0x98] sm:$0xff]
    %v97 = vld [vmem:[#allocation8 + $0xa0] sm:$0xff]
    %v98 = vld [vmem:[#allocation8 + $0xa8] sm:$0xff]
    %v99 = vld [vmem:[#allocation8 + $0xb0] sm:$0xff]
    %v100 = vld [vmem:[#allocation8 + $0xb8] sm:$0xff]
    %v101 = vld [vmem:[#allocation8 + $0xc0] sm:$0xff]
    %v102 = vld [vmem:[#allocation8 + $0xc8] sm:$0xff]
    %v103 = vld [vmem:[#allocation8 + $0xd0] sm:$0xff]
    %v104 = vld [vmem:[#allocation8 + $0xd8] sm:$0xff]
    %v105 = vld [vmem:[#allocation8 + $0xe0] sm:$0xff]
    %v106 = vld [vmem:[#allocation8 + $0xe8] sm:$0xff]
    %v107 = vld [vmem:[#allocation8 + $0xf0] sm:$0xff]
    %v108 = vld [vmem:[#allocation8 + $0xf8] sm:$0xff]
    %v109 = vld [vmem:[%s4] sm:$0xf]
    %v111 = vlaneseq
    %v112 = vshrl.u32 %v111, 7
    %v113 = vsub.s32 0, %v112
    %v114 = vrot.slane %v109, %v113
    %v115 = vlaneseq
    %v116 = vshrl.u32 %v115, 7
    %v117 = vsub.s32 1, %v116
    %v118 = vrot.slane %v109, %v117
    %v119 = vlaneseq
    %v120 = vshrl.u32 %v119, 7
    %v121 = vsub.s32 2, %v120
    %v122 = vrot.slane %v109, %v121
    %v123 = vlaneseq
    %v124 = vshrl.u32 %v123, 7
    %v125 = vsub.s32 3, %v124
    %v126 = vrot.slane %v109, %v125
    %v139 = vunpack.c.l.b16 %v69
    %v140 = vunpack.c.l.b16 %v70
    %v141 = vunpack.c.l.b16 %v71
    %v142 = vunpack.c.l.b16 %v72
    %v143 = vunpack.c.l.b16 %v73
    %v144 = vunpack.c.l.b16 %v74
    %v145 = vunpack.c.l.b16 %v75
    %v146 = vunpack.c.l.b16 %v76
    %v147 = vpack.c.b16 %v140, %v139
    %v148 = vpack.c.b16 %v142, %v141
    %v149 = vpack.c.b16 %v144, %v143
    %v150 = vpack.c.b16 %v146, %v145
    %v187 = vunpack.c.l.b16 %v77
    %v188 = vunpack.c.h.b16 %v77
    %v189 = vunpack.c.l.b16 %v78
    %v190 = vunpack.c.h.b16 %v78
    %v191 = vunpack.c.l.b16 %v79
    %v192 = vunpack.c.h.b16 %v79
    %v193 = vunpack.c.l.b16 %v80
    %v194 = vunpack.c.h.b16 %v80
    %v195 = vunpack.c.l.b16 %v81
    %v196 = vunpack.c.h.b16 %v81
    %v197 = vunpack.c.l.b16 %v82
    %v198 = vunpack.c.h.b16 %v82
    %v199 = vunpack.c.l.b16 %v83
    %v200 = vunpack.c.h.b16 %v83
    %v201 = vunpack.c.l.b16 %v84
    %v202 = vunpack.c.h.b16 %v84
    %v203 = vunpack.c.l.b16 %v85
    %v204 = vunpack.c.h.b16 %v85
    %v205 = vunpack.c.l.b16 %v86
    %v206 = vunpack.c.h.b16 %v86
    %v207 = vunpack.c.l.b16 %v87
    %v208 = vunpack.c.h.b16 %v87
    %v209 = vunpack.c.l.b16 %v88
    %v210 = vunpack.c.h.b16 %v88
    %v211 = vunpack.c.l.b16 %v89
    %v212 = vunpack.c.h.b16 %v89
    %v213 = vunpack.c.l.b16 %v90
    %v214 = vunpack.c.h.b16 %v90
    %v215 = vunpack.c.l.b16 %v91
    %v216 = vunpack.c.h.b16 %v91
    %v217 = vunpack.c.l.b16 %v92
    %v218 = vunpack.c.h.b16 %v92
    %v219 = vunpack.c.l.b16 %v93
    %v220 = vunpack.c.h.b16 %v93
    %v221 = vunpack.c.l.b16 %v94
    %v222 = vunpack.c.h.b16 %v94
    %v223 = vunpack.c.l.b16 %v95
    %v224 = vunpack.c.h.b16 %v95
    %v225 = vunpack.c.l.b16 %v96
    %v226 = vunpack.c.h.b16 %v96
    %v227 = vunpack.c.l.b16 %v97
    %v228 = vunpack.c.h.b16 %v97
    %v229 = vunpack.c.l.b16 %v98
    %v230 = vunpack.c.h.b16 %v98
    %v231 = vunpack.c.l.b16 %v99
    %v232 = vunpack.c.h.b16 %v99
    %v233 = vunpack.c.l.b16 %v100
    %v234 = vunpack.c.h.b16 %v100
    %v235 = vunpack.c.l.b16 %v101
    %v236 = vunpack.c.h.b16 %v101
    %v237 = vunpack.c.l.b16 %v102
    %v238 = vunpack.c.h.b16 %v102
    %v239 = vunpack.c.l.b16 %v103
    %v240 = vunpack.c.h.b16 %v103
    %v241 = vunpack.c.l.b16 %v104
    %v242 = vunpack.c.h.b16 %v104
    %v243 = vunpack.c.l.b16 %v105
    %v244 = vunpack.c.h.b16 %v105
    %v245 = vunpack.c.l.b16 %v106
    %v246 = vunpack.c.h.b16 %v106
    %v247 = vunpack.c.l.b16 %v107
    %v248 = vunpack.c.h.b16 %v107
    %v249 = vunpack.c.l.b16 %v108
    %v250 = vunpack.c.h.b16 %v108
    %v251 = vpack.c.b16 %v191, %v187
    %v252 = vpack.c.b16 %v192, %v188
    %v253 = vpack.c.b16 %v193, %v189
    %v254 = vpack.c.b16 %v194, %v190
    %v255 = vpack.c.b16 %v199, %v195
    %v256 = vpack.c.b16 %v200, %v196
    %v257 = vpack.c.b16 %v201, %v197
    %v258 = vpack.c.b16 %v202, %v198
    %v259 = vpack.c.b16 %v207, %v203
    %v260 = vpack.c.b16 %v208, %v204
    %v261 = vpack.c.b16 %v209, %v205
    %v262 = vpack.c.b16 %v210, %v206
    %v263 = vpack.c.b16 %v215, %v211
    %v264 = vpack.c.b16 %v216, %v212
    %v265 = vpack.c.b16 %v217, %v213
    %v266 = vpack.c.b16 %v218, %v214
    %v267 = vpack.c.b16 %v223, %v219
    %v268 = vpack.c.b16 %v224, %v220
    %v269 = vpack.c.b16 %v225, %v221
    %v270 = vpack.c.b16 %v226, %v222
    %v271 = vpack.c.b16 %v231, %v227
    %v272 = vpack.c.b16 %v232, %v228
    %v273 = vpack.c.b16 %v233, %v229
    %v274 = vpack.c.b16 %v234, %v230
    %v275 = vpack.c.b16 %v239, %v235
    %v276 = vpack.c.b16 %v240, %v236
    %v277 = vpack.c.b16 %v241, %v237
    %v278 = vpack.c.b16 %v242, %v238
    %v279 = vpack.c.b16 %v247, %v243
    %v280 = vpack.c.b16 %v248, %v244
    %v281 = vpack.c.b16 %v249, %v245
    %v282 = vpack.c.b16 %v250, %v246
    %315 = vmatprep.subr.bf16.mxu0 %v252
    %316 = vmatpush1.bf16.msra.mxu0 %v251
    %317 = vmatprep.subr.bf16.mxu0 %v256
    %318 = vmatpush1.bf16.msra.mxu0 %v255
    %319 = vmatprep.subr.bf16.mxu0 %v260
    %320 = vmatpush1.bf16.msra.mxu0 %v259
    %321 = vmatprep.subr.bf16.mxu0 %v264
    %322 = vmatpush1.bf16.msra.mxu0 %v263
    %323 = vmatprep.subr.bf16.mxu0 %v268
    %324 = vmatpush1.bf16.msra.mxu0 %v267
    %325 = vmatprep.subr.bf16.mxu0 %v272
    %326 = vmatpush1.bf16.msra.mxu0 %v271
    %327 = vmatprep.subr.bf16.mxu0 %v276
    %328 = vmatpush1.bf16.msra.mxu0 %v275
    %329 = vmatprep.subr.bf16.mxu0 %v280
    %330 = vmatpush1.bf16.msra.mxu0 %v279
    %331 = vmatprep.subr.bf16.mxu0 0
    %332 = vmatpush1.bf16.msra.mxu0 0
    %333 = vmatprep.subr.bf16.mxu0 0
    %334 = vmatpush1.bf16.msra.mxu0 0
    %335 = vmatprep.subr.bf16.mxu0 0
    %336 = vmatpush1.bf16.msra.mxu0 0
    %337 = vmatprep.subr.bf16.mxu0 0
    %338 = vmatpush1.bf16.msra.mxu0 0
    %339 = vmatprep.subr.bf16.mxu0 0
    %340 = vmatpush1.bf16.msra.mxu0 0
    %341 = vmatprep.subr.bf16.mxu0 0
    %342 = vmatpush1.bf16.msra.mxu0 0
    %343 = vmatprep.subr.bf16.mxu0 0
    %344 = vmatpush1.bf16.msra.mxu0 0
    %345 = vmatprep.subr.bf16.mxu0 0
    %346 = vmatpush1.bf16.msra.mxu0 0
    %347 = vmatprep.mubr.bf16.mxu0 0
    %348 = vmatmul.mubr.bf16.gmra.mrb[0].mxu0 %v147
    %v349 = vpop.f32.mrb[0].mxu0
    %v350 = vadd.f32 %v114, %v349
    %v351 = vpop.f32.mrb[0].mxu0
    %v352 = vadd.f32 %v118, %v351
    %v353 = vpop.f32.mrb[0].mxu0
    %v354 = vadd.f32 %v114, %v353
    %v355 = vpop.f32.mrb[0].mxu0
    %v356 = vadd.f32 %v118, %v355
    %357 = vmatprep.mubr.bf16.mxu0 0
    %358 = vmatmul.mubr.bf16.gmra.mrb[0].mxu0 %v148
    %v359 = vpop.f32.mrb[0].mxu0
    %v360 = vadd.f32 %v114, %v359
    %v361 = vpop.f32.mrb[0].mxu0
    %v362 = vadd.f32 %v118, %v361
    %v363 = vpop.f32.mrb[0].mxu0
    %v364 = vadd.f32 %v114, %v363
    %v365 = vpop.f32.mrb[0].mxu0
    %v366 = vadd.f32 %v118, %v365
    %367 = vmatprep.mubr.bf16.mxu0 0
    %368 = vmatmul.mubr.bf16.gmra.mrb[0].mxu0 %v149
    %v369 = vpop.f32.mrb[0].mxu0
    %v370 = vadd.f32 %v114, %v369
    %v371 = vpop.f32.mrb[0].mxu0
    %v372 = vadd.f32 %v118, %v371
    %v373 = vpop.f32.mrb[0].mxu0
    %v374 = vadd.f32 %v114, %v373
    %v375 = vpop.f32.mrb[0].mxu0
    %v376 = vadd.f32 %v118, %v375
    %377 = vmatprep.mubr.bf16.mxu0 0
    %378 = vmatmul.mubr.bf16.gmra.mrb[0].mxu0 %v150
    %v379 = vpop.f32.mrb[0].mxu0
    %v380 = vadd.f32 %v114, %v379
    %v381 = vpop.f32.mrb[0].mxu0
    %v382 = vadd.f32 %v118, %v381
    %v383 = vpop.f32.mrb[0].mxu0
    %v384 = vadd.f32 %v114, %v383
    %v385 = vpop.f32.mrb[0].mxu0
    %v386 = vadd.f32 %v118, %v385
    %387 = vdwg.mxu0
    %388 = vmatprep.subr.bf16.mxu0 %v254
    %389 = vmatpush1.bf16.msra.mxu0 %v253
    %390 = vmatprep.subr.bf16.mxu0 %v258
    %391 = vmatpush1.bf16.msra.mxu0 %v257
    %392 = vmatprep.subr.bf16.mxu0 %v262
    %393 = vmatpush1.bf16.msra.mxu0 %v261
    %394 = vmatprep.subr.bf16.mxu0 %v266
    %395 = vmatpush1.bf16.msra.mxu0 %v265
    %396 = vmatprep.subr.bf16.mxu0 %v270
    %397 = vmatpush1.bf16.msra.mxu0 %v269
    %398 = vmatprep.subr.bf16.mxu0 %v274
    %399 = vmatpush1.bf16.msra.mxu0 %v273
    %400 = vmatprep.subr.bf16.mxu0 %v278
    %401 = vmatpush1.bf16.msra.mxu0 %v277
    %402 = vmatprep.subr.bf16.mxu0 %v282
    %403 = vmatpush1.bf16.msra.mxu0 %v281
    %404 = vmatprep.subr.bf16.mxu0 0
    %405 = vmatpush1.bf16.msra.mxu0 0
    %406 = vmatprep.subr.bf16.mxu0 0
    %407 = vmatpush1.bf16.msra.mxu0 0
    %408 = vmatprep.subr.bf16.mxu0 0
    %409 = vmatpush1.bf16.msra.mxu0 0
    %410 = vmatprep.subr.bf16.mxu0 0
    %411 = vmatpush1.bf16.msra.mxu0 0
    %412 = vmatprep.subr.bf16.mxu0 0
    %413 = vmatpush1.bf16.msra.mxu0 0
    %414 = vmatprep.subr.bf16.mxu0 0
    %415 = vmatpush1.bf16.msra.mxu0 0
    %416 = vmatprep.subr.bf16.mxu0 0
    %417 = vmatpush1.bf16.msra.mxu0 0
    %418 = vmatprep.subr.bf16.mxu0 0
    %419 = vmatpush1.bf16.msra.mxu0 0
    %420 = vmatprep.mubr.bf16.mxu0 0
    %421 = vmatmul.mubr.bf16.gmra.mrb[0].mxu0 %v147
    %v422 = vpop.f32.mrb[0].mxu0
    %v423 = vadd.f32 %v122, %v422
    %v424 = vpop.f32.mrb[0].mxu0
    %v425 = vadd.f32 %v126, %v424
    %v426 = vpop.f32.mrb[0].mxu0
    %v427 = vadd.f32 %v122, %v426
    %v428 = vpop.f32.mrb[0].mxu0
    %v429 = vadd.f32 %v126, %v428
    %430 = vmatprep.mubr.bf16.mxu0 0
    %431 = vmatmul.mubr.bf16.gmra.mrb[0].mxu0 %v148
    %v432 = vpop.f32.mrb[0].mxu0
    %v433 = vadd.f32 %v122, %v432
    %v434 = vpop.f32.mrb[0].mxu0
    %v435 = vadd.f32 %v126, %v434
    %v436 = vpop.f32.mrb[0].mxu0
    %v437 = vadd.f32 %v122, %v436
    %v438 = vpop.f32.mrb[0].mxu0
    %v439 = vadd.f32 %v126, %v438
    %440 = vmatprep.mubr.bf16.mxu0 0
    %441 = vmatmul.mubr.bf16.gmra.mrb[0].mxu0 %v149
    %v442 = vpop.f32.mrb[0].mxu0
    %v443 = vadd.f32 %v122, %v442
    %v444 = vpop.f32.mrb[0].mxu0
    %v445 = vadd.f32 %v126, %v444
    %v446 = vpop.f32.mrb[0].mxu0
    %v447 = vadd.f32 %v122, %v446
    %v448 = vpop.f32.mrb[0].mxu0
    %v449 = vadd.f32 %v126, %v448
    %450 = vmatprep.mubr.bf16.mxu0 0
    %451 = vmatmul.mubr.bf16.gmra.mrb[0].mxu0 %v150
    %v452 = vpop.f32.mrb[0].mxu0
    %v453 = vadd.f32 %v122, %v452
    %v454 = vpop.f32.mrb[0].mxu0
    %v455 = vadd.f32 %v126, %v454
    %v456 = vpop.f32.mrb[0].mxu0
    %v457 = vadd.f32 %v122, %v456
    %v458 = vpop.f32.mrb[0].mxu0
    %v459 = vadd.f32 %v126, %v458
    %460 = vdwg.mxu0
    %v461 = vpack.c.bf16 %v350, %v350
    %v462 = vpack.c.bf16 %v352, %v352
    %v463 = vpack.c.bf16 %v423, %v423
    %v464 = vpack.c.bf16 %v425, %v425
    %v465 = vpack.c.bf16 %v354, %v354
    %v466 = vpack.c.bf16 %v356, %v356
    %v467 = vpack.c.bf16 %v427, %v427
    %v468 = vpack.c.bf16 %v429, %v429
    %v469 = vpack.c.bf16 %v360, %v360
    %v470 = vpack.c.bf16 %v362, %v362
    %v471 = vpack.c.bf16 %v433, %v433
    %v472 = vpack.c.bf16 %v435, %v435
    %v473 = vpack.c.bf16 %v364, %v364
    %v474 = vpack.c.bf16 %v366, %v366
    %v475 = vpack.c.bf16 %v437, %v437
    %v476 = vpack.c.bf16 %v439, %v439
    %v477 = vpack.c.bf16 %v370, %v370
    %v478 = vpack.c.bf16 %v372, %v372
    %v479 = vpack.c.bf16 %v443, %v443
    %v480 = vpack.c.bf16 %v445, %v445
    %v481 = vpack.c.bf16 %v374, %v374
    %v482 = vpack.c.bf16 %v376, %v376
    %v483 = vpack.c.bf16 %v447, %v447
    %v484 = vpack.c.bf16 %v449, %v449
    %v485 = vpack.c.bf16 %v380, %v380
    %v486 = vpack.c.bf16 %v382, %v382
    %v487 = vpack.c.bf16 %v453, %v453
    %v488 = vpack.c.bf16 %v455, %v455
    %v489 = vpack.c.bf16 %v384, %v384
    %v490 = vpack.c.bf16 %v386, %v386
    %v491 = vpack.c.bf16 %v457, %v457
    %v492 = vpack.c.bf16 %v459, %v459
    %v525 = vunpack.c.l.b16 %v461
    %v526 = vunpack.c.l.b16 %v462
    %v527 = vunpack.c.l.b16 %v463
    %v528 = vunpack.c.l.b16 %v464
    %v529 = vunpack.c.l.b16 %v465
    %v530 = vunpack.c.l.b16 %v466
    %v531 = vunpack.c.l.b16 %v467
    %v532 = vunpack.c.l.b16 %v468
    %v533 = vunpack.c.l.b16 %v469
    %v534 = vunpack.c.l.b16 %v470
    %v535 = vunpack.c.l.b16 %v471
    %v536 = vunpack.c.l.b16 %v472
    %v537 = vunpack.c.l.b16 %v473
    %v538 = vunpack.c.l.b16 %v474
    %v539 = vunpack.c.l.b16 %v475
    %v540 = vunpack.c.l.b16 %v476
    %v541 = vunpack.c.l.b16 %v477
    %v542 = vunpack.c.l.b16 %v478
    %v543 = vunpack.c.l.b16 %v479
    %v544 = vunpack.c.l.b16 %v480
    %v545 = vunpack.c.l.b16 %v481
    %v546 = vunpack.c.l.b16 %v482
    %v547 = vunpack.c.l.b16 %v483
    %v548 = vunpack.c.l.b16 %v484
    %v549 = vunpack.c.l.b16 %v485
    %v550 = vunpack.c.l.b16 %v486
    %v551 = vunpack.c.l.b16 %v487
    %v552 = vunpack.c.l.b16 %v488
    %v553 = vunpack.c.l.b16 %v489
    %v554 = vunpack.c.l.b16 %v490
    %v555 = vunpack.c.l.b16 %v491
    %v556 = vunpack.c.l.b16 %v492
    %v557 = vpack.c.b16 %v526, %v525
    %v558 = vpack.c.b16 %v528, %v527
    %v559 = vpack.c.b16 %v530, %v529
    %v560 = vpack.c.b16 %v532, %v531
    %v561 = vpack.c.b16 %v534, %v533
    %v562 = vpack.c.b16 %v536, %v535
    %v563 = vpack.c.b16 %v538, %v537
    %v564 = vpack.c.b16 %v540, %v539
    %v565 = vpack.c.b16 %v542, %v541
    %v566 = vpack.c.b16 %v544, %v543
    %v567 = vpack.c.b16 %v546, %v545
    %v568 = vpack.c.b16 %v548, %v547
    %v569 = vpack.c.b16 %v550, %v549
    %v570 = vpack.c.b16 %v552, %v551
    %v571 = vpack.c.b16 %v554, %v553
    %v572 = vpack.c.b16 %v556, %v555
    %589 = vst [vmem:[#allocation2] sm:$0xff] %v557
    %590 = vst [vmem:[#allocation2 + $0x8] sm:$0xff] %v558
    %591 = vst [vmem:[#allocation2 + $0x10] sm:$0xff] %v559
    %592 = vst [vmem:[#allocation2 + $0x18] sm:$0xff] %v560
    %593 = vst [vmem:[#allocation2 + $0x20] sm:$0xff] %v561
    %594 = vst [vmem:[#allocation2 + $0x28] sm:$0xff] %v562
    %595 = vst [vmem:[#allocation2 + $0x30] sm:$0xff] %v563
    %596 = vst [vmem:[#allocation2 + $0x38] sm:$0xff] %v564
    %597 = vst [vmem:[#allocation2 + $0x40] sm:$0xff] %v565
    %598 = vst [vmem:[#allocation2 + $0x48] sm:$0xff] %v566
    %599 = vst [vmem:[#allocation2 + $0x50] sm:$0xff] %v567
    %600 = vst [vmem:[#allocation2 + $0x58] sm:$0xff] %v568
    %601 = vst [vmem:[#allocation2 + $0x60] sm:$0xff] %v569
    %602 = vst [vmem:[#allocation2 + $0x68] sm:$0xff] %v570
    %603 = vst [vmem:[#allocation2 + $0x70] sm:$0xff] %v571
    %604 = vst [vmem:[#allocation2 + $0x78] sm:$0xff] %v572
    %v605 = vld [vmem:[#allocation3] sm:$0xf]
    %v606 = vld [vmem:[#allocation4] sm:$0xff]
    %v607 = vld [vmem:[#allocation10] sm:$0xff]
    %v608 = vld [vmem:[#allocation10 + $0x8] sm:$0xff]
    %v609 = vld [vmem:[#allocation10 + $0x10] sm:$0xff]
    %v610 = vld [vmem:[#allocation10 + $0x18] sm:$0xff]
    %v611 = vld [vmem:[#allocation10 + $0x20] sm:$0xff]
    %v612 = vld [vmem:[#allocation10 + $0x28] sm:$0xff]
    %v613 = vld [vmem:[#allocation10 + $0x30] sm:$0xff]
    %v614 = vld [vmem:[#allocation10 + $0x38] sm:$0xff]
    %v615 = vld [vmem:[#allocation10 + $0x40] sm:$0xff]
    %v616 = vld [vmem:[#allocation10 + $0x48] sm:$0xff]
    %v617 = vld [vmem:[#allocation10 + $0x50] sm:$0xff]
    %v618 = vld [vmem:[#allocation10 + $0x58] sm:$0xff]
    %v619 = vld [vmem:[#allocation10 + $0x60] sm:$0xff]
    %v620 = vld [vmem:[#allocation10 + $0x68] sm:$0xff]
    %v621 = vld [vmem:[#allocation10 + $0x70] sm:$0xff]
    %v622 = vld [vmem:[#allocation10 + $0x78] sm:$0xff]
    %v623 = vld [vmem:[#allocation10 + $0x80] sm:$0xff]
    %v624 = vld [vmem:[#allocation10 + $0x88] sm:$0xff]
    %v625 = vld [vmem:[#allocation10 + $0x90] sm:$0xff]
    %v626 = vld [vmem:[#allocation10 + $0x98] sm:$0xff]
    %v627 = vld [vmem:[#allocation10 + $0xa0] sm:$0xff]
    %v628 = vld [vmem:[#allocation10 + $0xa8] sm:$0xff]
    %v629 = vld [vmem:[#allocation10 + $0xb0] sm:$0xff]
    %v630 = vld [vmem:[#allocation10 + $0xb8] sm:$0xff]
    %v631 = vld [vmem:[#allocation10 + $0xc0] sm:$0xff]
    %v632 = vld [vmem:[#allocation10 + $0xc8] sm:$0xff]
    %v633 = vld [vmem:[#allocation10 + $0xd0] sm:$0xff]
    %v634 = vld [vmem:[#allocation10 + $0xd8] sm:$0xff]
    %v635 = vld [vmem:[#allocation10 + $0xe0] sm:$0xff]
    %v636 = vld [vmem:[#allocation10 + $0xe8] sm:$0xff]
    %v637 = vld [vmem:[#allocation10 + $0xf0] sm:$0xff]
    %v638 = vld [vmem:[#allocation10 + $0xf8] sm:$0xff]
    %v639 = vld [vmem:[#allocation2] sm:$0xff]
    %v640 = vld [vmem:[#allocation2 + $0x8] sm:$0xff]
    %v641 = vunpack.c.l.bf16 %v639
    %v642 = vunpack.c.h.bf16 %v639
    %v643 = vunpack.c.l.bf16 %v640
    %v644 = vunpack.c.h.bf16 %v640
    %v677 = vunpack.c.l.b16 %v607
    %v678 = vunpack.c.h.b16 %v607
    %v679 = vunpack.c.l.b16 %v608
    %v680 = vunpack.c.h.b16 %v608
    %v681 = vunpack.c.l.b16 %v609
    %v682 = vunpack.c.h.b16 %v609
    %v683 = vunpack.c.l.b16 %v610
    %v684 = vunpack.c.h.b16 %v610
    %v685 = vunpack.c.l.b16 %v611
    %v686 = vunpack.c.h.b16 %v611
    %v687 = vunpack.c.l.b16 %v612
    %v688 = vunpack.c.h.b16 %v612
    %v689 = vunpack.c.l.b16 %v613
    %v690 = vunpack.c.h.b16 %v613
    %v691 = vunpack.c.l.b16 %v614
    %v692 = vunpack.c.h.b16 %v614
    %v693 = vunpack.c.l.b16 %v615
    %v694 = vunpack.c.h.b16 %v615
    %v695 = vunpack.c.l.b16 %v616
    %v696 = vunpack.c.h.b16 %v616
    %v697 = vunpack.c.l.b16 %v617
    %v698 = vunpack.c.h.b16 %v617
    %v699 = vunpack.c.l.b16 %v618
    %v700 = vunpack.c.h.b16 %v618
    %v701 = vunpack.c.l.b16 %v619
    %v702 = vunpack.c.h.b16 %v619
    %v703 = vunpack.c.l.b16 %v620
    %v704 = vunpack.c.h.b16 %v620
    %v705 = vunpack.c.l.b16 %v621
    %v706 = vunpack.c.h.b16 %v621
    %v707 = vunpack.c.l.b16 %v622
    %v708 = vunpack.c.h.b16 %v622
    %v709 = vunpack.c.l.b16 %v623
    %v710 = vunpack.c.h.b16 %v623
    %v711 = vunpack.c.l.b16 %v624
    %v712 = vunpack.c.h.b16 %v624
    %v713 = vunpack.c.l.b16 %v625
    %v714 = vunpack.c.h.b16 %v625
    %v715 = vunpack.c.l.b16 %v626
    %v716 = vunpack.c.h.b16 %v626
    %v717 = vunpack.c.l.b16 %v627
    %v718 = vunpack.c.h.b16 %v627
    %v719 = vunpack.c.l.b16 %v628
    %v720 = vunpack.c.h.b16 %v628
    %v721 = vunpack.c.l.b16 %v629
    %v722 = vunpack.c.h.b16 %v629
    %v723 = vunpack.c.l.b16 %v630
    %v724 = vunpack.c.h.b16 %v630
    %v725 = vunpack.c.l.b16 %v631
    %v726 = vunpack.c.h.b16 %v631
    %v727 = vunpack.c.l.b16 %v632
    %v728 = vunpack.c.h.b16 %v632
    %v729 = vunpack.c.l.b16 %v633
    %v730 = vunpack.c.h.b16 %v633
    %v731 = vunpack.c.l.b16 %v634
    %v732 = vunpack.c.h.b16 %v634
    %v733 = vunpack.c.l.b16 %v635
    %v734 = vunpack.c.h.b16 %v635
    %v735 = vunpack.c.l.b16 %v636
    %v736 = vunpack.c.h.b16 %v636
    %v737 = vunpack.c.l.b16 %v637
    %v738 = vunpack.c.h.b16 %v637
    %v739 = vunpack.c.l.b16 %v638
    %v740 = vunpack.c.h.b16 %v638
    %v741 = vpack.c.b16 %v681, %v677
    %v742 = vpack.c.b16 %v682, %v678
    %v743 = vpack.c.b16 %v683, %v679
    %v744 = vpack.c.b16 %v684, %v680
    %v745 = vpack.c.b16 %v689, %v685
    %v746 = vpack.c.b16 %v690, %v686
    %v747 = vpack.c.b16 %v691, %v687
    %v748 = vpack.c.b16 %v692, %v688
    %v749 = vpack.c.b16 %v697, %v693
    %v750 = vpack.c.b16 %v698, %v694
    %v751 = vpack.c.b16 %v699, %v695
    %v752 = vpack.c.b16 %v700, %v696
    %v753 = vpack.c.b16 %v705, %v701
    %v754 = vpack.c.b16 %v706, %v702
    %v755 = vpack.c.b16 %v707, %v703
    %v756 = vpack.c.b16 %v708, %v704
    %v757 = vpack.c.b16 %v713, %v709
    %v758 = vpack.c.b16 %v714, %v710
    %v759 = vpack.c.b16 %v715, %v711
    %v760 = vpack.c.b16 %v716, %v712
    %v761 = vpack.c.b16 %v721, %v717
    %v762 = vpack.c.b16 %v722, %v718
    %v763 = vpack.c.b16 %v723, %v719
    %v764 = vpack.c.b16 %v724, %v720
    %v765 = vpack.c.b16 %v729, %v725
    %v766 = vpack.c.b16 %v730, %v726
    %v767 = vpack.c.b16 %v731, %v727
    %v768 = vpack.c.b16 %v732, %v728
    %v769 = vpack.c.b16 %v737, %v733
    %v770 = vpack.c.b16 %v738, %v734
    %v771 = vpack.c.b16 %v739, %v735
    %v772 = vpack.c.b16 %v740, %v736
    %805 = vmatprep.subr.bf16.mxu0 %v742
    %806 = vmatpush1.bf16.msra.mxu0 %v741
    %807 = vmatprep.subr.bf16.mxu0 %v746
    %808 = vmatpush1.bf16.msra.mxu0 %v745
    %809 = vmatprep.subr.bf16.mxu0 %v750
    %810 = vmatpush1.bf16.msra.mxu0 %v749
    %811 = vmatprep.subr.bf16.mxu0 %v754
    %812 = vmatpush1.bf16.msra.mxu0 %v753
    %813 = vmatprep.subr.bf16.mxu0 %v758
    %814 = vmatpush1.bf16.msra.mxu0 %v757
    %815 = vmatprep.subr.bf16.mxu0 %v762
    %816 = vmatpush1.bf16.msra.mxu0 %v761
    %817 = vmatprep.subr.bf16.mxu0 %v766
    %818 = vmatpush1.bf16.msra.mxu0 %v765
    %819 = vmatprep.subr.bf16.mxu0 %v770
    %820 = vmatpush1.bf16.msra.mxu0 %v769
    %821 = vmatprep.subr.bf16.mxu0 0
    %822 = vmatpush1.bf16.msra.mxu0 0
    %823 = vmatprep.subr.bf16.mxu0 0
    %824 = vmatpush1.bf16.msra.mxu0 0
    %825 = vmatprep.subr.bf16.mxu0 0
    %826 = vmatpush1.bf16.msra.mxu0 0
    %827 = vmatprep.subr.bf16.mxu0 0
    %828 = vmatpush1.bf16.msra.mxu0 0
    %829 = vmatprep.subr.bf16.mxu0 0
    %830 = vmatpush1.bf16.msra.mxu0 0
    %831 = vmatprep.subr.bf16.mxu0 0
    %832 = vmatpush1.bf16.msra.mxu0 0
    %833 = vmatprep.subr.bf16.mxu0 0
    %834 = vmatpush1.bf16.msra.mxu0 0
    %835 = vmatprep.subr.bf16.mxu0 0
    %836 = vmatpush1.bf16.msra.mxu0 0
    %837 = vmatprep.mubr.bf16.mxu0 0
    %838 = vmatmul.mubr.bf16.gmra.mrb[0].mxu0 %v605
    %v839 = vpop.f32.mrb[0].mxu0
    %v840 = vadd.f32 %v641, %v839
    %v841 = vpop.f32.mrb[0].mxu0
    %v842 = vadd.f32 %v642, %v841
    %v843 = vpop.f32.mrb[0].mxu0
    %v844 = vpop.f32.mrb[0].mxu0
    %845 = vdwg.mxu0
    %846 = vmatprep.subr.bf16.mxu0 %v744
    %847 = vmatpush1.bf16.msra.mxu0 %v743
    %848 = vmatprep.subr.bf16.mxu0 %v748
    %849 = vmatpush1.bf16.msra.mxu0 %v747
    %850 = vmatprep.subr.bf16.mxu0 %v752
    %851 = vmatpush1.bf16.msra.mxu0 %v751
    %852 = vmatprep.subr.bf16.mxu0 %v756
    %853 = vmatpush1.bf16.msra.mxu0 %v755
    %854 = vmatprep.subr.bf16.mxu0 %v760
    %855 = vmatpush1.bf16.msra.mxu0 %v759
    %856 = vmatprep.subr.bf16.mxu0 %v764
    %857 = vmatpush1.bf16.msra.mxu0 %v763
    %858 = vmatprep.subr.bf16.mxu0 %v768
    %859 = vmatpush1.bf16.msra.mxu0 %v767
    %860 = vmatprep.subr.bf16.mxu0 %v772
    %861 = vmatpush1.bf16.msra.mxu0 %v771
    %862 = vmatprep.subr.bf16.mxu0 0
    %863 = vmatpush1.bf16.msra.mxu0 0
    %864 = vmatprep.subr.bf16.mxu0 0
    %865 = vmatpush1.bf16.msra.mxu0 0
    %866 = vmatprep.subr.bf16.mxu0 0
    %867 = vmatpush1.bf16.msra.mxu0 0
    %868 = vmatprep.subr.bf16.mxu0 0
    %869 = vmatpush1.bf16.msra.mxu0 0
    %870 = vmatprep.subr.bf16.mxu0 0
    %871 = vmatpush1.bf16.msra.mxu0 0
    %872 = vmatprep.subr.bf16.mxu0 0
    %873 = vmatpush1.bf16.msra.mxu0 0
    %874 = vmatprep.subr.bf16.mxu0 0
    %875 = vmatpush1.bf16.msra.mxu0 0
    %876 = vmatprep.subr.bf16.mxu0 0
    %877 = vmatpush1.bf16.msra.mxu0 0
    %878 = vmatprep.mubr.bf16.mxu0 0
    %879 = vmatmul.mubr.bf16.gmra.mrb[0].mxu0 %v605
    %v880 = vpop.f32.mrb[0].mxu0
    %v881 = vadd.f32 %v643, %v880
    %v882 = vpop.f32.mrb[0].mxu0
    %v883 = vadd.f32 %v644, %v882
    %v884 = vpop.f32.mrb[0].mxu0
    %v885 = vpop.f32.mrb[0].mxu0
    %886 = vdwg.mxu0
    %v887 = vxor.u32 %v840, 2147483648
    %v888 = vmul.f32 %v887, 1.442695
    %v889 = vpow.pop %v888
    %v890 = vadd.f32 %v889, 1.0
    %v891 = vrcp.pop %v890
    %v892 = vmul.f32 1.0, %v891
    %v893 = vxor.u32 %v842, 2147483648
    %v894 = vmul.f32 %v893, 1.442695
    %v895 = vpow.pop %v894
    %v896 = vadd.f32 %v895, 1.0
    %v897 = vrcp.pop %v896
    %v898 = vmul.f32 1.0, %v897
    %v899 = vtanh.pop %v881
    %v900 = vxor.u32 %v883, 2147483648
    %v901 = vmul.f32 %v900, 1.442695
    %v902 = vpow.pop %v901
    %v903 = vadd.f32 %v902, 1.0
    %v904 = vrcp.pop %v903
    %v905 = vmul.f32 1.0, %v904
    %v906 = vmul.f32 %v898, %v606
    %v907 = vmul.f32 %v892, %v899
    %v908 = vadd.f32 %v906, %v907
    %v909 = vtanh.pop %v908
    %v910 = vmul.f32 %v905, %v909
    %v911 = vpack.c.bf16 %v910, %v910
    %912 = vst [vmem:[#allocation11] sm:$0xf] %v911
    %v913 = vld [vmem:[#allocation10] sm:$0xff]
    %v914 = vld [vmem:[#allocation10 + $0x8] sm:$0xff]
    %v915 = vld [vmem:[#allocation10 + $0x10] sm:$0xff]
    %v916 = vld [vmem:[#allocation10 + $0x18] sm:$0xff]
    %v917 = vld [vmem:[#allocation10 + $0x20] sm:$0xff]
    %v918 = vld [vmem:[#allocation10 + $0x28] sm:$0xff]
    %v919 = vld [vmem:[#allocation10 + $0x30] sm:$0xff]
    %v920 = vld [vmem:[#allocation10 + $0x38] sm:$0xff]
    %v921 = vld [vmem:[#allocation10 + $0x40] sm:$0xff]
    %v922 = vld [vmem:[#allocation10 + $0x48] sm:$0xff]
    %v923 = vld [vmem:[#allocation10 + $0x50] sm:$0xff]
    %v924 = vld [vmem:[#allocation10 + $0x58] sm:$0xff]
    %v925 = vld [vmem:[#allocation10 + $0x60] sm:$0xff]
    %v926 = vld [vmem:[#allocation10 + $0x68] sm:$0xff]
    %v927 = vld [vmem:[#allocation10 + $0x70] sm:$0xff]
    %v928 = vld [vmem:[#allocation10 + $0x78] sm:$0xff]
    %v929 = vld [vmem:[#allocation10 + $0x80] sm:$0xff]
    %v930 = vld [vmem:[#allocation10 + $0x88] sm:$0xff]
    %v931 = vld [vmem:[#allocation10 + $0x90] sm:$0xff]
    %v932 = vld [vmem:[#allocation10 + $0x98] sm:$0xff]
    %v933 = vld [vmem:[#allocation10 + $0xa0] sm:$0xff]
    %v934 = vld [vmem:[#allocation10 + $0xa8] sm:$0xff]
    %v935 = vld [vmem:[#allocation10 + $0xb0] sm:$0xff]
    %v936 = vld [vmem:[#allocation10 + $0xb8] sm:$0xff]
    %v937 = vld [vmem:[#allocation10 + $0xc0] sm:$0xff]
    %v938 = vld [vmem:[#allocation10 + $0xc8] sm:$0xff]
    %v939 = vld [vmem:[#allocation10 + $0xd0] sm:$0xff]
    %v940 = vld [vmem:[#allocation10 + $0xd8] sm:$0xff]
    %v941 = vld [vmem:[#allocation10 + $0xe0] sm:$0xff]
    %v942 = vld [vmem:[#allocation10 + $0xe8] sm:$0xff]
    %v943 = vld [vmem:[#allocation10 + $0xf0] sm:$0xff]
    %v944 = vld [vmem:[#allocation10 + $0xf8] sm:$0xff]
    %s945 = scalar_lea.vmem [#allocation2], 16
    %v946 = vld [vmem:[%s945] sm:$0xff]
    %v947 = vld [vmem:[%s945 + $0x8] sm:$0xff]
    %v948 = vunpack.c.l.bf16 %v946
    %v949 = vunpack.c.h.bf16 %v946
    %v950 = vunpack.c.l.bf16 %v947
    %v951 = vunpack.c.h.bf16 %v947
    %v984 = vunpack.c.l.b16 %v913
    %v985 = vunpack.c.h.b16 %v913
    %v986 = vunpack.c.l.b16 %v914
    %v987 = vunpack.c.h.b16 %v914
    %v988 = vunpack.c.l.b16 %v915
    %v989 = vunpack.c.h.b16 %v915
    %v990 = vunpack.c.l.b16 %v916
    %v991 = vunpack.c.h.b16 %v916
    %v992 = vunpack.c.l.b16 %v917
    %v993 = vunpack.c.h.b16 %v917
    %v994 = vunpack.c.l.b16 %v918
    %v995 = vunpack.c.h.b16 %v918
    %v996 = vunpack.c.l.b16 %v919
    %v997 = vunpack.c.h.b16 %v919
    %v998 = vunpack.c.l.b16 %v920
    %v999 = vunpack.c.h.b16 %v920
    %v1000 = vunpack.c.l.b16 %v921
    %v1001 = vunpack.c.h.b16 %v921
    %v1002 = vunpack.c.l.b16 %v922
    %v1003 = vunpack.c.h.b16 %v922
    %v1004 = vunpack.c.l.b16 %v923
    %v1005 = vunpack.c.h.b16 %v923
    %v1006 = vunpack.c.l.b16 %v924
    %v1007 = vunpack.c.h.b16 %v924
    %v1008 = vunpack.c.l.b16 %v925
    %v1009 = vunpack.c.h.b16 %v925
    %v1010 = vunpack.c.l.b16 %v926
    %v1011 = vunpack.c.h.b16 %v926
    %v1012 = vunpack.c.l.b16 %v927
    %v1013 = vunpack.c.h.b16 %v927
    %v1014 = vunpack.c.l.b16 %v928
    %v1015 = vunpack.c.h.b16 %v928
    %v1016 = vunpack.c.l.b16 %v929
    %v1017 = vunpack.c.h.b16 %v929
    %v1018 = vunpack.c.l.b16 %v930
    %v1019 = vunpack.c.h.b16 %v930
    %v1020 = vunpack.c.l.b16 %v931
    %v1021 = vunpack.c.h.b16 %v931
    %v1022 = vunpack.c.l.b16 %v932
    %v1023 = vunpack.c.h.b16 %v932
    %v1024 = vunpack.c.l.b16 %v933
    %v1025 = vunpack.c.h.b16 %v933
    %v1026 = vunpack.c.l.b16 %v934
    %v1027 = vunpack.c.h.b16 %v934
    %v1028 = vunpack.c.l.b16 %v935
    %v1029 = vunpack.c.h.b16 %v935
    %v1030 = vunpack.c.l.b16 %v936
    %v1031 = vunpack.c.h.b16 %v936
    %v1032 = vunpack.c.l.b16 %v937
    %v1033 = vunpack.c.h.b16 %v937
    %v1034 = vunpack.c.l.b16 %v938
    %v1035 = vunpack.c.h.b16 %v938
    %v1036 = vunpack.c.l.b16 %v939
    %v1037 = vunpack.c.h.b16 %v939
    %v1038 = vunpack.c.l.b16 %v940
    %v1039 = vunpack.c.h.b16 %v940
    %v1040 = vunpack.c.l.b16 %v941
    %v1041 = vunpack.c.h.b16 %v941
    %v1042 = vunpack.c.l.b16 %v942
    %v1043 = vunpack.c.h.b16 %v942
    %v1044 = vunpack.c.l.b16 %v943
    %v1045 = vunpack.c.h.b16 %v943
    %v1046 = vunpack.c.l.b16 %v944
    %v1047 = vunpack.c.h.b16 %v944
    %v1048 = vpack.c.b16 %v988, %v984
    %v1049 = vpack.c.b16 %v989, %v985
    %v1050 = vpack.c.b16 %v990, %v986
    %v1051 = vpack.c.b16 %v991, %v987
    %v1052 = vpack.c.b16 %v996, %v992
    %v1053 = vpack.c.b16 %v997, %v993
    %v1054 = vpack.c.b16 %v998, %v994
    %v1055 = vpack.c.b16 %v999, %v995
    %v1056 = vpack.c.b16 %v1004, %v1000
    %v1057 = vpack.c.b16 %v1005, %v1001
    %v1058 = vpack.c.b16 %v1006, %v1002
    %v1059 = vpack.c.b16 %v1007, %v1003
    %v1060 = vpack.c.b16 %v1012, %v1008
    %v1061 = vpack.c.b16 %v1013, %v1009
    %v1062 = vpack.c.b16 %v1014, %v1010
    %v1063 = vpack.c.b16 %v1015, %v1011
    %v1064 = vpack.c.b16 %v1020, %v1016
    %v1065 = vpack.c.b16 %v1021, %v1017
    %v1066 = vpack.c.b16 %v1022, %v1018
    %v1067 = vpack.c.b16 %v1023, %v1019
    %v1068 = vpack.c.b16 %v1028, %v1024
    %v1069 = vpack.c.b16 %v1029, %v1025
    %v1070 = vpack.c.b16 %v1030, %v1026
    %v1071 = vpack.c.b16 %v1031, %v1027
    %v1072 = vpack.c.b16 %v1036, %v1032
    %v1073 = vpack.c.b16 %v1037, %v1033
    %v1074 = vpack.c.b16 %v1038, %v1034
    %v1075 = vpack.c.b16 %v1039, %v1035
    %v1076 = vpack.c.b16 %v1044, %v1040
    %v1077 = vpack.c.b16 %v1045, %v1041
    %v1078 = vpack.c.b16 %v1046, %v1042
    %v1079 = vpack.c.b16 %v1047, %v1043
    %1112 = vmatprep.subr.bf16.mxu0 %v1049
    %1113 = vmatpush1.bf16.msra.mxu0 %v1048
    %1114 = vmatprep.subr.bf16.mxu0 %v1053
    %1115 = vmatpush1.bf16.msra.mxu0 %v1052
    %1116 = vmatprep.subr.bf16.mxu0 %v1057
    %1117 = vmatpush1.bf16.msra.mxu0 %v1056
    %1118 = vmatprep.subr.bf16.mxu0 %v1061
    %1119 = vmatpush1.bf16.msra.mxu0 %v1060
    %1120 = vmatprep.subr.bf16.mxu0 %v1065
    %1121 = vmatpush1.bf16.msra.mxu0 %v1064
    %1122 = vmatprep.subr.bf16.mxu0 %v1069
    %1123 = vmatpush1.bf16.msra.mxu0 %v1068
    %1124 = vmatprep.subr.bf16.mxu0 %v1073
    %1125 = vmatpush1.bf16.msra.mxu0 %v1072
    %1126 = vmatprep.subr.bf16.mxu0 %v1077
    %1127 = vmatpush1.bf16.msra.mxu0 %v1076
    %1128 = vmatprep.subr.bf16.mxu0 0
    %1129 = vmatpush1.bf16.msra.mxu0 0
    %1130 = vmatprep.subr.bf16.mxu0 0
    %1131 = vmatpush1.bf16.msra.mxu0 0
    %1132 = vmatprep.subr.bf16.mxu0 0
    %1133 = vmatpush1.bf16.msra.mxu0 0
    %1134 = vmatprep.subr.bf16.mxu0 0
    %1135 = vmatpush1.bf16.msra.mxu0 0
    %1136 = vmatprep.subr.bf16.mxu0 0
    %1137 = vmatpush1.bf16.msra.mxu0 0
    %1138 = vmatprep.subr.bf16.mxu0 0
    %1139 = vmatpush1.bf16.msra.mxu0 0
    %1140 = vmatprep.subr.bf16.mxu0 0
    %1141 = vmatpush1.bf16.msra.mxu0 0
    %1142 = vmatprep.subr.bf16.mxu0 0
    %1143 = vmatpush1.bf16.msra.mxu0 0
    %1144 = vmatprep.mubr.bf16.mxu0 0
    %1145 = vmatmul.mubr.bf16.gmra.mrb[0].mxu0 %v911
    %v1146 = vpop.f32.mrb[0].mxu0
    %v1147 = vadd.f32 %v948, %v1146
    %v1148 = vpop.f32.mrb[0].mxu0
    %v1149 = vadd.f32 %v949, %v1148
    %v1150 = vpop.f32.mrb[0].mxu0
    %v1151 = vpop.f32.mrb[0].mxu0
    %1152 = vdwg.mxu0
    %1153 = vmatprep.subr.bf16.mxu0 %v1051
    %1154 = vmatpush1.bf16.msra.mxu0 %v1050
    %1155 = vmatprep.subr.bf16.mxu0 %v1055
    %1156 = vmatpush1.bf16.msra.mxu0 %v1054
    %1157 = vmatprep.subr.bf16.mxu0 %v1059
    %1158 = vmatpush1.bf16.msra.mxu0 %v1058
    %1159 = vmatprep.subr.bf16.mxu0 %v1063
    %1160 = vmatpush1.bf16.msra.mxu0 %v1062
    %1161 = vmatprep.subr.bf16.mxu0 %v1067
    %1162 = vmatpush1.bf16.msra.mxu0 %v1066
    %1163 = vmatprep.subr.bf16.mxu0 %v1071
    %1164 = vmatpush1.bf16.msra.mxu0 %v1070
    %1165 = vmatprep.subr.bf16.mxu0 %v1075
    %1166 = vmatpush1.bf16.msra.mxu0 %v1074
    %1167 = vmatprep.subr.bf16.mxu0 %v1079
    %1168 = vmatpush1.bf16.msra.mxu0 %v1078
    %1169 = vmatprep.subr.bf16.mxu0 0
    %1170 = vmatpush1.bf16.msra.mxu0 0
    %1171 = vmatprep.subr.bf16.mxu0 0
    %1172 = vmatpush1.bf16.msra.mxu0 0
    %1173 = vmatprep.subr.bf16.mxu0 0
    %1174 = vmatpush1.bf16.msra.mxu0 0
    %1175 = vmatprep.subr.bf16.mxu0 0
    %1176 = vmatpush1.bf16.msra.mxu0 0
    %1177 = vmatprep.subr.bf16.mxu0 0
    %1178 = vmatpush1.bf16.msra.mxu0 0
    %1179 = vmatprep.subr.bf16.mxu0 0
    %1180 = vmatpush1.bf16.msra.mxu0 0
    %1181 = vmatprep.subr.bf16.mxu0 0
    %1182 = vmatpush1.bf16.msra.mxu0 0
    %1183 = vmatprep.subr.bf16.mxu0 0
    %1184 = vmatpush1.bf16.msra.mxu0 0
    %1185 = vmatprep.mubr.bf16.mxu0 0
    %1186 = vmatmul.mubr.bf16.gmra.mrb[0].mxu0 %v911
    %v1187 = vpop.f32.mrb[0].mxu0
    %v1188 = vadd.f32 %v950, %v1187
    %v1189 = vpop.f32.mrb[0].mxu0
    %v1190 = vadd.f32 %v951, %v1189
    %v1191 = vpop.f32.mrb[0].mxu0
    %v1192 = vpop.f32.mrb[0].mxu0
    %1193 = vdwg.mxu0
    %v1194 = vxor.u32 %v1147, 2147483648
    %v1195 = vmul.f32 %v1194, 1.442695
    %v1196 = vpow.pop %v1195
    %v1197 = vadd.f32 %v1196, 1.0
    %v1198 = vrcp.pop %v1197
    %v1199 = vmul.f32 1.0, %v1198
    %v1200 = vxor.u32 %v1149, 2147483648
    %v1201 = vmul.f32 %v1200, 1.442695
    %v1202 = vpow.pop %v1201
    %v1203 = vadd.f32 %v1202, 1.0
    %v1204 = vrcp.pop %v1203
    %v1205 = vmul.f32 1.0, %v1204
    %v1206 = vtanh.pop %v1188
    %v1207 = vxor.u32 %v1190, 2147483648
    %v1208 = vmul.f32 %v1207, 1.442695
    %v1209 = vpow.pop %v1208
    %v1210 = vadd.f32 %v1209, 1.0
    %v1211 = vrcp.pop %v1210
    %v1212 = vmul.f32 1.0, %v1211
    %v1213 = vmul.f32 %v1205, %v908
    %v1214 = vmul.f32 %v1199, %v1206
    %v1215 = vadd.f32 %v1213, %v1214
    %v1216 = vtanh.pop %v1215
    %v1217 = vmul.f32 %v1212, %v1216
    %v1218 = vpack.c.bf16 %v1217, %v1217
    %s1219 = scalar_lea.vmem [#allocation11], 4
    %1220 = vst [vmem:[%s1219] sm:$0xf] %v1218
    %v1221 = vld [vmem:[#allocation10] sm:$0xff]
    %v1222 = vld [vmem:[#allocation10 + $0x8] sm:$0xff]
    %v1223 = vld [vmem:[#allocation10 + $0x10] sm:$0xff]
    %v1224 = vld [vmem:[#allocation10 + $0x18] sm:$0xff]
    %v1225 = vld [vmem:[#allocation10 + $0x20] sm:$0xff]
    %v1226 = vld [vmem:[#allocation10 + $0x28] sm:$0xff]
    %v1227 = vld [vmem:[#allocation10 + $0x30] sm:$0xff]
    %v1228 = vld [vmem:[#allocation10 + $0x38] sm:$0xff]
    %v1229 = vld [vmem:[#allocation10 + $0x40] sm:$0xff]
    %v1230 = vld [vmem:[#allocation10 + $0x48] sm:$0xff]
    %v1231 = vld [vmem:[#allocation10 + $0x50] sm:$0xff]
    %v1232 = vld [vmem:[#allocation10 + $0x58] sm:$0xff]
    %v1233 = vld [vmem:[#allocation10 + $0x60] sm:$0xff]
    %v1234 = vld [vmem:[#allocation10 + $0x68] sm:$0xff]
    %v1235 = vld [vmem:[#allocation10 + $0x70] sm:$0xff]
    %v1236 = vld [vmem:[#allocation10 + $0x78] sm:$0xff]
    %v1237 = vld [vmem:[#allocation10 + $0x80] sm:$0xff]
    %v1238 = vld [vmem:[#allocation10 + $0x88] sm:$0xff]
    %v1239 = vld [vmem:[#allocation10 + $0x90] sm:$0xff]
    %v1240 = vld [vmem:[#allocation10 + $0x98] sm:$0xff]
    %v1241 = vld [vmem:[#allocation10 + $0xa0] sm:$0xff]
    %v1242 = vld [vmem:[#allocation10 + $0xa8] sm:$0xff]
    %v1243 = vld [vmem:[#allocation10 + $0xb0] sm:$0xff]
    %v1244 = vld [vmem:[#allocation10 + $0xb8] sm:$0xff]
    %v1245 = vld [vmem:[#allocation10 + $0xc0] sm:$0xff]
    %v1246 = vld [vmem:[#allocation10 + $0xc8] sm:$0xff]
    %v1247 = vld [vmem:[#allocation10 + $0xd0] sm:$0xff]
    %v1248 = vld [vmem:[#allocation10 + $0xd8] sm:$0xff]
    %v1249 = vld [vmem:[#allocation10 + $0xe0] sm:$0xff]
    %v1250 = vld [vmem:[#allocation10 + $0xe8] sm:$0xff]
    %v1251 = vld [vmem:[#allocation10 + $0xf0] sm:$0xff]
    %v1252 = vld [vmem:[#allocation10 + $0xf8] sm:$0xff]
    %s1253 = scalar_lea.vmem [#allocation2], 32
    %v1254 = vld [vmem:[%s1253] sm:$0xff]
    %v1255 = vld [vmem:[%s1253 + $0x8] sm:$0xff]
    %v1256 = vunpack.c.l.bf16 %v1254
    %v1257 = vunpack.c.h.bf16 %v1254
    %v1258 = vunpack.c.l.bf16 %v1255
    %v1259 = vunpack.c.h.bf16 %v1255
    %v1292 = vunpack.c.l.b16 %v1221
    %v1293 = vunpack.c.h.b16 %v1221
    %v1294 = vunpack.c.l.b16 %v1222
    %v1295 = vunpack.c.h.b16 %v1222
    %v1296 = vunpack.c.l.b16 %v1223
    %v1297 = vunpack.c.h.b16 %v1223
    %v1298 = vunpack.c.l.b16 %v1224
    %v1299 = vunpack.c.h.b16 %v1224
    %v1300 = vunpack.c.l.b16 %v1225
    %v1301 = vunpack.c.h.b16 %v1225
    %v1302 = vunpack.c.l.b16 %v1226
    %v1303 = vunpack.c.h.b16 %v1226
    %v1304 = vunpack.c.l.b16 %v1227
    %v1305 = vunpack.c.h.b16 %v1227
    %v1306 = vunpack.c.l.b16 %v1228
    %v1307 = vunpack.c.h.b16 %v1228
    %v1308 = vunpack.c.l.b16 %v1229
    %v1309 = vunpack.c.h.b16 %v1229
    %v1310 = vunpack.c.l.b16 %v1230
    %v1311 = vunpack.c.h.b16 %v1230
    %v1312 = vunpack.c.l.b16 %v1231
    %v1313 = vunpack.c.h.b16 %v1231
    %v1314 = vunpack.c.l.b16 %v1232
    %v1315 = vunpack.c.h.b16 %v1232
    %v1316 = vunpack.c.l.b16 %v1233
    %v1317 = vunpack.c.h.b16 %v1233
    %v1318 = vunpack.c.l.b16 %v1234
    %v1319 = vunpack.c.h.b16 %v1234
    %v1320 = vunpack.c.l.b16 %v1235
    %v1321 = vunpack.c.h.b16 %v1235
    %v1322 = vunpack.c.l.b16 %v1236
    %v1323 = vunpack.c.h.b16 %v1236
    %v1324 = vunpack.c.l.b16 %v1237
    %v1325 = vunpack.c.h.b16 %v1237
    %v1326 = vunpack.c.l.b16 %v1238
    %v1327 = vunpack.c.h.b16 %v1238
    %v1328 = vunpack.c.l.b16 %v1239
    %v1329 = vunpack.c.h.b16 %v1239
    %v1330 = vunpack.c.l.b16 %v1240
    %v1331 = vunpack.c.h.b16 %v1240
    %v1332 = vunpack.c.l.b16 %v1241
    %v1333 = vunpack.c.h.b16 %v1241
    %v1334 = vunpack.c.l.b16 %v1242
    %v1335 = vunpack.c.h.b16 %v1242
    %v1336 = vunpack.c.l.b16 %v1243
    %v1337 = vunpack.c.h.b16 %v1243
    %v1338 = vunpack.c.l.b16 %v1244
    %v1339 = vunpack.c.h.b16 %v1244
    %v1340 = vunpack.c.l.b16 %v1245
    %v1341 = vunpack.c.h.b16 %v1245
    %v1342 = vunpack.c.l.b16 %v1246
    %v1343 = vunpack.c.h.b16 %v1246
    %v1344 = vunpack.c.l.b16 %v1247
    %v1345 = vunpack.c.h.b16 %v1247
    %v1346 = vunpack.c.l.b16 %v1248
    %v1347 = vunpack.c.h.b16 %v1248
    %v1348 = vunpack.c.l.b16 %v1249
    %v1349 = vunpack.c.h.b16 %v1249
    %v1350 = vunpack.c.l.b16 %v1250
    %v1351 = vunpack.c.h.b16 %v1250
    %v1352 = vunpack.c.l.b16 %v1251
    %v1353 = vunpack.c.h.b16 %v1251
    %v1354 = vunpack.c.l.b16 %v1252
    %v1355 = vunpack.c.h.b16 %v1252
    %v1356 = vpack.c.b16 %v1296, %v1292
    %v1357 = vpack.c.b16 %v1297, %v1293
    %v1358 = vpack.c.b16 %v1298, %v1294
    %v1359 = vpack.c.b16 %v1299, %v1295
    %v1360 = vpack.c.b16 %v1304, %v1300
    %v1361 = vpack.c.b16 %v1305, %v1301
    %v1362 = vpack.c.b16 %v1306, %v1302
    %v1363 = vpack.c.b16 %v1307, %v1303
    %v1364 = vpack.c.b16 %v1312, %v1308
    %v1365 = vpack.c.b16 %v1313, %v1309
    %v1366 = vpack.c.b16 %v1314, %v1310
    %v1367 = vpack.c.b16 %v1315, %v1311
    %v1368 = vpack.c.b16 %v1320, %v1316
    %v1369 = vpack.c.b16 %v1321, %v1317
    %v1370 = vpack.c.b16 %v1322, %v1318
    %v1371 = vpack.c.b16 %v1323, %v1319
    %v1372 = vpack.c.b16 %v1328, %v1324
    %v1373 = vpack.c.b16 %v1329, %v1325
    %v1374 = vpack.c.b16 %v1330, %v1326
    %v1375 = vpack.c.b16 %v1331, %v1327
    %v1376 = vpack.c.b16 %v1336, %v1332
    %v1377 = vpack.c.b16 %v1337, %v1333
    %v1378 = vpack.c.b16 %v1338, %v1334
    %v1379 = vpack.c.b16 %v1339, %v1335
    %v1380 = vpack.c.b16 %v1344, %v1340
    %v1381 = vpack.c.b16 %v1345, %v1341
    %v1382 = vpack.c.b16 %v1346, %v1342
    %v1383 = vpack.c.b16 %v1347, %v1343
    %v1384 = vpack.c.b16 %v1352, %v1348
    %v1385 = vpack.c.b16 %v1353, %v1349
    %v1386 = vpack.c.b16 %v1354, %v1350
    %v1387 = vpack.c.b16 %v1355, %v1351
    %1420 = vmatprep.subr.bf16.mxu0 %v1357
    %1421 = vmatpush1.bf16.msra.mxu0 %v1356
    %1422 = vmatprep.subr.bf16.mxu0 %v1361
    %1423 = vmatpush1.bf16.msra.mxu0 %v1360
    %1424 = vmatprep.subr.bf16.mxu0 %v1365
    %1425 = vmatpush1.bf16.msra.mxu0 %v1364
    %1426 = vmatprep.subr.bf16.mxu0 %v1369
    %1427 = vmatpush1.bf16.msra.mxu0 %v1368
    %1428 = vmatprep.subr.bf16.mxu0 %v1373
    %1429 = vmatpush1.bf16.msra.mxu0 %v1372
    %1430 = vmatprep.subr.bf16.mxu0 %v1377
    %1431 = vmatpush1.bf16.msra.mxu0 %v1376
    %1432 = vmatprep.subr.bf16.mxu0 %v1381
    %1433 = vmatpush1.bf16.msra.mxu0 %v1380
    %1434 = vmatprep.subr.bf16.mxu0 %v1385
    %1435 = vmatpush1.bf16.msra.mxu0 %v1384
    %1436 = vmatprep.subr.bf16.mxu0 0
    %1437 = vmatpush1.bf16.msra.mxu0 0
    %1438 = vmatprep.subr.bf16.mxu0 0
    %1439 = vmatpush1.bf16.msra.mxu0 0
    %1440 = vmatprep.subr.bf16.mxu0 0
    %1441 = vmatpush1.bf16.msra.mxu0 0
    %1442 = vmatprep.subr.bf16.mxu0 0
    %1443 = vmatpush1.bf16.msra.mxu0 0
    %1444 = vmatprep.subr.bf16.mxu0 0
    %1445 = vmatpush1.bf16.msra.mxu0 0
    %1446 = vmatprep.subr.bf16.mxu0 0
    %1447 = vmatpush1.bf16.msra.mxu0 0
    %1448 = vmatprep.subr.bf16.mxu0 0
    %1449 = vmatpush1.bf16.msra.mxu0 0
    %1450 = vmatprep.subr.bf16.mxu0 0
    %1451 = vmatpush1.bf16.msra.mxu0 0
    %1452 = vmatprep.mubr.bf16.mxu0 0
    %1453 = vmatmul.mubr.bf16.gmra.mrb[0].mxu0 %v1218
    %v1454 = vpop.f32.mrb[0].mxu0
    %v1455 = vadd.f32 %v1256, %v1454
    %v1456 = vpop.f32.mrb[0].mxu0
    %v1457 = vadd.f32 %v1257, %v1456
    %v1458 = vpop.f32.mrb[0].mxu0
    %v1459 = vpop.f32.mrb[0].mxu0
    %1460 = vdwg.mxu0
    %1461 = vmatprep.subr.bf16.mxu0 %v1359
    %1462 = vmatpush1.bf16.msra.mxu0 %v1358
    %1463 = vmatprep.subr.bf16.mxu0 %v1363
    %1464 = vmatpush1.bf16.msra.mxu0 %v1362
    %1465 = vmatprep.subr.bf16.mxu0 %v1367
    %1466 = vmatpush1.bf16.msra.mxu0 %v1366
    %1467 = vmatprep.subr.bf16.mxu0 %v1371
    %1468 = vmatpush1.bf16.msra.mxu0 %v1370
    %1469 = vmatprep.subr.bf16.mxu0 %v1375
    %1470 = vmatpush1.bf16.msra.mxu0 %v1374
    %1471 = vmatprep.subr.bf16.mxu0 %v1379
    %1472 = vmatpush1.bf16.msra.mxu0 %v1378
    %1473 = vmatprep.subr.bf16.mxu0 %v1383
    %1474 = vmatpush1.bf16.msra.mxu0 %v1382
    %1475 = vmatprep.subr.bf16.mxu0 %v1387
    %1476 = vmatpush1.bf16.msra.mxu0 %v1386
    %1477 = vmatprep.subr.bf16.mxu0 0
    %1478 = vmatpush1.bf16.msra.mxu0 0
    %1479 = vmatprep.subr.bf16.mxu0 0
    %1480 = vmatpush1.bf16.msra.mxu0 0
    %1481 = vmatprep.subr.bf16.mxu0 0
    %1482 = vmatpush1.bf16.msra.mxu0 0
    %1483 = vmatprep.subr.bf16.mxu0 0
    %1484 = vmatpush1.bf16.msra.mxu0 0
    %1485 = vmatprep.subr.bf16.mxu0 0
    %1486 = vmatpush1.bf16.msra.mxu0 0
    %1487 = vmatprep.subr.bf16.mxu0 0
    %1488 = vmatpush1.bf16.msra.mxu0 0
    %1489 = vmatprep.subr.bf16.mxu0 0
    %1490 = vmatpush1.bf16.msra.mxu0 0
    %1491 = vmatprep.subr.bf16.mxu0 0
    %1492 = vmatpush1.bf16.msra.mxu0 0
    %1493 = vmatprep.mubr.bf16.mxu0 0
    %1494 = vmatmul.mubr.bf16.gmra.mrb[0].mxu0 %v1218
    %v1495 = vpop.f32.mrb[0].mxu0
    %v1496 = vadd.f32 %v1258, %v1495
    %v1497 = vpop.f32.mrb[0].mxu0
    %v1498 = vadd.f32 %v1259, %v1497
    %v1499 = vpop.f32.mrb[0].mxu0
    %v1500 = vpop.f32.mrb[0].mxu0
    %1501 = vdwg.mxu0
    %v1502 = vxor.u32 %v1455, 2147483648
    %v1503 = vmul.f32 %v1502, 1.442695
    %v1504 = vpow.pop %v1503
    %v1505 = vadd.f32 %v1504, 1.0
    %v1506 = vrcp.pop %v1505
    %v1507 = vmul.f32 1.0, %v1506
    %v1508 = vxor.u32 %v1457, 2147483648
    %v1509 = vmul.f32 %v1508, 1.442695
    %v1510 = vpow.pop %v1509
    %v1511 = vadd.f32 %v1510, 1.0
    %v1512 = vrcp.pop %v1511
    %v1513 = vmul.f32 1.0, %v1512
    %v1514 = vtanh.pop %v1496
    %v1515 = vxor.u32 %v1498, 2147483648
    %v1516 = vmul.f32 %v1515, 1.442695
    %v1517 = vpow.pop %v1516
    %v1518 = vadd.f32 %v1517, 1.0
    %v1519 = vrcp.pop %v1518
    %v1520 = vmul.f32 1.0, %v1519
    %v1521 = vmul.f32 %v1513, %v1215
    %v1522 = vmul.f32 %v1507, %v1514
    %v1523 = vadd.f32 %v1521, %v1522
    %v1524 = vtanh.pop %v1523
    %v1525 = vmul.f32 %v1520, %v1524
    %v1526 = vpack.c.bf16 %v1525, %v1525
    %s1527 = scalar_lea.vmem [#allocation11], 8
    %1528 = vst [vmem:[%s1527] sm:$0xf] %v1526
    %v1529 = vld [vmem:[#allocation10] sm:$0xff]
    %v1530 = vld [vmem:[#allocation10 + $0x8] sm:$0xff]
    %v1531 = vld [vmem:[#allocation10 + $0x10] sm:$0xff]
    %v1532 = vld [vmem:[#allocation10 + $0x18] sm:$0xff]
    %v1533 = vld [vmem:[#allocation10 + $0x20] sm:$0xff]
    %v1534 = vld [vmem:[#allocation10 + $0x28] sm:$0xff]
    %v1535 = vld [vmem:[#allocation10 + $0x30] sm:$0xff]
    %v1536 = vld [vmem:[#allocation10 + $0x38] sm:$0xff]
    %v1537 = vld [vmem:[#allocation10 + $0x40] sm:$0xff]
    %v1538 = vld [vmem:[#allocation10 + $0x48] sm:$0xff]
    %v1539 = vld [vmem:[#allocation10 + $0x50] sm:$0xff]
    %v1540 = vld [vmem:[#allocation10 + $0x58] sm:$0xff]
    %v1541 = vld [vmem:[#allocation10 + $0x60] sm:$0xff]
    %v1542 = vld [vmem:[#allocation10 + $0x68] sm:$0xff]
    %v1543 = vld [vmem:[#allocation10 + $0x70] sm:$0xff]
    %v1544 = vld [vmem:[#allocation10 + $0x78] sm:$0xff]
    %v1545 = vld [vmem:[#allocation10 + $0x80] sm:$0xff]
    %v1546 = vld [vmem:[#allocation10 + $0x88] sm:$0xff]
    %v1547 = vld [vmem:[#allocation10 + $0x90] sm:$0xff]
    %v1548 = vld [vmem:[#allocation10 + $0x98] sm:$0xff]
    %v1549 = vld [vmem:[#allocation10 + $0xa0] sm:$0xff]
    %v1550 = vld [vmem:[#allocation10 + $0xa8] sm:$0xff]
    %v1551 = vld [vmem:[#allocation10 + $0xb0] sm:$0xff]
    %v1552 = vld [vmem:[#allocation10 + $0xb8] sm:$0xff]
    %v1553 = vld [vmem:[#allocation10 + $0xc0] sm:$0xff]
    %v1554 = vld [vmem:[#allocation10 + $0xc8] sm:$0xff]
    %v1555 = vld [vmem:[#allocation10 + $0xd0] sm:$0xff]
    %v1556 = vld [vmem:[#allocation10 + $0xd8] sm:$0xff]
    %v1557 = vld [vmem:[#allocation10 + $0xe0] sm:$0xff]
    %v1558 = vld [vmem:[#allocation10 + $0xe8] sm:$0xff]
    %v1559 = vld [vmem:[#allocation10 + $0xf0] sm:$0xff]
    %v1560 = vld [vmem:[#allocation10 + $0xf8] sm:$0xff]
    %s1561 = scalar_lea.vmem [#allocation2], 48
    %v1562 = vld [vmem:[%s1561] sm:$0xff]
    %v1563 = vld [vmem:[%s1561 + $0x8] sm:$0xff]
    %v1564 = vunpack.c.l.bf16 %v1562
    %v1565 = vunpack.c.h.bf16 %v1562
    %v1566 = vunpack.c.l.bf16 %v1563
    %v1567 = vunpack.c.h.bf16 %v1563
    %v1600 = vunpack.c.l.b16 %v1529
    %v1601 = vunpack.c.h.b16 %v1529
    %v1602 = vunpack.c.l.b16 %v1530
    %v1603 = vunpack.c.h.b16 %v1530
    %v1604 = vunpack.c.l.b16 %v1531
    %v1605 = vunpack.c.h.b16 %v1531
    %v1606 = vunpack.c.l.b16 %v1532
    %v1607 = vunpack.c.h.b16 %v1532
    %v1608 = vunpack.c.l.b16 %v1533
    %v1609 = vunpack.c.h.b16 %v1533
    %v1610 = vunpack.c.l.b16 %v1534
    %v1611 = vunpack.c.h.b16 %v1534
    %v1612 = vunpack.c.l.b16 %v1535
    %v1613 = vunpack.c.h.b16 %v1535
    %v1614 = vunpack.c.l.b16 %v1536
    %v1615 = vunpack.c.h.b16 %v1536
    %v1616 = vunpack.c.l.b16 %v1537
    %v1617 = vunpack.c.h.b16 %v1537
    %v1618 = vunpack.c.l.b16 %v1538
    %v1619 = vunpack.c.h.b16 %v1538
    %v1620 = vunpack.c.l.b16 %v1539
    %v1621 = vunpack.c.h.b16 %v1539
    %v1622 = vunpack.c.l.b16 %v1540
    %v1623 = vunpack.c.h.b16 %v1540
    %v1624 = vunpack.c.l.b16 %v1541
    %v1625 = vunpack.c.h.b16 %v1541
    %v1626 = vunpack.c.l.b16 %v1542
    %v1627 = vunpack.c.h.b16 %v1542
    %v1628 = vunpack.c.l.b16 %v1543
    %v1629 = vunpack.c.h.b16 %v1543
    %v1630 = vunpack.c.l.b16 %v1544
    %v1631 = vunpack.c.h.b16 %v1544
    %v1632 = vunpack.c.l.b16 %v1545
    %v1633 = vunpack.c.h.b16 %v1545
    %v1634 = vunpack.c.l.b16 %v1546
    %v1635 = vunpack.c.h.b16 %v1546
    %v1636 = vunpack.c.l.b16 %v1547
    %v1637 = vunpack.c.h.b16 %v1547
    %v1638 = vunpack.c.l.b16 %v1548
    %v1639 = vunpack.c.h.b16 %v1548
    %v1640 = vunpack.c.l.b16 %v1549
    %v1641 = vunpack.c.h.b16 %v1549
    %v1642 = vunpack.c.l.b16 %v1550
    %v1643 = vunpack.c.h.b16 %v1550
    %v1644 = vunpack.c.l.b16 %v1551
    %v1645 = vunpack.c.h.b16 %v1551
    %v1646 = vunpack.c.l.b16 %v1552
    %v1647 = vunpack.c.h.b16 %v1552
    %v1648 = vunpack.c.l.b16 %v1553
    %v1649 = vunpack.c.h.b16 %v1553
    %v1650 = vunpack.c.l.b16 %v1554
    %v1651 = vunpack.c.h.b16 %v1554
    %v1652 = vunpack.c.l.b16 %v1555
    %v1653 = vunpack.c.h.b16 %v1555
    %v1654 = vunpack.c.l.b16 %v1556
    %v1655 = vunpack.c.h.b16 %v1556
    %v1656 = vunpack.c.l.b16 %v1557
    %v1657 = vunpack.c.h.b16 %v1557
    %v1658 = vunpack.c.l.b16 %v1558
    %v1659 = vunpack.c.h.b16 %v1558
    %v1660 = vunpack.c.l.b16 %v1559
    %v1661 = vunpack.c.h.b16 %v1559
    %v1662 = vunpack.c.l.b16 %v1560
    %v1663 = vunpack.c.h.b16 %v1560
    %v1664 = vpack.c.b16 %v1604, %v1600
    %v1665 = vpack.c.b16 %v1605, %v1601
    %v1666 = vpack.c.b16 %v1606, %v1602
    %v1667 = vpack.c.b16 %v1607, %v1603
    %v1668 = vpack.c.b16 %v1612, %v1608
    %v1669 = vpack.c.b16 %v1613, %v1609
    %v1670 = vpack.c.b16 %v1614, %v1610
    %v1671 = vpack.c.b16 %v1615, %v1611
    %v1672 = vpack.c.b16 %v1620, %v1616
    %v1673 = vpack.c.b16 %v1621, %v1617
    %v1674 = vpack.c.b16 %v1622, %v1618
    %v1675 = vpack.c.b16 %v1623, %v1619
    %v1676 = vpack.c.b16 %v1628, %v1624
    %v1677 = vpack.c.b16 %v1629, %v1625
    %v1678 = vpack.c.b16 %v1630, %v1626
    %v1679 = vpack.c.b16 %v1631, %v1627
    %v1680 = vpack.c.b16 %v1636, %v1632
    %v1681 = vpack.c.b16 %v1637, %v1633
    %v1682 = vpack.c.b16 %v1638, %v1634
    %v1683 = vpack.c.b16 %v1639, %v1635
    %v1684 = vpack.c.b16 %v1644, %v1640
    %v1685 = vpack.c.b16 %v1645, %v1641
    %v1686 = vpack.c.b16 %v1646, %v1642
    %v1687 = vpack.c.b16 %v1647, %v1643
    %v1688 = vpack.c.b16 %v1652, %v1648
    %v1689 = vpack.c.b16 %v1653, %v1649
    %v1690 = vpack.c.b16 %v1654, %v1650
    %v1691 = vpack.c.b16 %v1655, %v1651
    %v1692 = vpack.c.b16 %v1660, %v1656
    %v1693 = vpack.c.b16 %v1661, %v1657
    %v1694 = vpack.c.b16 %v1662, %v1658
    %v1695 = vpack.c.b16 %v1663, %v1659
    %1728 = vmatprep.subr.bf16.mxu0 %v1665
    %1729 = vmatpush1.bf16.msra.mxu0 %v1664
    %1730 = vmatprep.subr.bf16.mxu0 %v1669
    %1731 = vmatpush1.bf16.msra.mxu0 %v1668
    %1732 = vmatprep.subr.bf16.mxu0 %v1673
    %1733 = vmatpush1.bf16.msra.mxu0 %v1672
    %1734 = vmatprep.subr.bf16.mxu0 %v1677
    %1735 = vmatpush1.bf16.msra.mxu0 %v1676
    %1736 = vmatprep.subr.bf16.mxu0 %v1681
    %1737 = vmatpush1.bf16.msra.mxu0 %v1680
    %1738 = vmatprep.subr.bf16.mxu0 %v1685
    %1739 = vmatpush1.bf16.msra.mxu0 %v1684
    %1740 = vmatprep.subr.bf16.mxu0 %v1689
    %1741 = vmatpush1.bf16.msra.mxu0 %v1688
    %1742 = vmatprep.subr.bf16.mxu0 %v1693
    %1743 = vmatpush1.bf16.msra.mxu0 %v1692
    %1744 = vmatprep.subr.bf16.mxu0 0
    %1745 = vmatpush1.bf16.msra.mxu0 0
    %1746 = vmatprep.subr.bf16.mxu0 0
    %1747 = vmatpush1.bf16.msra.mxu0 0
    %1748 = vmatprep.subr.bf16.mxu0 0
    %1749 = vmatpush1.bf16.msra.mxu0 0
    %1750 = vmatprep.subr.bf16.mxu0 0
    %1751 = vmatpush1.bf16.msra.mxu0 0
    %1752 = vmatprep.subr.bf16.mxu0 0
    %1753 = vmatpush1.bf16.msra.mxu0 0
    %1754 = vmatprep.subr.bf16.mxu0 0
    %1755 = vmatpush1.bf16.msra.mxu0 0
    %1756 = vmatprep.subr.bf16.mxu0 0
    %1757 = vmatpush1.bf16.msra.mxu0 0
    %1758 = vmatprep.subr.bf16.mxu0 0
    %1759 = vmatpush1.bf16.msra.mxu0 0
    %1760 = vmatprep.mubr.bf16.mxu0 0
    %1761 = vmatmul.mubr.bf16.gmra.mrb[0].mxu0 %v1526
    %v1762 = vpop.f32.mrb[0].mxu0
    %v1763 = vadd.f32 %v1564, %v1762
    %v1764 = vpop.f32.mrb[0].mxu0
    %v1765 = vadd.f32 %v1565, %v1764
    %v1766 = vpop.f32.mrb[0].mxu0
    %v1767 = vpop.f32.mrb[0].mxu0
    %1768 = vdwg.mxu0
    %1769 = vmatprep.subr.bf16.mxu0 %v1667
    %1770 = vmatpush1.bf16.msra.mxu0 %v1666
    %1771 = vmatprep.subr.bf16.mxu0 %v1671
    %1772 = vmatpush1.bf16.msra.mxu0 %v1670
    %1773 = vmatprep.subr.bf16.mxu0 %v1675
    %1774 = vmatpush1.bf16.msra.mxu0 %v1674
    %1775 = vmatprep.subr.bf16.mxu0 %v1679
    %1776 = vmatpush1.bf16.msra.mxu0 %v1678
    %1777 = vmatprep.subr.bf16.mxu0 %v1683
    %1778 = vmatpush1.bf16.msra.mxu0 %v1682
    %1779 = vmatprep.subr.bf16.mxu0 %v1687
    %1780 = vmatpush1.bf16.msra.mxu0 %v1686
    %1781 = vmatprep.subr.bf16.mxu0 %v1691
    %1782 = vmatpush1.bf16.msra.mxu0 %v1690
    %1783 = vmatprep.subr.bf16.mxu0 %v1695
    %1784 = vmatpush1.bf16.msra.mxu0 %v1694
    %1785 = vmatprep.subr.bf16.mxu0 0
    %1786 = vmatpush1.bf16.msra.mxu0 0
    %1787 = vmatprep.subr.bf16.mxu0 0
    %1788 = vmatpush1.bf16.msra.mxu0 0
    %1789 = vmatprep.subr.bf16.mxu0 0
    %1790 = vmatpush1.bf16.msra.mxu0 0
    %1791 = vmatprep.subr.bf16.mxu0 0
    %1792 = vmatpush1.bf16.msra.mxu0 0
    %1793 = vmatprep.subr.bf16.mxu0 0
    %1794 = vmatpush1.bf16.msra.mxu0 0
    %1795 = vmatprep.subr.bf16.mxu0 0
    %1796 = vmatpush1.bf16.msra.mxu0 0
    %1797 = vmatprep.subr.bf16.mxu0 0
    %1798 = vmatpush1.bf16.msra.mxu0 0
    %1799 = vmatprep.subr.bf16.mxu0 0
    %1800 = vmatpush1.bf16.msra.mxu0 0
    %1801 = vmatprep.mubr.bf16.mxu0 0
    %1802 = vmatmul.mubr.bf16.gmra.mrb[0].mxu0 %v1526
    %v1803 = vpop.f32.mrb[0].mxu0
    %v1804 = vadd.f32 %v1566, %v1803
    %v1805 = vpop.f32.mrb[0].mxu0
    %v1806 = vadd.f32 %v1567, %v1805
    %v1807 = vpop.f32.mrb[0].mxu0
    %v1808 = vpop.f32.mrb[0].mxu0
    %1809 = vdwg.mxu0
    %v1810 = vxor.u32 %v1763, 2147483648
    %v1811 = vmul.f32 %v1810, 1.442695
    %v1812 = vpow.pop %v1811
    %v1813 = vadd.f32 %v1812, 1.0
    %v1814 = vrcp.pop %v1813
    %v1815 = vmul.f32 1.0, %v1814
    %v1816 = vxor.u32 %v1765, 2147483648
    %v1817 = vmul.f32 %v1816, 1.442695
    %v1818 = vpow.pop %v1817
    %v1819 = vadd.f32 %v1818, 1.0
    %v1820 = vrcp.pop %v1819
    %v1821 = vmul.f32 1.0, %v1820
    %v1822 = vtanh.pop %v1804
    %v1823 = vxor.u32 %v1806, 2147483648
    %v1824 = vmul.f32 %v1823, 1.442695
    %v1825 = vpow.pop %v1824
    %v1826 = vadd.f32 %v1825, 1.0
    %v1827 = vrcp.pop %v1826
    %v1828 = vmul.f32 1.0, %v1827
    %v1829 = vmul.f32 %v1821, %v1523
    %v1830 = vmul.f32 %v1815, %v1822
    %v1831 = vadd.f32 %v1829, %v1830
    %v1832 = vtanh.pop %v1831
    %v1833 = vmul.f32 %v1828, %v1832
    %v1834 = vpack.c.bf16 %v1833, %v1833
    %s1835 = scalar_lea.vmem [#allocation11], 12
    %1836 = vst [vmem:[%s1835] sm:$0xf] %v1834
    %v1837 = vld [vmem:[#allocation10] sm:$0xff]
    %v1838 = vld [vmem:[#allocation10 + $0x8] sm:$0xff]
    %v1839 = vld [vmem:[#allocation10 + $0x10] sm:$0xff]
    %v1840 = vld [vmem:[#allocation10 + $0x18] sm:$0xff]
    %v1841 = vld [vmem:[#allocation10 + $0x20] sm:$0xff]
    %v1842 = vld [vmem:[#allocation10 + $0x28] sm:$0xff]
    %v1843 = vld [vmem:[#allocation10 + $0x30] sm:$0xff]
    %v1844 = vld [vmem:[#allocation10 + $0x38] sm:$0xff]
    %v1845 = vld [vmem:[#allocation10 + $0x40] sm:$0xff]
    %v1846 = vld [vmem:[#allocation10 + $0x48] sm:$0xff]
    %v1847 = vld [vmem:[#allocation10 + $0x50] sm:$0xff]
    %v1848 = vld [vmem:[#allocation10 + $0x58] sm:$0xff]
    %v1849 = vld [vmem:[#allocation10 + $0x60] sm:$0xff]
    %v1850 = vld [vmem:[#allocation10 + $0x68] sm:$0xff]
    %v1851 = vld [vmem:[#allocation10 + $0x70] sm:$0xff]
    %v1852 = vld [vmem:[#allocation10 + $0x78] sm:$0xff]
    %v1853 = vld [vmem:[#allocation10 + $0x80] sm:$0xff]
    %v1854 = vld [vmem:[#allocation10 + $0x88] sm:$0xff]
    %v1855 = vld [vmem:[#allocation10 + $0x90] sm:$0xff]
    %v1856 = vld [vmem:[#allocation10 + $0x98] sm:$0xff]
    %v1857 = vld [vmem:[#allocation10 + $0xa0] sm:$0xff]
    %v1858 = vld [vmem:[#allocation10 + $0xa8] sm:$0xff]
    %v1859 = vld [vmem:[#allocation10 + $0xb0] sm:$0xff]
    %v1860 = vld [vmem:[#allocation10 + $0xb8] sm:$0xff]
    %v1861 = vld [vmem:[#allocation10 + $0xc0] sm:$0xff]
    %v1862 = vld [vmem:[#allocation10 + $0xc8] sm:$0xff]
    %v1863 = vld [vmem:[#allocation10 + $0xd0] sm:$0xff]
    %v1864 = vld [vmem:[#allocation10 + $0xd8] sm:$0xff]
    %v1865 = vld [vmem:[#allocation10 + $0xe0] sm:$0xff]
    %v1866 = vld [vmem:[#allocation10 + $0xe8] sm:$0xff]
    %v1867 = vld [vmem:[#allocation10 + $0xf0] sm:$0xff]
    %v1868 = vld [vmem:[#allocation10 + $0xf8] sm:$0xff]
    %s1869 = scalar_lea.vmem [#allocation2], 64
    %v1870 = vld [vmem:[%s1869] sm:$0xff]
    %v1871 = vld [vmem:[%s1869 + $0x8] sm:$0xff]
    %v1872 = vunpack.c.l.bf16 %v1870
    %v1873 = vunpack.c.h.bf16 %v1870
    %v1874 = vunpack.c.l.bf16 %v1871
    %v1875 = vunpack.c.h.bf16 %v1871
    %v1908 = vunpack.c.l.b16 %v1837
    %v1909 = vunpack.c.h.b16 %v1837
    %v1910 = vunpack.c.l.b16 %v1838
    %v1911 = vunpack.c.h.b16 %v1838
    %v1912 = vunpack.c.l.b16 %v1839
    %v1913 = vunpack.c.h.b16 %v1839
    %v1914 = vunpack.c.l.b16 %v1840
    %v1915 = vunpack.c.h.b16 %v1840
    %v1916 = vunpack.c.l.b16 %v1841
    %v1917 = vunpack.c.h.b16 %v1841
    %v1918 = vunpack.c.l.b16 %v1842
    %v1919 = vunpack.c.h.b16 %v1842
    %v1920 = vunpack.c.l.b16 %v1843
    %v1921 = vunpack.c.h.b16 %v1843
    %v1922 = vunpack.c.l.b16 %v1844
    %v1923 = vunpack.c.h.b16 %v1844
    %v1924 = vunpack.c.l.b16 %v1845
    %v1925 = vunpack.c.h.b16 %v1845
    %v1926 = vunpack.c.l.b16 %v1846
    %v1927 = vunpack.c.h.b16 %v1846
    %v1928 = vunpack.c.l.b16 %v1847
    %v1929 = vunpack.c.h.b16 %v1847
    %v1930 = vunpack.c.l.b16 %v1848
    %v1931 = vunpack.c.h.b16 %v1848
    %v1932 = vunpack.c.l.b16 %v1849
    %v1933 = vunpack.c.h.b16 %v1849
    %v1934 = vunpack.c.l.b16 %v1850
    %v1935 = vunpack.c.h.b16 %v1850
    %v1936 = vunpack.c.l.b16 %v1851
    %v1937 = vunpack.c.h.b16 %v1851
    %v1938 = vunpack.c.l.b16 %v1852
    %v1939 = vunpack.c.h.b16 %v1852
    %v1940 = vunpack.c.l.b16 %v1853
    %v1941 = vunpack.c.h.b16 %v1853
    %v1942 = vunpack.c.l.b16 %v1854
    %v1943 = vunpack.c.h.b16 %v1854
    %v1944 = vunpack.c.l.b16 %v1855
    %v1945 = vunpack.c.h.b16 %v1855
    %v1946 = vunpack.c.l.b16 %v1856
    %v1947 = vunpack.c.h.b16 %v1856
    %v1948 = vunpack.c.l.b16 %v1857
    %v1949 = vunpack.c.h.b16 %v1857
    %v1950 = vunpack.c.l.b16 %v1858
    %v1951 = vunpack.c.h.b16 %v1858
    %v1952 = vunpack.c.l.b16 %v1859
    %v1953 = vunpack.c.h.b16 %v1859
    %v1954 = vunpack.c.l.b16 %v1860
    %v1955 = vunpack.c.h.b16 %v1860
    %v1956 = vunpack.c.l.b16 %v1861
    %v1957 = vunpack.c.h.b16 %v1861
    %v1958 = vunpack.c.l.b16 %v1862
    %v1959 = vunpack.c.h.b16 %v1862
    %v1960 = vunpack.c.l.b16 %v1863
    %v1961 = vunpack.c.h.b16 %v1863
    %v1962 = vunpack.c.l.b16 %v1864
    %v1963 = vunpack.c.h.b16 %v1864
    %v1964 = vunpack.c.l.b16 %v1865
    %v1965 = vunpack.c.h.b16 %v1865
    %v1966 = vunpack.c.l.b16 %v1866
    %v1967 = vunpack.c.h.b16 %v1866
    %v1968 = vunpack.c.l.b16 %v1867
    %v1969 = vunpack.c.h.b16 %v1867
    %v1970 = vunpack.c.l.b16 %v1868
    %v1971 = vunpack.c.h.b16 %v1868
    %v1972 = vpack.c.b16 %v1912, %v1908
    %v1973 = vpack.c.b16 %v1913, %v1909
    %v1974 = vpack.c.b16 %v1914, %v1910
    %v1975 = vpack.c.b16 %v1915, %v1911
    %v1976 = vpack.c.b16 %v1920, %v1916
    %v1977 = vpack.c.b16 %v1921, %v1917
    %v1978 = vpack.c.b16 %v1922, %v1918
    %v1979 = vpack.c.b16 %v1923, %v1919
    %v1980 = vpack.c.b16 %v1928, %v1924
    %v1981 = vpack.c.b16 %v1929, %v1925
    %v1982 = vpack.c.b16 %v1930, %v1926
    %v1983 = vpack.c.b16 %v1931, %v1927
    %v1984 = vpack.c.b16 %v1936, %v1932
    %v1985 = vpack.c.b16 %v1937, %v1933
    %v1986 = vpack.c.b16 %v1938, %v1934
    %v1987 = vpack.c.b16 %v1939, %v1935
    %v1988 = vpack.c.b16 %v1944, %v1940
    %v1989 = vpack.c.b16 %v1945, %v1941
    %v1990 = vpack.c.b16 %v1946, %v1942
    %v1991 = vpack.c.b16 %v1947, %v1943
    %v1992 = vpack.c.b16 %v1952, %v1948
    %v1993 = vpack.c.b16 %v1953, %v1949
    %v1994 = vpack.c.b16 %v1954, %v1950
    %v1995 = vpack.c.b16 %v1955, %v1951
    %v1996 = vpack.c.b16 %v1960, %v1956
    %v1997 = vpack.c.b16 %v1961, %v1957
    %v1998 = vpack.c.b16 %v1962, %v1958
    %v1999 = vpack.c.b16 %v1963, %v1959
    %v2000 = vpack.c.b16 %v1968, %v1964
    %v2001 = vpack.c.b16 %v1969, %v1965
    %v2002 = vpack.c.b16 %v1970, %v1966
    %v2003 = vpack.c.b16 %v1971, %v1967
    %2036 = vmatprep.subr.bf16.mxu0 %v1973
    %2037 = vmatpush1.bf16.msra.mxu0 %v1972
    %2038 = vmatprep.subr.bf16.mxu0 %v1977
    %2039 = vmatpush1.bf16.msra.mxu0 %v1976
    %2040 = vmatprep.subr.bf16.mxu0 %v1981
    %2041 = vmatpush1.bf16.msra.mxu0 %v1980
    %2042 = vmatprep.subr.bf16.mxu0 %v1985
    %2043 = vmatpush1.bf16.msra.mxu0 %v1984
    %2044 = vmatprep.subr.bf16.mxu0 %v1989
    %2045 = vmatpush1.bf16.msra.mxu0 %v1988
    %2046 = vmatprep.subr.bf16.mxu0 %v1993
    %2047 = vmatpush1.bf16.msra.mxu0 %v1992
    %2048 = vmatprep.subr.bf16.mxu0 %v1997
    %2049 = vmatpush1.bf16.msra.mxu0 %v1996
    %2050 = vmatprep.subr.bf16.mxu0 %v2001
    %2051 = vmatpush1.bf16.msra.mxu0 %v2000
    %2052 = vmatprep.subr.bf16.mxu0 0
    %2053 = vmatpush1.bf16.msra.mxu0 0
    %2054 = vmatprep.subr.bf16.mxu0 0
    %2055 = vmatpush1.bf16.msra.mxu0 0
    %2056 = vmatprep.subr.bf16.mxu0 0
    %2057 = vmatpush1.bf16.msra.mxu0 0
    %2058 = vmatprep.subr.bf16.mxu0 0
    %2059 = vmatpush1.bf16.msra.mxu0 0
    %2060 = vmatprep.subr.bf16.mxu0 0
    %2061 = vmatpush1.bf16.msra.mxu0 0
    %2062 = vmatprep.subr.bf16.mxu0 0
    %2063 = vmatpush1.bf16.msra.mxu0 0
    %2064 = vmatprep.subr.bf16.mxu0 0
    %2065 = vmatpush1.bf16.msra.mxu0 0
    %2066 = vmatprep.subr.bf16.mxu0 0
    %2067 = vmatpush1.bf16.msra.mxu0 0
    %2068 = vmatprep.mubr.bf16.mxu0 0
    %2069 = vmatmul.mubr.bf16.gmra.mrb[0].mxu0 %v1834
    %v2070 = vpop.f32.mrb[0].mxu0
    %v2071 = vadd.f32 %v1872, %v2070
    %v2072 = vpop.f32.mrb[0].mxu0
    %v2073 = vadd.f32 %v1873, %v2072
    %v2074 = vpop.f32.mrb[0].mxu0
    %v2075 = vpop.f32.mrb[0].mxu0
    %2076 = vdwg.mxu0
    %2077 = vmatprep.subr.bf16.mxu0 %v1975
    %2078 = vmatpush1.bf16.msra.mxu0 %v1974
    %2079 = vmatprep.subr.bf16.mxu0 %v1979
    %2080 = vmatpush1.bf16.msra.mxu0 %v1978
    %2081 = vmatprep.subr.bf16.mxu0 %v1983
    %2082 = vmatpush1.bf16.msra.mxu0 %v1982
    %2083 = vmatprep.subr.bf16.mxu0 %v1987
    %2084 = vmatpush1.bf16.msra.mxu0 %v1986
    %2085 = vmatprep.subr.bf16.mxu0 %v1991
    %2086 = vmatpush1.bf16.msra.mxu0 %v1990
    %2087 = vmatprep.subr.bf16.mxu0 %v1995
    %2088 = vmatpush1.bf16.msra.mxu0 %v1994
    %2089 = vmatprep.subr.bf16.mxu0 %v1999
    %2090 = vmatpush1.bf16.msra.mxu0 %v1998
    %2091 = vmatprep.subr.bf16.mxu0 %v2003
    %2092 = vmatpush1.bf16.msra.mxu0 %v2002
    %2093 = vmatprep.subr.bf16.mxu0 0
    %2094 = vmatpush1.bf16.msra.mxu0 0
    %2095 = vmatprep.subr.bf16.mxu0 0
    %2096 = vmatpush1.bf16.msra.mxu0 0
    %2097 = vmatprep.subr.bf16.mxu0 0
    %2098 = vmatpush1.bf16.msra.mxu0 0
    %2099 = vmatprep.subr.bf16.mxu0 0
    %2100 = vmatpush1.bf16.msra.mxu0 0
    %2101 = vmatprep.subr.bf16.mxu0 0
    %2102 = vmatpush1.bf16.msra.mxu0 0
    %2103 = vmatprep.subr.bf16.mxu0 0
    %2104 = vmatpush1.bf16.msra.mxu0 0
    %2105 = vmatprep.subr.bf16.mxu0 0
    %2106 = vmatpush1.bf16.msra.mxu0 0
    %2107 = vmatprep.subr.bf16.mxu0 0
    %2108 = vmatpush1.bf16.msra.mxu0 0
    %2109 = vmatprep.mubr.bf16.mxu0 0
    %2110 = vmatmul.mubr.bf16.gmra.mrb[0].mxu0 %v1834
    %v2111 = vpop.f32.mrb[0].mxu0
    %v2112 = vadd.f32 %v1874, %v2111
    %v2113 = vpop.f32.mrb[0].mxu0
    %v2114 = vadd.f32 %v1875, %v2113
    %v2115 = vpop.f32.mrb[0].mxu0
    %v2116 = vpop.f32.mrb[0].mxu0
    %2117 = vdwg.mxu0
    %v2118 = vxor.u32 %v2071, 2147483648
    %v2119 = vmul.f32 %v2118, 1.442695
    %v2120 = vpow.pop %v2119
    %v2121 = vadd.f32 %v2120, 1.0
    %v2122 = vrcp.pop %v2121
    %v2123 = vmul.f32 1.0, %v2122
    %v2124 = vxor.u32 %v2073, 2147483648
    %v2125 = vmul.f32 %v2124, 1.442695
    %v2126 = vpow.pop %v2125
    %v2127 = vadd.f32 %v2126, 1.0
    %v2128 = vrcp.pop %v2127
    %v2129 = vmul.f32 1.0, %v2128
    %v2130 = vtanh.pop %v2112
    %v2131 = vxor.u32 %v2114, 2147483648
    %v2132 = vmul.f32 %v2131, 1.442695
    %v2133 = vpow.pop %v2132
    %v2134 = vadd.f32 %v2133, 1.0
    %v2135 = vrcp.pop %v2134
    %v2136 = vmul.f32 1.0, %v2135
    %v2137 = vmul.f32 %v2129, %v1831
    %v2138 = vmul.f32 %v2123, %v2130
    %v2139 = vadd.f32 %v2137, %v2138
    %v2140 = vtanh.pop %v2139
    %v2141 = vmul.f32 %v2136, %v2140
    %v2142 = vpack.c.bf16 %v2141, %v2141
    %s2143 = scalar_lea.vmem [#allocation11], 16
    %2144 = vst [vmem:[%s2143] sm:$0xf] %v2142
    %v2145 = vld [vmem:[#allocation10] sm:$0xff]
    %v2146 = vld [vmem:[#allocation10 + $0x8] sm:$0xff]
    %v2147 = vld [vmem:[#allocation10 + $0x10] sm:$0xff]
    %v2148 = vld [vmem:[#allocation10 + $0x18] sm:$0xff]
    %v2149 = vld [vmem:[#allocation10 + $0x20] sm:$0xff]
    %v2150 = vld [vmem:[#allocation10 + $0x28] sm:$0xff]
    %v2151 = vld [vmem:[#allocation10 + $0x30] sm:$0xff]
    %v2152 = vld [vmem:[#allocation10 + $0x38] sm:$0xff]
    %v2153 = vld [vmem:[#allocation10 + $0x40] sm:$0xff]
    %v2154 = vld [vmem:[#allocation10 + $0x48] sm:$0xff]
    %v2155 = vld [vmem:[#allocation10 + $0x50] sm:$0xff]
    %v2156 = vld [vmem:[#allocation10 + $0x58] sm:$0xff]
    %v2157 = vld [vmem:[#allocation10 + $0x60] sm:$0xff]
    %v2158 = vld [vmem:[#allocation10 + $0x68] sm:$0xff]
    %v2159 = vld [vmem:[#allocation10 + $0x70] sm:$0xff]
    %v2160 = vld [vmem:[#allocation10 + $0x78] sm:$0xff]
    %v2161 = vld [vmem:[#allocation10 + $0x80] sm:$0xff]
    %v2162 = vld [vmem:[#allocation10 + $0x88] sm:$0xff]
    %v2163 = vld [vmem:[#allocation10 + $0x90] sm:$0xff]
    %v2164 = vld [vmem:[#allocation10 + $0x98] sm:$0xff]
    %v2165 = vld [vmem:[#allocation10 + $0xa0] sm:$0xff]
    %v2166 = vld [vmem:[#allocation10 + $0xa8] sm:$0xff]
    %v2167 = vld [vmem:[#allocation10 + $0xb0] sm:$0xff]
    %v2168 = vld [vmem:[#allocation10 + $0xb8] sm:$0xff]
    %v2169 = vld [vmem:[#allocation10 + $0xc0] sm:$0xff]
    %v2170 = vld [vmem:[#allocation10 + $0xc8] sm:$0xff]
    %v2171 = vld [vmem:[#allocation10 + $0xd0] sm:$0xff]
    %v2172 = vld [vmem:[#allocation10 + $0xd8] sm:$0xff]
    %v2173 = vld [vmem:[#allocation10 + $0xe0] sm:$0xff]
    %v2174 = vld [vmem:[#allocation10 + $0xe8] sm:$0xff]
    %v2175 = vld [vmem:[#allocation10 + $0xf0] sm:$0xff]
    %v2176 = vld [vmem:[#allocation10 + $0xf8] sm:$0xff]
    %s2177 = scalar_lea.vmem [#allocation2], 80
    %v2178 = vld [vmem:[%s2177] sm:$0xff]
    %v2179 = vld [vmem:[%s2177 + $0x8] sm:$0xff]
    %v2180 = vunpack.c.l.bf16 %v2178
    %v2181 = vunpack.c.h.bf16 %v2178
    %v2182 = vunpack.c.l.bf16 %v2179
    %v2183 = vunpack.c.h.bf16 %v2179
    %v2216 = vunpack.c.l.b16 %v2145
    %v2217 = vunpack.c.h.b16 %v2145
    %v2218 = vunpack.c.l.b16 %v2146
    %v2219 = vunpack.c.h.b16 %v2146
    %v2220 = vunpack.c.l.b16 %v2147
    %v2221 = vunpack.c.h.b16 %v2147
    %v2222 = vunpack.c.l.b16 %v2148
    %v2223 = vunpack.c.h.b16 %v2148
    %v2224 = vunpack.c.l.b16 %v2149
    %v2225 = vunpack.c.h.b16 %v2149
    %v2226 = vunpack.c.l.b16 %v2150
    %v2227 = vunpack.c.h.b16 %v2150
    %v2228 = vunpack.c.l.b16 %v2151
    %v2229 = vunpack.c.h.b16 %v2151
    %v2230 = vunpack.c.l.b16 %v2152
    %v2231 = vunpack.c.h.b16 %v2152
    %v2232 = vunpack.c.l.b16 %v2153
    %v2233 = vunpack.c.h.b16 %v2153
    %v2234 = vunpack.c.l.b16 %v2154
    %v2235 = vunpack.c.h.b16 %v2154
    %v2236 = vunpack.c.l.b16 %v2155
    %v2237 = vunpack.c.h.b16 %v2155
    %v2238 = vunpack.c.l.b16 %v2156
    %v2239 = vunpack.c.h.b16 %v2156
    %v2240 = vunpack.c.l.b16 %v2157
    %v2241 = vunpack.c.h.b16 %v2157
    %v2242 = vunpack.c.l.b16 %v2158
    %v2243 = vunpack.c.h.b16 %v2158
    %v2244 = vunpack.c.l.b16 %v2159
    %v2245 = vunpack.c.h.b16 %v2159
    %v2246 = vunpack.c.l.b16 %v2160
    %v2247 = vunpack.c.h.b16 %v2160
    %v2248 = vunpack.c.l.b16 %v2161
    %v2249 = vunpack.c.h.b16 %v2161
    %v2250 = vunpack.c.l.b16 %v2162
    %v2251 = vunpack.c.h.b16 %v2162
    %v2252 = vunpack.c.l.b16 %v2163
    %v2253 = vunpack.c.h.b16 %v2163
    %v2254 = vunpack.c.l.b16 %v2164
    %v2255 = vunpack.c.h.b16 %v2164
    %v2256 = vunpack.c.l.b16 %v2165
    %v2257 = vunpack.c.h.b16 %v2165
    %v2258 = vunpack.c.l.b16 %v2166
    %v2259 = vunpack.c.h.b16 %v2166
    %v2260 = vunpack.c.l.b16 %v2167
    %v2261 = vunpack.c.h.b16 %v2167
    %v2262 = vunpack.c.l.b16 %v2168
    %v2263 = vunpack.c.h.b16 %v2168
    %v2264 = vunpack.c.l.b16 %v2169
    %v2265 = vunpack.c.h.b16 %v2169
    %v2266 = vunpack.c.l.b16 %v2170
    %v2267 = vunpack.c.h.b16 %v2170
    %v2268 = vunpack.c.l.b16 %v2171
    %v2269 = vunpack.c.h.b16 %v2171
    %v2270 = vunpack.c.l.b16 %v2172
    %v2271 = vunpack.c.h.b16 %v2172
    %v2272 = vunpack.c.l.b16 %v2173
    %v2273 = vunpack.c.h.b16 %v2173
    %v2274 = vunpack.c.l.b16 %v2174
    %v2275 = vunpack.c.h.b16 %v2174
    %v2276 = vunpack.c.l.b16 %v2175
    %v2277 = vunpack.c.h.b16 %v2175
    %v2278 = vunpack.c.l.b16 %v2176
    %v2279 = vunpack.c.h.b16 %v2176
    %v2280 = vpack.c.b16 %v2220, %v2216
    %v2281 = vpack.c.b16 %v2221, %v2217
    %v2282 = vpack.c.b16 %v2222, %v2218
    %v2283 = vpack.c.b16 %v2223, %v2219
    %v2284 = vpack.c.b16 %v2228, %v2224
    %v2285 = vpack.c.b16 %v2229, %v2225
    %v2286 = vpack.c.b16 %v2230, %v2226
    %v2287 = vpack.c.b16 %v2231, %v2227
    %v2288 = vpack.c.b16 %v2236, %v2232
    %v2289 = vpack.c.b16 %v2237, %v2233
    %v2290 = vpack.c.b16 %v2238, %v2234
    %v2291 = vpack.c.b16 %v2239, %v2235
    %v2292 = vpack.c.b16 %v2244, %v2240
    %v2293 = vpack.c.b16 %v2245, %v2241
    %v2294 = vpack.c.b16 %v2246, %v2242
    %v2295 = vpack.c.b16 %v2247, %v2243
    %v2296 = vpack.c.b16 %v2252, %v2248
    %v2297 = vpack.c.b16 %v2253, %v2249
    %v2298 = vpack.c.b16 %v2254, %v2250
    %v2299 = vpack.c.b16 %v2255, %v2251
    %v2300 = vpack.c.b16 %v2260, %v2256
    %v2301 = vpack.c.b16 %v2261, %v2257
    %v2302 = vpack.c.b16 %v2262, %v2258
    %v2303 = vpack.c.b16 %v2263, %v2259
    %v2304 = vpack.c.b16 %v2268, %v2264
    %v2305 = vpack.c.b16 %v2269, %v2265
    %v2306 = vpack.c.b16 %v2270, %v2266
    %v2307 = vpack.c.b16 %v2271, %v2267
    %v2308 = vpack.c.b16 %v2276, %v2272
    %v2309 = vpack.c.b16 %v2277, %v2273
    %v2310 = vpack.c.b16 %v2278, %v2274
    %v2311 = vpack.c.b16 %v2279, %v2275
    %2344 = vmatprep.subr.bf16.mxu0 %v2281
    %2345 = vmatpush1.bf16.msra.mxu0 %v2280
    %2346 = vmatprep.subr.bf16.mxu0 %v2285
    %2347 = vmatpush1.bf16.msra.mxu0 %v2284
    %2348 = vmatprep.subr.bf16.mxu0 %v2289
    %2349 = vmatpush1.bf16.msra.mxu0 %v2288
    %2350 = vmatprep.subr.bf16.mxu0 %v2293
    %2351 = vmatpush1.bf16.msra.mxu0 %v2292
    %2352 = vmatprep.subr.bf16.mxu0 %v2297
    %2353 = vmatpush1.bf16.msra.mxu0 %v2296
    %2354 = vmatprep.subr.bf16.mxu0 %v2301
    %2355 = vmatpush1.bf16.msra.mxu0 %v2300
    %2356 = vmatprep.subr.bf16.mxu0 %v2305
    %2357 = vmatpush1.bf16.msra.mxu0 %v2304
    %2358 = vmatprep.subr.bf16.mxu0 %v2309
    %2359 = vmatpush1.bf16.msra.mxu0 %v2308
    %2360 = vmatprep.subr.bf16.mxu0 0
    %2361 = vmatpush1.bf16.msra.mxu0 0
    %2362 = vmatprep.subr.bf16.mxu0 0
    %2363 = vmatpush1.bf16.msra.mxu0 0
    %2364 = vmatprep.subr.bf16.mxu0 0
    %2365 = vmatpush1.bf16.msra.mxu0 0
    %2366 = vmatprep.subr.bf16.mxu0 0
    %2367 = vmatpush1.bf16.msra.mxu0 0
    %2368 = vmatprep.subr.bf16.mxu0 0
    %2369 = vmatpush1.bf16.msra.mxu0 0
    %2370 = vmatprep.subr.bf16.mxu0 0
    %2371 = vmatpush1.bf16.msra.mxu0 0
    %2372 = vmatprep.subr.bf16.mxu0 0
    %2373 = vmatpush1.bf16.msra.mxu0 0
    %2374 = vmatprep.subr.bf16.mxu0 0
    %2375 = vmatpush1.bf16.msra.mxu0 0
    %2376 = vmatprep.mubr.bf16.mxu0 0
    %2377 = vmatmul.mubr.bf16.gmra.mrb[0].mxu0 %v2142
    %v2378 = vpop.f32.mrb[0].mxu0
    %v2379 = vadd.f32 %v2180, %v2378
    %v2380 = vpop.f32.mrb[0].mxu0
    %v2381 = vadd.f32 %v2181, %v2380
    %v2382 = vpop.f32.mrb[0].mxu0
    %v2383 = vpop.f32.mrb[0].mxu0
    %2384 = vdwg.mxu0
    %2385 = vmatprep.subr.bf16.mxu0 %v2283
    %2386 = vmatpush1.bf16.msra.mxu0 %v2282
    %2387 = vmatprep.subr.bf16.mxu0 %v2287
    %2388 = vmatpush1.bf16.msra.mxu0 %v2286
    %2389 = vmatprep.subr.bf16.mxu0 %v2291
    %2390 = vmatpush1.bf16.msra.mxu0 %v2290
    %2391 = vmatprep.subr.bf16.mxu0 %v2295
    %2392 = vmatpush1.bf16.msra.mxu0 %v2294
    %2393 = vmatprep.subr.bf16.mxu0 %v2299
    %2394 = vmatpush1.bf16.msra.mxu0 %v2298
    %2395 = vmatprep.subr.bf16.mxu0 %v2303
    %2396 = vmatpush1.bf16.msra.mxu0 %v2302
    %2397 = vmatprep.subr.bf16.mxu0 %v2307
    %2398 = vmatpush1.bf16.msra.mxu0 %v2306
    %2399 = vmatprep.subr.bf16.mxu0 %v2311
    %2400 = vmatpush1.bf16.msra.mxu0 %v2310
    %2401 = vmatprep.subr.bf16.mxu0 0
    %2402 = vmatpush1.bf16.msra.mxu0 0
    %2403 = vmatprep.subr.bf16.mxu0 0
    %2404 = vmatpush1.bf16.msra.mxu0 0
    %2405 = vmatprep.subr.bf16.mxu0 0
    %2406 = vmatpush1.bf16.msra.mxu0 0
    %2407 = vmatprep.subr.bf16.mxu0 0
    %2408 = vmatpush1.bf16.msra.mxu0 0
    %2409 = vmatprep.subr.bf16.mxu0 0
    %2410 = vmatpush1.bf16.msra.mxu0 0
    %2411 = vmatprep.subr.bf16.mxu0 0
    %2412 = vmatpush1.bf16.msra.mxu0 0
    %2413 = vmatprep.subr.bf16.mxu0 0
    %2414 = vmatpush1.bf16.msra.mxu0 0
    %2415 = vmatprep.subr.bf16.mxu0 0
    %2416 = vmatpush1.bf16.msra.mxu0 0
    %2417 = vmatprep.mubr.bf16.mxu0 0
    %2418 = vmatmul.mubr.bf16.gmra.mrb[0].mxu0 %v2142
    %v2419 = vpop.f32.mrb[0].mxu0
    %v2420 = vadd.f32 %v2182, %v2419
    %v2421 = vpop.f32.mrb[0].mxu0
    %v2422 = vadd.f32 %v2183, %v2421
    %v2423 = vpop.f32.mrb[0].mxu0
    %v2424 = vpop.f32.mrb[0].mxu0
    %2425 = vdwg.mxu0
    %v2426 = vxor.u32 %v2379, 2147483648
    %v2427 = vmul.f32 %v2426, 1.442695
    %v2428 = vpow.pop %v2427
    %v2429 = vadd.f32 %v2428, 1.0
    %v2430 = vrcp.pop %v2429
    %v2431 = vmul.f32 1.0, %v2430
    %v2432 = vxor.u32 %v2381, 2147483648
    %v2433 = vmul.f32 %v2432, 1.442695
    %v2434 = vpow.pop %v2433
    %v2435 = vadd.f32 %v2434, 1.0
    %v2436 = vrcp.pop %v2435
    %v2437 = vmul.f32 1.0, %v2436
    %v2438 = vtanh.pop %v2420
    %v2439 = vxor.u32 %v2422, 2147483648
    %v2440 = vmul.f32 %v2439, 1.442695
    %v2441 = vpow.pop %v2440
    %v2442 = vadd.f32 %v2441, 1.0
    %v2443 = vrcp.pop %v2442
    %v2444 = vmul.f32 1.0, %v2443
    %v2445 = vmul.f32 %v2437, %v2139
    %v2446 = vmul.f32 %v2431, %v2438
    %v2447 = vadd.f32 %v2445, %v2446
    %v2448 = vtanh.pop %v2447
    %v2449 = vmul.f32 %v2444, %v2448
    %v2450 = vpack.c.bf16 %v2449, %v2449
    %s2451 = scalar_lea.vmem [#allocation11], 20
    %2452 = vst [vmem:[%s2451] sm:$0xf] %v2450
    %v2453 = vld [vmem:[#allocation10] sm:$0xff]
    %v2454 = vld [vmem:[#allocation10 + $0x8] sm:$0xff]
    %v2455 = vld [vmem:[#allocation10 + $0x10] sm:$0xff]
    %v2456 = vld [vmem:[#allocation10 + $0x18] sm:$0xff]
    %v2457 = vld [vmem:[#allocation10 + $0x20] sm:$0xff]
    %v2458 = vld [vmem:[#allocation10 + $0x28] sm:$0xff]
    %v2459 = vld [vmem:[#allocation10 + $0x30] sm:$0xff]
    %v2460 = vld [vmem:[#allocation10 + $0x38] sm:$0xff]
    %v2461 = vld [vmem:[#allocation10 + $0x40] sm:$0xff]
    %v2462 = vld [vmem:[#allocation10 + $0x48] sm:$0xff]
    %v2463 = vld [vmem:[#allocation10 + $0x50] sm:$0xff]
    %v2464 = vld [vmem:[#allocation10 + $0x58] sm:$0xff]
    %v2465 = vld [vmem:[#allocation10 + $0x60] sm:$0xff]
    %v2466 = vld [vmem:[#allocation10 + $0x68] sm:$0xff]
    %v2467 = vld [vmem:[#allocation10 + $0x70] sm:$0xff]
    %v2468 = vld [vmem:[#allocation10 + $0x78] sm:$0xff]
    %v2469 = vld [vmem:[#allocation10 + $0x80] sm:$0xff]
    %v2470 = vld [vmem:[#allocation10 + $0x88] sm:$0xff]
    %v2471 = vld [vmem:[#allocation10 + $0x90] sm:$0xff]
    %v2472 = vld [vmem:[#allocation10 + $0x98] sm:$0xff]
    %v2473 = vld [vmem:[#allocation10 + $0xa0] sm:$0xff]
    %v2474 = vld [vmem:[#allocation10 + $0xa8] sm:$0xff]
    %v2475 = vld [vmem:[#allocation10 + $0xb0] sm:$0xff]
    %v2476 = vld [vmem:[#allocation10 + $0xb8] sm:$0xff]
    %v2477 = vld [vmem:[#allocation10 + $0xc0] sm:$0xff]
    %v2478 = vld [vmem:[#allocation10 + $0xc8] sm:$0xff]
    %v2479 = vld [vmem:[#allocation10 + $0xd0] sm:$0xff]
    %v2480 = vld [vmem:[#allocation10 + $0xd8] sm:$0xff]
    %v2481 = vld [vmem:[#allocation10 + $0xe0] sm:$0xff]
    %v2482 = vld [vmem:[#allocation10 + $0xe8] sm:$0xff]
    %v2483 = vld [vmem:[#allocation10 + $0xf0] sm:$0xff]
    %v2484 = vld [vmem:[#allocation10 + $0xf8] sm:$0xff]
    %s2485 = scalar_lea.vmem [#allocation2], 96
    %v2486 = vld [vmem:[%s2485] sm:$0xff]
    %v2487 = vld [vmem:[%s2485 + $0x8] sm:$0xff]
    %v2488 = vunpack.c.l.bf16 %v2486
    %v2489 = vunpack.c.h.bf16 %v2486
    %v2490 = vunpack.c.l.bf16 %v2487
    %v2491 = vunpack.c.h.bf16 %v2487
    %v2524 = vunpack.c.l.b16 %v2453
    %v2525 = vunpack.c.h.b16 %v2453
    %v2526 = vunpack.c.l.b16 %v2454
    %v2527 = vunpack.c.h.b16 %v2454
    %v2528 = vunpack.c.l.b16 %v2455
    %v2529 = vunpack.c.h.b16 %v2455
    %v2530 = vunpack.c.l.b16 %v2456
    %v2531 = vunpack.c.h.b16 %v2456
    %v2532 = vunpack.c.l.b16 %v2457
    %v2533 = vunpack.c.h.b16 %v2457
    %v2534 = vunpack.c.l.b16 %v2458
    %v2535 = vunpack.c.h.b16 %v2458
    %v2536 = vunpack.c.l.b16 %v2459
    %v2537 = vunpack.c.h.b16 %v2459
    %v2538 = vunpack.c.l.b16 %v2460
    %v2539 = vunpack.c.h.b16 %v2460
    %v2540 = vunpack.c.l.b16 %v2461
    %v2541 = vunpack.c.h.b16 %v2461
    %v2542 = vunpack.c.l.b16 %v2462
    %v2543 = vunpack.c.h.b16 %v2462
    %v2544 = vunpack.c.l.b16 %v2463
    %v2545 = vunpack.c.h.b16 %v2463
    %v2546 = vunpack.c.l.b16 %v2464
    %v2547 = vunpack.c.h.b16 %v2464
    %v2548 = vunpack.c.l.b16 %v2465
    %v2549 = vunpack.c.h.b16 %v2465
    %v2550 = vunpack.c.l.b16 %v2466
    %v2551 = vunpack.c.h.b16 %v2466
    %v2552 = vunpack.c.l.b16 %v2467
    %v2553 = vunpack.c.h.b16 %v2467
    %v2554 = vunpack.c.l.b16 %v2468
    %v2555 = vunpack.c.h.b16 %v2468
    %v2556 = vunpack.c.l.b16 %v2469
    %v2557 = vunpack.c.h.b16 %v2469
    %v2558 = vunpack.c.l.b16 %v2470
    %v2559 = vunpack.c.h.b16 %v2470
    %v2560 = vunpack.c.l.b16 %v2471
    %v2561 = vunpack.c.h.b16 %v2471
    %v2562 = vunpack.c.l.b16 %v2472
    %v2563 = vunpack.c.h.b16 %v2472
    %v2564 = vunpack.c.l.b16 %v2473
    %v2565 = vunpack.c.h.b16 %v2473
    %v2566 = vunpack.c.l.b16 %v2474
    %v2567 = vunpack.c.h.b16 %v2474
    %v2568 = vunpack.c.l.b16 %v2475
    %v2569 = vunpack.c.h.b16 %v2475
    %v2570 = vunpack.c.l.b16 %v2476
    %v2571 = vunpack.c.h.b16 %v2476
    %v2572 = vunpack.c.l.b16 %v2477
    %v2573 = vunpack.c.h.b16 %v2477
    %v2574 = vunpack.c.l.b16 %v2478
    %v2575 = vunpack.c.h.b16 %v2478
    %v2576 = vunpack.c.l.b16 %v2479
    %v2577 = vunpack.c.h.b16 %v2479
    %v2578 = vunpack.c.l.b16 %v2480
    %v2579 = vunpack.c.h.b16 %v2480
    %v2580 = vunpack.c.l.b16 %v2481
    %v2581 = vunpack.c.h.b16 %v2481
    %v2582 = vunpack.c.l.b16 %v2482
    %v2583 = vunpack.c.h.b16 %v2482
    %v2584 = vunpack.c.l.b16 %v2483
    %v2585 = vunpack.c.h.b16 %v2483
    %v2586 = vunpack.c.l.b16 %v2484
    %v2587 = vunpack.c.h.b16 %v2484
    %v2588 = vpack.c.b16 %v2528, %v2524
    %v2589 = vpack.c.b16 %v2529, %v2525
    %v2590 = vpack.c.b16 %v2530, %v2526
    %v2591 = vpack.c.b16 %v2531, %v2527
    %v2592 = vpack.c.b16 %v2536, %v2532
    %v2593 = vpack.c.b16 %v2537, %v2533
    %v2594 = vpack.c.b16 %v2538, %v2534
    %v2595 = vpack.c.b16 %v2539, %v2535
    %v2596 = vpack.c.b16 %v2544, %v2540
    %v2597 = vpack.c.b16 %v2545, %v2541
    %v2598 = vpack.c.b16 %v2546, %v2542
    %v2599 = vpack.c.b16 %v2547, %v2543
    %v2600 = vpack.c.b16 %v2552, %v2548
    %v2601 = vpack.c.b16 %v2553, %v2549
    %v2602 = vpack.c.b16 %v2554, %v2550
    %v2603 = vpack.c.b16 %v2555, %v2551
    %v2604 = vpack.c.b16 %v2560, %v2556
    %v2605 = vpack.c.b16 %v2561, %v2557
    %v2606 = vpack.c.b16 %v2562, %v2558
    %v2607 = vpack.c.b16 %v2563, %v2559
    %v2608 = vpack.c.b16 %v2568, %v2564
    %v2609 = vpack.c.b16 %v2569, %v2565
    %v2610 = vpack.c.b16 %v2570, %v2566
    %v2611 = vpack.c.b16 %v2571, %v2567
    %v2612 = vpack.c.b16 %v2576, %v2572
    %v2613 = vpack.c.b16 %v2577, %v2573
    %v2614 = vpack.c.b16 %v2578, %v2574
    %v2615 = vpack.c.b16 %v2579, %v2575
    %v2616 = vpack.c.b16 %v2584, %v2580
    %v2617 = vpack.c.b16 %v2585, %v2581
    %v2618 = vpack.c.b16 %v2586, %v2582
    %v2619 = vpack.c.b16 %v2587, %v2583
    %2652 = vmatprep.subr.bf16.mxu0 %v2589
    %2653 = vmatpush1.bf16.msra.mxu0 %v2588
    %2654 = vmatprep.subr.bf16.mxu0 %v2593
    %2655 = vmatpush1.bf16.msra.mxu0 %v2592
    %2656 = vmatprep.subr.bf16.mxu0 %v2597
    %2657 = vmatpush1.bf16.msra.mxu0 %v2596
    %2658 = vmatprep.subr.bf16.mxu0 %v2601
    %2659 = vmatpush1.bf16.msra.mxu0 %v2600
    %2660 = vmatprep.subr.bf16.mxu0 %v2605
    %2661 = vmatpush1.bf16.msra.mxu0 %v2604
    %2662 = vmatprep.subr.bf16.mxu0 %v2609
    %2663 = vmatpush1.bf16.msra.mxu0 %v2608
    %2664 = vmatprep.subr.bf16.mxu0 %v2613
    %2665 = vmatpush1.bf16.msra.mxu0 %v2612
    %2666 = vmatprep.subr.bf16.mxu0 %v2617
    %2667 = vmatpush1.bf16.msra.mxu0 %v2616
    %2668 = vmatprep.subr.bf16.mxu0 0
    %2669 = vmatpush1.bf16.msra.mxu0 0
    %2670 = vmatprep.subr.bf16.mxu0 0
    %2671 = vmatpush1.bf16.msra.mxu0 0
    %2672 = vmatprep.subr.bf16.mxu0 0
    %2673 = vmatpush1.bf16.msra.mxu0 0
    %2674 = vmatprep.subr.bf16.mxu0 0
    %2675 = vmatpush1.bf16.msra.mxu0 0
    %2676 = vmatprep.subr.bf16.mxu0 0
    %2677 = vmatpush1.bf16.msra.mxu0 0
    %2678 = vmatprep.subr.bf16.mxu0 0
    %2679 = vmatpush1.bf16.msra.mxu0 0
    %2680 = vmatprep.subr.bf16.mxu0 0
    %2681 = vmatpush1.bf16.msra.mxu0 0
    %2682 = vmatprep.subr.bf16.mxu0 0
    %2683 = vmatpush1.bf16.msra.mxu0 0
    %2684 = vmatprep.mubr.bf16.mxu0 0
    %2685 = vmatmul.mubr.bf16.gmra.mrb[0].mxu0 %v2450
    %v2686 = vpop.f32.mrb[0].mxu0
    %v2687 = vadd.f32 %v2488, %v2686
    %v2688 = vpop.f32.mrb[0].mxu0
    %v2689 = vadd.f32 %v2489, %v2688
    %v2690 = vpop.f32.mrb[0].mxu0
    %v2691 = vpop.f32.mrb[0].mxu0
    %2692 = vdwg.mxu0
    %2693 = vmatprep.subr.bf16.mxu0 %v2591
    %2694 = vmatpush1.bf16.msra.mxu0 %v2590
    %2695 = vmatprep.subr.bf16.mxu0 %v2595
    %2696 = vmatpush1.bf16.msra.mxu0 %v2594
    %2697 = vmatprep.subr.bf16.mxu0 %v2599
    %2698 = vmatpush1.bf16.msra.mxu0 %v2598
    %2699 = vmatprep.subr.bf16.mxu0 %v2603
    %2700 = vmatpush1.bf16.msra.mxu0 %v2602
    %2701 = vmatprep.subr.bf16.mxu0 %v2607
    %2702 = vmatpush1.bf16.msra.mxu0 %v2606
    %2703 = vmatprep.subr.bf16.mxu0 %v2611
    %2704 = vmatpush1.bf16.msra.mxu0 %v2610
    %2705 = vmatprep.subr.bf16.mxu0 %v2615
    %2706 = vmatpush1.bf16.msra.mxu0 %v2614
    %2707 = vmatprep.subr.bf16.mxu0 %v2619
    %2708 = vmatpush1.bf16.msra.mxu0 %v2618
    %2709 = vmatprep.subr.bf16.mxu0 0
    %2710 = vmatpush1.bf16.msra.mxu0 0
    %2711 = vmatprep.subr.bf16.mxu0 0
    %2712 = vmatpush1.bf16.msra.mxu0 0
    %2713 = vmatprep.subr.bf16.mxu0 0
    %2714 = vmatpush1.bf16.msra.mxu0 0
    %2715 = vmatprep.subr.bf16.mxu0 0
    %2716 = vmatpush1.bf16.msra.mxu0 0
    %2717 = vmatprep.subr.bf16.mxu0 0
    %2718 = vmatpush1.bf16.msra.mxu0 0
    %2719 = vmatprep.subr.bf16.mxu0 0
    %2720 = vmatpush1.bf16.msra.mxu0 0
    %2721 = vmatprep.subr.bf16.mxu0 0
    %2722 = vmatpush1.bf16.msra.mxu0 0
    %2723 = vmatprep.subr.bf16.mxu0 0
    %2724 = vmatpush1.bf16.msra.mxu0 0
    %2725 = vmatprep.mubr.bf16.mxu0 0
    %2726 = vmatmul.mubr.bf16.gmra.mrb[0].mxu0 %v2450
    %v2727 = vpop.f32.mrb[0].mxu0
    %v2728 = vadd.f32 %v2490, %v2727
    %v2729 = vpop.f32.mrb[0].mxu0
    %v2730 = vadd.f32 %v2491, %v2729
    %v2731 = vpop.f32.mrb[0].mxu0
    %v2732 = vpop.f32.mrb[0].mxu0
    %2733 = vdwg.mxu0
    %v2734 = vxor.u32 %v2687, 2147483648
    %v2735 = vmul.f32 %v2734, 1.442695
    %v2736 = vpow.pop %v2735
    %v2737 = vadd.f32 %v2736, 1.0
    %v2738 = vrcp.pop %v2737
    %v2739 = vmul.f32 1.0, %v2738
    %v2740 = vxor.u32 %v2689, 2147483648
    %v2741 = vmul.f32 %v2740, 1.442695
    %v2742 = vpow.pop %v2741
    %v2743 = vadd.f32 %v2742, 1.0
    %v2744 = vrcp.pop %v2743
    %v2745 = vmul.f32 1.0, %v2744
    %v2746 = vtanh.pop %v2728
    %v2747 = vxor.u32 %v2730, 2147483648
    %v2748 = vmul.f32 %v2747, 1.442695
    %v2749 = vpow.pop %v2748
    %v2750 = vadd.f32 %v2749, 1.0
    %v2751 = vrcp.pop %v2750
    %v2752 = vmul.f32 1.0, %v2751
    %v2753 = vmul.f32 %v2745, %v2447
    %v2754 = vmul.f32 %v2739, %v2746
    %v2755 = vadd.f32 %v2753, %v2754
    %v2756 = vtanh.pop %v2755
    %v2757 = vmul.f32 %v2752, %v2756
    %v2758 = vpack.c.bf16 %v2757, %v2757
    %s2759 = scalar_lea.vmem [#allocation11], 24
    %2760 = vst [vmem:[%s2759] sm:$0xf] %v2758
    %v2761 = vld [vmem:[#allocation10] sm:$0xff]
    %v2762 = vld [vmem:[#allocation10 + $0x8] sm:$0xff]
    %v2763 = vld [vmem:[#allocation10 + $0x10] sm:$0xff]
    %v2764 = vld [vmem:[#allocation10 + $0x18] sm:$0xff]
    %v2765 = vld [vmem:[#allocation10 + $0x20] sm:$0xff]
    %v2766 = vld [vmem:[#allocation10 + $0x28] sm:$0xff]
    %v2767 = vld [vmem:[#allocation10 + $0x30] sm:$0xff]
    %v2768 = vld [vmem:[#allocation10 + $0x38] sm:$0xff]
    %v2769 = vld [vmem:[#allocation10 + $0x40] sm:$0xff]
    %v2770 = vld [vmem:[#allocation10 + $0x48] sm:$0xff]
    %v2771 = vld [vmem:[#allocation10 + $0x50] sm:$0xff]
    %v2772 = vld [vmem:[#allocation10 + $0x58] sm:$0xff]
    %v2773 = vld [vmem:[#allocation10 + $0x60] sm:$0xff]
    %v2774 = vld [vmem:[#allocation10 + $0x68] sm:$0xff]
    %v2775 = vld [vmem:[#allocation10 + $0x70] sm:$0xff]
    %v2776 = vld [vmem:[#allocation10 + $0x78] sm:$0xff]
    %v2777 = vld [vmem:[#allocation10 + $0x80] sm:$0xff]
    %v2778 = vld [vmem:[#allocation10 + $0x88] sm:$0xff]
    %v2779 = vld [vmem:[#allocation10 + $0x90] sm:$0xff]
    %v2780 = vld [vmem:[#allocation10 + $0x98] sm:$0xff]
    %v2781 = vld [vmem:[#allocation10 + $0xa0] sm:$0xff]
    %v2782 = vld [vmem:[#allocation10 + $0xa8] sm:$0xff]
    %v2783 = vld [vmem:[#allocation10 + $0xb0] sm:$0xff]
    %v2784 = vld [vmem:[#allocation10 + $0xb8] sm:$0xff]
    %v2785 = vld [vmem:[#allocation10 + $0xc0] sm:$0xff]
    %v2786 = vld [vmem:[#allocation10 + $0xc8] sm:$0xff]
    %v2787 = vld [vmem:[#allocation10 + $0xd0] sm:$0xff]
    %v2788 = vld [vmem:[#allocation10 + $0xd8] sm:$0xff]
    %v2789 = vld [vmem:[#allocation10 + $0xe0] sm:$0xff]
    %v2790 = vld [vmem:[#allocation10 + $0xe8] sm:$0xff]
    %v2791 = vld [vmem:[#allocation10 + $0xf0] sm:$0xff]
    %v2792 = vld [vmem:[#allocation10 + $0xf8] sm:$0xff]
    %s2793 = scalar_lea.vmem [#allocation2], 112
    %v2794 = vld [vmem:[%s2793] sm:$0xff]
    %v2795 = vld [vmem:[%s2793 + $0x8] sm:$0xff]
    %v2796 = vunpack.c.l.bf16 %v2794
    %v2797 = vunpack.c.h.bf16 %v2794
    %v2798 = vunpack.c.l.bf16 %v2795
    %v2799 = vunpack.c.h.bf16 %v2795
    %v2832 = vunpack.c.l.b16 %v2761
    %v2833 = vunpack.c.h.b16 %v2761
    %v2834 = vunpack.c.l.b16 %v2762
    %v2835 = vunpack.c.h.b16 %v2762
    %v2836 = vunpack.c.l.b16 %v2763
    %v2837 = vunpack.c.h.b16 %v2763
    %v2838 = vunpack.c.l.b16 %v2764
    %v2839 = vunpack.c.h.b16 %v2764
    %v2840 = vunpack.c.l.b16 %v2765
    %v2841 = vunpack.c.h.b16 %v2765
    %v2842 = vunpack.c.l.b16 %v2766
    %v2843 = vunpack.c.h.b16 %v2766
    %v2844 = vunpack.c.l.b16 %v2767
    %v2845 = vunpack.c.h.b16 %v2767
    %v2846 = vunpack.c.l.b16 %v2768
    %v2847 = vunpack.c.h.b16 %v2768
    %v2848 = vunpack.c.l.b16 %v2769
    %v2849 = vunpack.c.h.b16 %v2769
    %v2850 = vunpack.c.l.b16 %v2770
    %v2851 = vunpack.c.h.b16 %v2770
    %v2852 = vunpack.c.l.b16 %v2771
    %v2853 = vunpack.c.h.b16 %v2771
    %v2854 = vunpack.c.l.b16 %v2772
    %v2855 = vunpack.c.h.b16 %v2772
    %v2856 = vunpack.c.l.b16 %v2773
    %v2857 = vunpack.c.h.b16 %v2773
    %v2858 = vunpack.c.l.b16 %v2774
    %v2859 = vunpack.c.h.b16 %v2774
    %v2860 = vunpack.c.l.b16 %v2775
    %v2861 = vunpack.c.h.b16 %v2775
    %v2862 = vunpack.c.l.b16 %v2776
    %v2863 = vunpack.c.h.b16 %v2776
    %v2864 = vunpack.c.l.b16 %v2777
    %v2865 = vunpack.c.h.b16 %v2777
    %v2866 = vunpack.c.l.b16 %v2778
    %v2867 = vunpack.c.h.b16 %v2778
    %v2868 = vunpack.c.l.b16 %v2779
    %v2869 = vunpack.c.h.b16 %v2779
    %v2870 = vunpack.c.l.b16 %v2780
    %v2871 = vunpack.c.h.b16 %v2780
    %v2872 = vunpack.c.l.b16 %v2781
    %v2873 = vunpack.c.h.b16 %v2781
    %v2874 = vunpack.c.l.b16 %v2782
    %v2875 = vunpack.c.h.b16 %v2782
    %v2876 = vunpack.c.l.b16 %v2783
    %v2877 = vunpack.c.h.b16 %v2783
    %v2878 = vunpack.c.l.b16 %v2784
    %v2879 = vunpack.c.h.b16 %v2784
    %v2880 = vunpack.c.l.b16 %v2785
    %v2881 = vunpack.c.h.b16 %v2785
    %v2882 = vunpack.c.l.b16 %v2786
    %v2883 = vunpack.c.h.b16 %v2786
    %v2884 = vunpack.c.l.b16 %v2787
    %v2885 = vunpack.c.h.b16 %v2787
    %v2886 = vunpack.c.l.b16 %v2788
    %v2887 = vunpack.c.h.b16 %v2788
    %v2888 = vunpack.c.l.b16 %v2789
    %v2889 = vunpack.c.h.b16 %v2789
    %v2890 = vunpack.c.l.b16 %v2790
    %v2891 = vunpack.c.h.b16 %v2790
    %v2892 = vunpack.c.l.b16 %v2791
    %v2893 = vunpack.c.h.b16 %v2791
    %v2894 = vunpack.c.l.b16 %v2792
    %v2895 = vunpack.c.h.b16 %v2792
    %v2896 = vpack.c.b16 %v2836, %v2832
    %v2897 = vpack.c.b16 %v2837, %v2833
    %v2898 = vpack.c.b16 %v2838, %v2834
    %v2899 = vpack.c.b16 %v2839, %v2835
    %v2900 = vpack.c.b16 %v2844, %v2840
    %v2901 = vpack.c.b16 %v2845, %v2841
    %v2902 = vpack.c.b16 %v2846, %v2842
    %v2903 = vpack.c.b16 %v2847, %v2843
    %v2904 = vpack.c.b16 %v2852, %v2848
    %v2905 = vpack.c.b16 %v2853, %v2849
    %v2906 = vpack.c.b16 %v2854, %v2850
    %v2907 = vpack.c.b16 %v2855, %v2851
    %v2908 = vpack.c.b16 %v2860, %v2856
    %v2909 = vpack.c.b16 %v2861, %v2857
    %v2910 = vpack.c.b16 %v2862, %v2858
    %v2911 = vpack.c.b16 %v2863, %v2859
    %v2912 = vpack.c.b16 %v2868, %v2864
    %v2913 = vpack.c.b16 %v2869, %v2865
    %v2914 = vpack.c.b16 %v2870, %v2866
    %v2915 = vpack.c.b16 %v2871, %v2867
    %v2916 = vpack.c.b16 %v2876, %v2872
    %v2917 = vpack.c.b16 %v2877, %v2873
    %v2918 = vpack.c.b16 %v2878, %v2874
    %v2919 = vpack.c.b16 %v2879, %v2875
    %v2920 = vpack.c.b16 %v2884, %v2880
    %v2921 = vpack.c.b16 %v2885, %v2881
    %v2922 = vpack.c.b16 %v2886, %v2882
    %v2923 = vpack.c.b16 %v2887, %v2883
    %v2924 = vpack.c.b16 %v2892, %v2888
    %v2925 = vpack.c.b16 %v2893, %v2889
    %v2926 = vpack.c.b16 %v2894, %v2890
    %v2927 = vpack.c.b16 %v2895, %v2891
    %2960 = vmatprep.subr.bf16.mxu0 %v2897
    %2961 = vmatpush1.bf16.msra.mxu0 %v2896
    %2962 = vmatprep.subr.bf16.mxu0 %v2901
    %2963 = vmatpush1.bf16.msra.mxu0 %v2900
    %2964 = vmatprep.subr.bf16.mxu0 %v2905
    %2965 = vmatpush1.bf16.msra.mxu0 %v2904
    %2966 = vmatprep.subr.bf16.mxu0 %v2909
    %2967 = vmatpush1.bf16.msra.mxu0 %v2908
    %2968 = vmatprep.subr.bf16.mxu0 %v2913
    %2969 = vmatpush1.bf16.msra.mxu0 %v2912
    %2970 = vmatprep.subr.bf16.mxu0 %v2917
    %2971 = vmatpush1.bf16.msra.mxu0 %v2916
    %2972 = vmatprep.subr.bf16.mxu0 %v2921
    %2973 = vmatpush1.bf16.msra.mxu0 %v2920
    %2974 = vmatprep.subr.bf16.mxu0 %v2925
    %2975 = vmatpush1.bf16.msra.mxu0 %v2924
    %2976 = vmatprep.subr.bf16.mxu0 0
    %2977 = vmatpush1.bf16.msra.mxu0 0
    %2978 = vmatprep.subr.bf16.mxu0 0
    %2979 = vmatpush1.bf16.msra.mxu0 0
    %2980 = vmatprep.subr.bf16.mxu0 0
    %2981 = vmatpush1.bf16.msra.mxu0 0
    %2982 = vmatprep.subr.bf16.mxu0 0
    %2983 = vmatpush1.bf16.msra.mxu0 0
    %2984 = vmatprep.subr.bf16.mxu0 0
    %2985 = vmatpush1.bf16.msra.mxu0 0
    %2986 = vmatprep.subr.bf16.mxu0 0
    %2987 = vmatpush1.bf16.msra.mxu0 0
    %2988 = vmatprep.subr.bf16.mxu0 0
    %2989 = vmatpush1.bf16.msra.mxu0 0
    %2990 = vmatprep.subr.bf16.mxu0 0
    %2991 = vmatpush1.bf16.msra.mxu0 0
    %2992 = vmatprep.mubr.bf16.mxu0 0
    %2993 = vmatmul.mubr.bf16.gmra.mrb[0].mxu0 %v2758
    %v2994 = vpop.f32.mrb[0].mxu0
    %v2995 = vadd.f32 %v2796, %v2994
    %v2996 = vpop.f32.mrb[0].mxu0
    %v2997 = vadd.f32 %v2797, %v2996
    %v2998 = vpop.f32.mrb[0].mxu0
    %v2999 = vpop.f32.mrb[0].mxu0
    %3000 = vdwg.mxu0
    %3001 = vmatprep.subr.bf16.mxu0 %v2899
    %3002 = vmatpush1.bf16.msra.mxu0 %v2898
    %3003 = vmatprep.subr.bf16.mxu0 %v2903
    %3004 = vmatpush1.bf16.msra.mxu0 %v2902
    %3005 = vmatprep.subr.bf16.mxu0 %v2907
    %3006 = vmatpush1.bf16.msra.mxu0 %v2906
    %3007 = vmatprep.subr.bf16.mxu0 %v2911
    %3008 = vmatpush1.bf16.msra.mxu0 %v2910
    %3009 = vmatprep.subr.bf16.mxu0 %v2915
    %3010 = vmatpush1.bf16.msra.mxu0 %v2914
    %3011 = vmatprep.subr.bf16.mxu0 %v2919
    %3012 = vmatpush1.bf16.msra.mxu0 %v2918
    %3013 = vmatprep.subr.bf16.mxu0 %v2923
    %3014 = vmatpush1.bf16.msra.mxu0 %v2922
    %3015 = vmatprep.subr.bf16.mxu0 %v2927
    %3016 = vmatpush1.bf16.msra.mxu0 %v2926
    %3017 = vmatprep.subr.bf16.mxu0 0
    %3018 = vmatpush1.bf16.msra.mxu0 0
    %3019 = vmatprep.subr.bf16.mxu0 0
    %3020 = vmatpush1.bf16.msra.mxu0 0
    %3021 = vmatprep.subr.bf16.mxu0 0
    %3022 = vmatpush1.bf16.msra.mxu0 0
    %3023 = vmatprep.subr.bf16.mxu0 0
    %3024 = vmatpush1.bf16.msra.mxu0 0
    %3025 = vmatprep.subr.bf16.mxu0 0
    %3026 = vmatpush1.bf16.msra.mxu0 0
    %3027 = vmatprep.subr.bf16.mxu0 0
    %3028 = vmatpush1.bf16.msra.mxu0 0
    %3029 = vmatprep.subr.bf16.mxu0 0
    %3030 = vmatpush1.bf16.msra.mxu0 0
    %3031 = vmatprep.subr.bf16.mxu0 0
    %3032 = vmatpush1.bf16.msra.mxu0 0
    %3033 = vmatprep.mubr.bf16.mxu0 0
    %3034 = vmatmul.mubr.bf16.gmra.mrb[0].mxu0 %v2758
    %v3035 = vpop.f32.mrb[0].mxu0
    %v3036 = vadd.f32 %v2798, %v3035
    %v3037 = vpop.f32.mrb[0].mxu0
    %v3038 = vadd.f32 %v2799, %v3037
    %v3039 = vpop.f32.mrb[0].mxu0
    %v3040 = vpop.f32.mrb[0].mxu0
    %3041 = vdwg.mxu0
    %v3042 = vxor.u32 %v2995, 2147483648
    %v3043 = vmul.f32 %v3042, 1.442695
    %v3044 = vpow.pop %v3043
    %v3045 = vadd.f32 %v3044, 1.0
    %v3046 = vrcp.pop %v3045
    %v3047 = vmul.f32 1.0, %v3046
    %v3048 = vxor.u32 %v2997, 2147483648
    %v3049 = vmul.f32 %v3048, 1.442695
    %v3050 = vpow.pop %v3049
    %v3051 = vadd.f32 %v3050, 1.0
    %v3052 = vrcp.pop %v3051
    %v3053 = vmul.f32 1.0, %v3052
    %v3054 = vtanh.pop %v3036
    %v3055 = vxor.u32 %v3038, 2147483648
    %v3056 = vmul.f32 %v3055, 1.442695
    %v3057 = vpow.pop %v3056
    %v3058 = vadd.f32 %v3057, 1.0
    %v3059 = vrcp.pop %v3058
    %v3060 = vmul.f32 1.0, %v3059
    %v3061 = vmul.f32 %v3053, %v2755
    %v3062 = vmul.f32 %v3047, %v3054
    %v3063 = vadd.f32 %v3061, %v3062
    %v3064 = vtanh.pop %v3063
    %v3065 = vmul.f32 %v3060, %v3064
    %v3066 = vpack.c.bf16 %v3065, %v3065
    %s3067 = scalar_lea.vmem [#allocation11], 28
    %3068 = vst [vmem:[%s3067] sm:$0xf] %v3066
    %3069 = vst [vmem:[#allocation3] sm:$0xf] %v3066
    %3070 = vst [vmem:[#allocation4] sm:$0xff] %v3063
    %v3071 = vld [vmem:[%s0] sm:$0xff]
    %s3072 = smul.u32 0, 8
    %v3073 = vstv %s3072
    %v3074 = vadd.s32 %v3073, 1
    %v3075 = vadd.s32 %v3073, 2
    %v3076 = vadd.s32 %v3073, 3
    %v3077 = vadd.s32 %v3073, 4
    %v3078 = vadd.s32 %v3073, 5
    %v3079 = vadd.s32 %v3073, 6
    %v3080 = vadd.s32 %v3073, 7
    %v3081 = vld [vmem:[#allocation11] sm:$0xf]
    %v3082 = vld [vmem:[#allocation11 + $0x4] sm:$0xf]
    %v3083 = vld [vmem:[#allocation11 + $0x8] sm:$0xf]
    %v3084 = vld [vmem:[#allocation11 + $0xc] sm:$0xf]
    %v3085 = vld [vmem:[#allocation11 + $0x10] sm:$0xf]
    %v3086 = vld [vmem:[#allocation11 + $0x14] sm:$0xf]
    %v3087 = vld [vmem:[#allocation11 + $0x18] sm:$0xf]
    %v3088 = vld [vmem:[#allocation11 + $0x1c] sm:$0xf]
    %vm3089 = vcmp.lt.s32.totalorder %v3073, %v3071
    %vm3090 = vcmp.lt.s32.totalorder %v3074, %v3071
    %vm3091 = vcmp.lt.s32.totalorder %v3075, %v3071
    %vm3092 = vcmp.lt.s32.totalorder %v3076, %v3071
    %vm3093 = vcmp.lt.s32.totalorder %v3077, %v3071
    %vm3094 = vcmp.lt.s32.totalorder %v3078, %v3071
    %vm3095 = vcmp.lt.s32.totalorder %v3079, %v3071
    %vm3096 = vcmp.lt.s32.totalorder %v3080, %v3071
    %v3097 = vsel %vm3089, 1, 0
    %v3098 = vsel %vm3090, 1, 0
    %v3099 = vsel %vm3091, 1, 0
    %v3100 = vsel %vm3092, 1, 0
    %v3101 = vsel %vm3093, 1, 0
    %v3102 = vsel %vm3094, 1, 0
    %v3103 = vsel %vm3095, 1, 0
    %v3104 = vsel %vm3096, 1, 0
    %3105 = vset.pattern.permute.xlu0 0
    %3106 = vperm.xlu0 %3105, %v3097
    %v3107 = vpop.permute.xlu0 %3106
    %3108 = vset.pattern.permute.xlu0 0
    %3109 = vperm.xlu0 %3108, %v3098
    %v3110 = vpop.permute.xlu0 %3109
    %3111 = vset.pattern.permute.xlu0 0
    %3112 = vperm.xlu0 %3111, %v3099
    %v3113 = vpop.permute.xlu0 %3112
    %3114 = vset.pattern.permute.xlu0 0
    %3115 = vperm.xlu0 %3114, %v3100
    %v3116 = vpop.permute.xlu0 %3115
    %3117 = vset.pattern.permute.xlu0 0
    %3118 = vperm.xlu0 %3117, %v3101
    %v3119 = vpop.permute.xlu0 %3118
    %3120 = vset.pattern.permute.xlu0 0
    %3121 = vperm.xlu0 %3120, %v3102
    %v3122 = vpop.permute.xlu0 %3121
    %3123 = vset.pattern.permute.xlu0 0
    %3124 = vperm.xlu0 %3123, %v3103
    %v3125 = vpop.permute.xlu0 %3124
    %3126 = vset.pattern.permute.xlu0 0
    %3127 = vperm.xlu0 %3126, %v3104
    %v3128 = vpop.permute.xlu0 %3127
    %vm3129 = vcmp.eq.s32.totalorder %v3107, 1
    %vm3130 = vcmp.eq.s32.totalorder %v3110, 1
    %vm3131 = vcmp.eq.s32.totalorder %v3113, 1
    %vm3132 = vcmp.eq.s32.totalorder %v3116, 1
    %vm3133 = vcmp.eq.s32.totalorder %v3119, 1
    %vm3134 = vcmp.eq.s32.totalorder %v3122, 1
    %vm3135 = vcmp.eq.s32.totalorder %v3125, 1
    %vm3136 = vcmp.eq.s32.totalorder %v3128, 1
    %vm3137 = vmpackc.low %vm3129, %vm3129
    %vm3138 = vmpackc.low %vm3130, %vm3130
    %vm3139 = vmpackc.low %vm3131, %vm3131
    %vm3140 = vmpackc.low %vm3132, %vm3132
    %vm3141 = vmpackc.low %vm3133, %vm3133
    %vm3142 = vmpackc.low %vm3134, %vm3134
    %vm3143 = vmpackc.low %vm3135, %vm3135
    %vm3144 = vmpackc.low %vm3136, %vm3136
    %v3145 = vsel %vm3137, %v3081, 0
    %v3146 = vsel %vm3138, %v3082, 0
    %v3147 = vsel %vm3139, %v3083, 0
    %v3148 = vsel %vm3140, %v3084, 0
    %v3149 = vsel %vm3141, %v3085, 0
    %v3150 = vsel %vm3142, %v3086, 0
    %v3151 = vsel %vm3143, %v3087, 0
    %v3152 = vsel %vm3144, %v3088, 0
    %3153 = vst [vmem:[#allocation11] sm:$0xf] %v3145
    %3154 = vst [vmem:[#allocation11 + $0x4] sm:$0xf] %v3146
    %3155 = vst [vmem:[#allocation11 + $0x8] sm:$0xf] %v3147
    %3156 = vst [vmem:[#allocation11 + $0xc] sm:$0xf] %v3148
    %3157 = vst [vmem:[#allocation11 + $0x10] sm:$0xf] %v3149
    %3158 = vst [vmem:[#allocation11 + $0x14] sm:$0xf] %v3150
    %3159 = vst [vmem:[#allocation11 + $0x18] sm:$0xf] %v3151
    %3160 = vst [vmem:[#allocation11 + $0x1c] sm:$0xf] %v3152
    // Predicated region
    $region38: #{tpu_custom_call.1} parent=1 // pred_check
      _
    $region39: #{tpu_custom_call.1} parent=1 // pred_check_branch
      %3162 = sbr.rel (0) target = $region41
    $region40: #{tpu_custom_call.1} parent=1 // pred_region
      %s3164 = ssub.s32 512, 512
      %3165 = vsyncadd [#allocation7], %s3164
      %s3166 = sshll.u32 [#allocation11], 4
      %s3167 = int_to_ptr.vmem [resolvable:$true] %s3166
      %3172 = dma.vmem_to_hbm [thread:$0]  %s3167, 512, %s5, [#allocation7], 64, 64, 4
    $region41: #{tpu_custom_call.1} parent=1 // pred_fallthru
      _
    // Predicated region
    $region42: #{tpu_custom_call.1} parent=1 // pred_check
      _
    $region43: #{tpu_custom_call.1} parent=1 // pred_check_branch
      %3174 = sbr.rel (0) target = $region45
    $region44: #{tpu_custom_call.1} parent=1 // pred_region
      %3175 = dma.done [#allocation7], 512
    $region45: #{tpu_custom_call.1} parent=1 // pred_fallthru
      _
    %3176 = vsyncpa [#allocation6], 1
    %3177 = vsyncpa [#allocation9], 1
    %3178 = vsyncpa [#allocation7], 1

</llo_original>
